<compile_context>
chip_gen: v7x
topology: tpu7x:2x2x1
jax: 0.10.0
libtpu: 0.0.40
codegen_flags: <defaults>
</compile_context>

<pallas_src>
import math
import jax
import jax.numpy as jnp
from jax import lax
from jax.experimental import pallas as pl
from jax.experimental.pallas import tpu as pltpu

# ---- scaled-down GPTConfig for the synthetic run (structure matches the module)
VOCAB = 512        # vocab_size
BLOCK_SIZE = 64    # block_size (max position)
N_LAYER = 2        # n_layer
N_HEAD = 4         # n_head
N_EMBD = 64        # n_embd
HEAD_DIM = N_EMBD // N_HEAD
LN_EPS = 1e-5

# rows of the packed per-layer small-vector table, shape (N_LAYER, N_VEC, C)
V_LN1W, V_LN1B, V_LN2W, V_LN2B, V_BPROJ, V_BFP = range(6)
N_VEC = 6

# contract the last axis of both operands (q @ k^T / z @ wte^T without .T)
NT_DIMS = (((1,), (1,)), ((), ()))


# ----------------------------- in-kernel helpers -----------------------------
def _row(mat, i):
    """(1, C) static slice of row i of a small packed table (value, not ref)."""
    return mat[i:i + 1, :]


def _layer_norm(x, w, b):
    # F.layer_norm over the last dim, eps=1e-5, biased variance.
    mu = jnp.mean(x, axis=-1, keepdims=True)
    xc = x - mu
    var = jnp.mean(xc * xc, axis=-1, keepdims=True)
    return xc * lax.rsqrt(var + LN_EPS) * w + b


def _gelu_tanh(x):
    # tanh-form GELU (== torch nn.GELU(approximate='tanh')); routes the
    # transcendental through the EUP.  <~1e-3 abs deviation from exact erf GELU.
    c = math.sqrt(2.0 / math.pi)
    return 0.5 * x * (1.0 + jnp.tanh(c * (x + 0.044715 * (x * x * x))))


# ------------------------------ fused GPT kernel ------------------------------
def gpt_fused_kernel(tok_ref,                       # SMEM (B, T) int32 (scalar prefetch)
                     wte_ref, wpe_ref,              # (V, C), (BLOCK_SIZE, C)
                     vecs_ref, lnf_ref,             # (L, N_VEC, C), (2, C)
                     wqkv_ref, bqkv_ref,            # (L, C, 3C), (L, 1, 3C)
                     wproj_ref,                     # (L, C, C)
                     wfc_ref, bfc_ref,              # (L, C, 4C), (L, 1, 4C)
                     wfp_ref,                       # (L, 4C, C)
                     logits_ref,                    # out block (1, V)
                     x_sc):                         # VMEM scratch (T, C)
    b = pl.program_id(0)
    T = tok_ref.shape[1]
    C, H, D = N_EMBD, N_HEAD, HEAD_DIM
    scale = 1.0 / math.sqrt(D)

    # ---- embeddings: gather token rows from the VMEM-resident wte -------------
    for t in range(T):                               # static loop, T is small
        tok = tok_ref[b, t]
        x_sc[t:t + 1, :] = wte_ref[pl.ds(tok, 1), :]
    x = x_sc[...] + wpe_ref[0:T, :]

    # causal mask, shared across layers / heads
    row = lax.broadcasted_iota(jnp.int32, (T, T), 0)
    col = lax.broadcasted_iota(jnp.int32, (T, T), 1)
    causal = col <= row
    neg = jnp.float32(-1e30)                         # finite "-inf" (robust masked_fill)

    # ---- transformer blocks ----------------------------------------------------
    for l in range(N_LAYER):                         # static layer loop
        vec = vecs_ref[l]                            # (N_VEC, C)

        # y = ln_1(x); qkv = c_attn(y)
        y = _layer_norm(x, _row(vec, V_LN1W), _row(vec, V_LN1B))
        qkv = jnp.dot(y, wqkv_ref[l], preferred_element_type=jnp.float32) + bqkv_ref[l]

        # causal self-attention; fold each head directly into the output
        # projection (head_h @ Wproj[hD:(h+1)D, :]) — no concat, no explicit k.T
        y_att = jnp.zeros((T, C), jnp.float32)
        for h in range(H):                           # static head loop
            q = qkv[:, h * D:(h + 1) * D]
            k = qkv[:, C + h * D:C + (h + 1) * D]
            v = qkv[:, 2 * C + h * D:2 * C + (h + 1) * D]
            att = lax.dot_general(q, k, NT_DIMS,
                                  preferred_element_type=jnp.float32) * scale
            att = jnp.where(causal, att, neg)
            att = att - jnp.max(att, axis=-1, keepdims=True)
            e = jnp.exp(att)
            p = e * pl.reciprocal(jnp.sum(e, axis=-1, keepdims=True), approx=True)
            hv = jnp.dot(p, v, preferred_element_type=jnp.float32)          # (T, D)
            y_att = y_att + jnp.dot(hv, wproj_ref[l, h * D:(h + 1) * D, :],
                                    preferred_element_type=jnp.float32)
        y_att = y_att + _row(vec, V_BPROJ)

        # z = ln_2(x + attn_out);  out = z + ffn(z)   (module's residual wiring)
        z = _layer_norm(x + y_att, _row(vec, V_LN2W), _row(vec, V_LN2B))
        hdn = jnp.dot(z, wfc_ref[l], preferred_element_type=jnp.float32) + bfc_ref[l]
        hdn = _gelu_tanh(hdn)
        f = jnp.dot(hdn, wfp_ref[l], preferred_element_type=jnp.float32) + _row(vec, V_BFP)
        x = z + f

    # ---- final LayerNorm on the last token + tied lm_head: ln_f(x_T) @ wte^T ---
    lnf = lnf_ref[...]
    z = _layer_norm(x[T - 1:T, :], _row(lnf, 0), _row(lnf, 1))
    logits_ref[...] = lax.dot_general(z, wte_ref[...], NT_DIMS,
                                      preferred_element_type=jnp.float32)


# --------------------------------- wrapper ------------------------------------
def gpt_forward(tokens, params):
    """myGPT.forward(tokens, targets=None) -> (B, 1, VOCAB) logits, one pallas_call."""
    B, T = tokens.shape
    C, L = N_EMBD, N_LAYER

    def full_spec(shape):
        zero = (0,) * len(shape)
        return pl.BlockSpec(shape, lambda b, tok_ref: zero)

    grid_spec = pltpu.PrefetchScalarGridSpec(
        num_scalar_prefetch=1,                       # tokens -> SMEM
        grid=(B,),                                   # one batch element per step
        in_specs=[
            full_spec((VOCAB, C)),                   # wte (also tied lm_head weight)
            full_spec((BLOCK_SIZE, C)),              # wpe
            full_spec((L, N_VEC, C)),                # packed LN w/b + small biases
            full_spec((2, C)),                       # ln_f weight / bias
            full_spec((L, C, 3 * C)),                # c_attn W (stacked, pre-transposed)
            full_spec((L, 1, 3 * C)),                # c_attn b
            full_spec((L, C, C)),                    # attn c_proj W
            full_spec((L, C, 4 * C)),                # c_fc W
            full_spec((L, 1, 4 * C)),                # c_fc b
            full_spec((L, 4 * C, C)),                # ffn c_proj W
        ],
        out_specs=pl.BlockSpec((None, 1, VOCAB), lambda b, tok_ref: (b, 0, 0)),
        scratch_shapes=[pltpu.VMEM((T, C), jnp.float32)],
    )

    return pl.pallas_call(
        gpt_fused_kernel,
        out_shape=jax.ShapeDtypeStruct((B, 1, VOCAB), jnp.float32),
        grid_spec=grid_spec,
        compiler_params=pltpu.CompilerParams(dimension_semantics=("parallel",)),
    )(tokens, params["wte"], params["wpe"], params["vecs"], params["lnf"],
      params["wqkv"], params["bqkv"], params["wproj"],
      params["wfc"], params["bfc"], params["wfp"])


# -------------------------------- parameters ----------------------------------
def init_params(key):
    C = N_EMBD
    std = 0.02
    pstd = 0.02 / math.sqrt(2 * N_LAYER)
    keys = iter(jax.random.split(key, 2 + 4 * N_LAYER))

    wte = (std * jax.random.normal(next(keys), (VOCAB, C))).astype(jnp.float32)
    wpe = (std * jax.random.normal(next(keys), (BLOCK_SIZE, C))).astype(jnp.float32)

    wqkv, wproj, wfc, wfp = [], [], [], []
    for _ in range(N_LAYER):
        wqkv.append((std * jax.random.normal(next(keys), (3 * C, C))).T)      # (C, 3C)
        wproj.append((pstd * jax.random.normal(next(keys), (C, C))).T)        # (C, C)
        wfc.append((std * jax.random.normal(next(keys), (4 * C, C))).T)       # (C, 4C)
        wfp.append((pstd * jax.random.normal(next(keys), (C, 4 * C))).T)      # (4C, C)

    vecs = jnp.zeros((N_LAYER, N_VEC, C), jnp.float32)
    vecs = vecs.at[:, V_LN1W, :].set(1.0).at[:, V_LN2W, :].set(1.0)           # LN gammas
    lnf = jnp.stack([jnp.ones((C,), jnp.float32), jnp.zeros((C,), jnp.float32)])

    return dict(
        wte=wte, wpe=wpe, vecs=vecs, lnf=lnf,
        wqkv=jnp.stack(wqkv).astype(jnp.float32),
        bqkv=jnp.zeros((N_LAYER, 1, 3 * C), jnp.float32),
        wproj=jnp.stack(wproj).astype(jnp.float32),
        wfc=jnp.stack(wfc).astype(jnp.float32),
        bfc=jnp.zeros((N_LAYER, 1, 4 * C), jnp.float32),
        wfp=jnp.stack(wfp).astype(jnp.float32),
    )


# ------------------------- pure-JAX reference (sanity) -------------------------
def gpt_forward_ref(tokens, params):
    B, T = tokens.shape
    C, H, D = N_EMBD, N_HEAD, HEAD_DIM

    def ln(v, w, b):
        mu = v.mean(-1, keepdims=True)
        var = ((v - mu) ** 2).mean(-1, keepdims=True)
        return (v - mu) / jnp.sqrt(var + LN_EPS) * w + b

    x = jnp.take(params["wte"], tokens, axis=0) + params["wpe"][:T][None]
    causal = jnp.arange(T)[None, :] <= jnp.arange(T)[:, None]
    for l in range(N_LAYER):
        vec = params["vecs"][l]
        y = ln(x, vec[V_LN1W], vec[V_LN1B])
        qkv = y @ params["wqkv"][l] + params["bqkv"][l]
        q, k, v = jnp.split(qkv, 3, axis=-1)
        q = q.reshape(B, T, H, D).transpose(0, 2, 1, 3)
        k = k.reshape(B, T, H, D).transpose(0, 2, 1, 3)
        v = v.reshape(B, T, H, D).transpose(0, 2, 1, 3)
        att = (q @ k.transpose(0, 1, 3, 2)) / math.sqrt(D)
        att = jnp.where(causal[None, None], att, -jnp.inf)
        p = jax.nn.softmax(att, axis=-1)
        yh = (p @ v).transpose(0, 2, 1, 3).reshape(B, T, C)
        y_att = yh @ params["wproj"][l] + vec[V_BPROJ]
        z = ln(x + y_att, vec[V_LN2W], vec[V_LN2B])
        hdn = z @ params["wfc"][l] + params["bfc"][l]
        c = math.sqrt(2.0 / math.pi)
        hdn = 0.5 * hdn * (1.0 + jnp.tanh(c * (hdn + 0.044715 * hdn ** 3)))
        f = hdn @ params["wfp"][l] + vec[V_BFP]
        x = z + f
    zf = ln(x[:, -1, :], params["lnf"][0], params["lnf"][1])
    return (zf @ params["wte"].T)[:, None, :]


# ----------------------------------- main --------------------------------------
if __name__ == "__main__":
    key = jax.random.PRNGKey(0)
    pkey, tkey = jax.random.split(key)
    params = init_params(pkey)

    B, T = 2, 8
    tokens = jax.random.randint(tkey, (B, T), 0, VOCAB, dtype=jnp.int32)

    fwd = jax.jit(gpt_forward)
    logits = fwd(tokens, params)
    jax.block_until_ready(logits)

    assert logits.shape == (B, 1, VOCAB) and logits.dtype == jnp.float32
    assert bool(jnp.all(jnp.isfinite(logits)))

    # loose-tolerance sanity check vs. pure-JAX reference (approx recip / matmul
    # ordering cause only tiny drift; wiring errors would be O(1))
    ref = gpt_forward_ref(tokens, params)
    err = float(jnp.max(jnp.abs(logits - ref)))
    assert err < 5e-2, f"mismatch vs reference: {err}"

    print("KERNEL_OK")
</pallas_src>

<mosaic_0001>
module attributes {stable_mosaic.version = 11 : i64} {
  func.func @gpt_fused_kernel(%arg0: i32, %arg1: memref<2x8xi32, #tpu.memory_space<smem>>, %arg2: memref<512x64xf32, #tpu.memory_space<vmem>>, %arg3: memref<64x64xf32, #tpu.memory_space<vmem>>, %arg4: memref<2x6x64xf32, #tpu.memory_space<vmem>>, %arg5: memref<2x64xf32, #tpu.memory_space<vmem>>, %arg6: memref<2x64x192xf32, #tpu.memory_space<vmem>>, %arg7: memref<2x1x192xf32, #tpu.memory_space<vmem>>, %arg8: memref<2x64x64xf32, #tpu.memory_space<vmem>>, %arg9: memref<2x64x256xf32, #tpu.memory_space<vmem>>, %arg10: memref<2x1x256xf32, #tpu.memory_space<vmem>>, %arg11: memref<2x256x64xf32, #tpu.memory_space<vmem>>, %arg12: memref<1x1x512xf32, #tpu.memory_space<vmem>>, %arg13: memref<8x64xf32, #tpu.memory_space<vmem>>) attributes {dimension_semantics = [#tpu.dimension_semantics<parallel>], iteration_bounds = array<i64: 2>, scalar_prefetch = 1 : i64, scratch_operands = 1 : i64, tpu.core_type = #tpu.core_type<tc>, window_params = [{pipeline_mode = #tpu.pipeline_mode<synchronous>, transform_indices = @transform_0, window_bounds = array<i64: 512, 64>}, {pipeline_mode = #tpu.pipeline_mode<synchronous>, transform_indices = @transform_1, window_bounds = array<i64: 64, 64>}, {pipeline_mode = #tpu.pipeline_mode<synchronous>, transform_indices = @transform_2, window_bounds = array<i64: 2, 6, 64>}, {pipeline_mode = #tpu.pipeline_mode<synchronous>, transform_indices = @transform_3, window_bounds = array<i64: 2, 64>}, {pipeline_mode = #tpu.pipeline_mode<synchronous>, transform_indices = @transform_4, window_bounds = array<i64: 2, 64, 192>}, {pipeline_mode = #tpu.pipeline_mode<synchronous>, transform_indices = @transform_5, window_bounds = array<i64: 2, 1, 192>}, {pipeline_mode = #tpu.pipeline_mode<synchronous>, transform_indices = @transform_6, window_bounds = array<i64: 2, 64, 64>}, {pipeline_mode = #tpu.pipeline_mode<synchronous>, transform_indices = @transform_7, window_bounds = array<i64: 2, 64, 256>}, {pipeline_mode = #tpu.pipeline_mode<synchronous>, transform_indices = @transform_8, window_bounds = array<i64: 2, 1, 256>}, {pipeline_mode = #tpu.pipeline_mode<synchronous>, transform_indices = @transform_9, window_bounds = array<i64: 2, 256, 64>}, {transform_indices = @transform_10, window_bounds = array<i64: 1, 1, 512>}]} {
    %0 = arith.index_cast %arg0 : i32 to index
    %c0 = arith.constant 0 : index
    %1 = memref.load %arg1[%0, %c0] : memref<2x8xi32, #tpu.memory_space<smem>>
    %2 = arith.index_cast %1 : i32 to index
    %c0_0 = arith.constant 0 : index
    %3 = vector.load %arg2[%2, %c0_0] : memref<512x64xf32, #tpu.memory_space<vmem>>, vector<1x64xf32>
    %c0_1 = arith.constant 0 : index
    %c0_2 = arith.constant 0 : index
    %4 = vector.load %arg13[%c0_1, %c0_2] : memref<8x64xf32, #tpu.memory_space<vmem>>, vector<1x64xf32>
    tpu.vector_store %arg13[%c0_1, %c0_2], %3 {strides = array<i32>} : memref<8x64xf32, #tpu.memory_space<vmem>>, vector<1x64xf32>,
    %5 = arith.index_cast %arg0 : i32 to index
    %c1 = arith.constant 1 : index
    %6 = memref.load %arg1[%5, %c1] : memref<2x8xi32, #tpu.memory_space<smem>>
    %7 = arith.index_cast %6 : i32 to index
    %c0_3 = arith.constant 0 : index
    %8 = vector.load %arg2[%7, %c0_3] : memref<512x64xf32, #tpu.memory_space<vmem>>, vector<1x64xf32>
    %c1_4 = arith.constant 1 : index
    %c0_5 = arith.constant 0 : index
    %9 = vector.load %arg13[%c1_4, %c0_5] : memref<8x64xf32, #tpu.memory_space<vmem>>, vector<1x64xf32>
    tpu.vector_store %arg13[%c1_4, %c0_5], %8 {strides = array<i32>} : memref<8x64xf32, #tpu.memory_space<vmem>>, vector<1x64xf32>,
    %10 = arith.index_cast %arg0 : i32 to index
    %c2 = arith.constant 2 : index
    %11 = memref.load %arg1[%10, %c2] : memref<2x8xi32, #tpu.memory_space<smem>>
    %12 = arith.index_cast %11 : i32 to index
    %c0_6 = arith.constant 0 : index
    %13 = vector.load %arg2[%12, %c0_6] : memref<512x64xf32, #tpu.memory_space<vmem>>, vector<1x64xf32>
    %c2_7 = arith.constant 2 : index
    %c0_8 = arith.constant 0 : index
    %14 = vector.load %arg13[%c2_7, %c0_8] : memref<8x64xf32, #tpu.memory_space<vmem>>, vector<1x64xf32>
    tpu.vector_store %arg13[%c2_7, %c0_8], %13 {strides = array<i32>} : memref<8x64xf32, #tpu.memory_space<vmem>>, vector<1x64xf32>,
    %15 = arith.index_cast %arg0 : i32 to index
    %c3 = arith.constant 3 : index
    %16 = memref.load %arg1[%15, %c3] : memref<2x8xi32, #tpu.memory_space<smem>>
    %17 = arith.index_cast %16 : i32 to index
    %c0_9 = arith.constant 0 : index
    %18 = vector.load %arg2[%17, %c0_9] : memref<512x64xf32, #tpu.memory_space<vmem>>, vector<1x64xf32>
    %c3_10 = arith.constant 3 : index
    %c0_11 = arith.constant 0 : index
    %19 = vector.load %arg13[%c3_10, %c0_11] : memref<8x64xf32, #tpu.memory_space<vmem>>, vector<1x64xf32>
    tpu.vector_store %arg13[%c3_10, %c0_11], %18 {strides = array<i32>} : memref<8x64xf32, #tpu.memory_space<vmem>>, vector<1x64xf32>,
    %20 = arith.index_cast %arg0 : i32 to index
    %c4 = arith.constant 4 : index
    %21 = memref.load %arg1[%20, %c4] : memref<2x8xi32, #tpu.memory_space<smem>>
    %22 = arith.index_cast %21 : i32 to index
    %c0_12 = arith.constant 0 : index
    %23 = vector.load %arg2[%22, %c0_12] : memref<512x64xf32, #tpu.memory_space<vmem>>, vector<1x64xf32>
    %c4_13 = arith.constant 4 : index
    %c0_14 = arith.constant 0 : index
    %24 = vector.load %arg13[%c4_13, %c0_14] : memref<8x64xf32, #tpu.memory_space<vmem>>, vector<1x64xf32>
    tpu.vector_store %arg13[%c4_13, %c0_14], %23 {strides = array<i32>} : memref<8x64xf32, #tpu.memory_space<vmem>>, vector<1x64xf32>,
    %25 = arith.index_cast %arg0 : i32 to index
    %c5 = arith.constant 5 : index
    %26 = memref.load %arg1[%25, %c5] : memref<2x8xi32, #tpu.memory_space<smem>>
    %27 = arith.index_cast %26 : i32 to index
    %c0_15 = arith.constant 0 : index
    %28 = vector.load %arg2[%27, %c0_15] : memref<512x64xf32, #tpu.memory_space<vmem>>, vector<1x64xf32>
    %c5_16 = arith.constant 5 : index
    %c0_17 = arith.constant 0 : index
    %29 = vector.load %arg13[%c5_16, %c0_17] : memref<8x64xf32, #tpu.memory_space<vmem>>, vector<1x64xf32>
    tpu.vector_store %arg13[%c5_16, %c0_17], %28 {strides = array<i32>} : memref<8x64xf32, #tpu.memory_space<vmem>>, vector<1x64xf32>,
    %30 = arith.index_cast %arg0 : i32 to index
    %c6 = arith.constant 6 : index
    %31 = memref.load %arg1[%30, %c6] : memref<2x8xi32, #tpu.memory_space<smem>>
    %32 = arith.index_cast %31 : i32 to index
    %c0_18 = arith.constant 0 : index
    %33 = vector.load %arg2[%32, %c0_18] : memref<512x64xf32, #tpu.memory_space<vmem>>, vector<1x64xf32>
    %c6_19 = arith.constant 6 : index
    %c0_20 = arith.constant 0 : index
    %34 = vector.load %arg13[%c6_19, %c0_20] : memref<8x64xf32, #tpu.memory_space<vmem>>, vector<1x64xf32>
    tpu.vector_store %arg13[%c6_19, %c0_20], %33 {strides = array<i32>} : memref<8x64xf32, #tpu.memory_space<vmem>>, vector<1x64xf32>,
    %35 = arith.index_cast %arg0 : i32 to index
    %c7 = arith.constant 7 : index
    %36 = memref.load %arg1[%35, %c7] : memref<2x8xi32, #tpu.memory_space<smem>>
    %37 = arith.index_cast %36 : i32 to index
    %c0_21 = arith.constant 0 : index
    %38 = vector.load %arg2[%37, %c0_21] : memref<512x64xf32, #tpu.memory_space<vmem>>, vector<1x64xf32>
    %c7_22 = arith.constant 7 : index
    %c0_23 = arith.constant 0 : index
    %39 = vector.load %arg13[%c7_22, %c0_23] : memref<8x64xf32, #tpu.memory_space<vmem>>, vector<1x64xf32>
    tpu.vector_store %arg13[%c7_22, %c0_23], %38 {strides = array<i32>} : memref<8x64xf32, #tpu.memory_space<vmem>>, vector<1x64xf32>,
    %c0_24 = arith.constant 0 : index
    %c0_25 = arith.constant 0 : index
    %40 = vector.load %arg13[%c0_24, %c0_25] : memref<8x64xf32, #tpu.memory_space<vmem>>, vector<8x64xf32>
    %c0_26 = arith.constant 0 : index
    %c0_27 = arith.constant 0 : index
    %41 = vector.load %arg3[%c0_26, %c0_27] : memref<64x64xf32, #tpu.memory_space<vmem>>, vector<8x64xf32>
    %42 = arith.addf %40, %41 : vector<8x64xf32>
    %43 = tpu.iota {dimensions = array<i32: 0>} : vector<8x8xi32>
    %44 = tpu.iota {dimensions = array<i32: 1>} : vector<8x8xi32>
    %45 = arith.cmpi sle, %44, %43 : vector<8x8xi32>
    %c0_28 = arith.constant 0 : index
    %c0_29 = arith.constant 0 : index
    %c0_30 = arith.constant 0 : index
    %46 = vector.load %arg4[%c0_28, %c0_29, %c0_30] : memref<2x6x64xf32, #tpu.memory_space<vmem>>, vector<1x6x64xf32>
    %47 = vector.shape_cast %46 : vector<1x6x64xf32> to vector<6x64xf32>
    %48 = vector.extract_strided_slice %47 {offsets = [0, 0], sizes = [1, 64], strides = [1, 1]} : vector<6x64xf32> to vector<1x64xf32>
    %49 = vector.extract_strided_slice %47 {offsets = [1, 0], sizes = [1, 64], strides = [1, 1]} : vector<6x64xf32> to vector<1x64xf32>
    %cst = arith.constant dense<0.000000e+00> : vector<8xf32>
    %50 = vector.multi_reduction <add>, %42, %cst [1] : vector<8x64xf32> to vector<8xf32>
    %51 = vector.shape_cast %50 : vector<8xf32> to vector<8x1xf32>
    %cst_31 = arith.constant 6.400000e+01 : f32
    %52 = vector.broadcast %cst_31 : f32 to vector<8x1xf32>
    %53 = arith.divf %51, %52 : vector<8x1xf32>
    %54 = vector.broadcast %53 : vector<8x1xf32> to vector<8x64xf32>
    %55 = arith.subf %42, %54 : vector<8x64xf32>
    %56 = arith.mulf %55, %55 : vector<8x64xf32>
    %cst_32 = arith.constant dense<0.000000e+00> : vector<8xf32>
    %57 = vector.multi_reduction <add>, %56, %cst_32 [1] : vector<8x64xf32> to vector<8xf32>
    %58 = vector.shape_cast %57 : vector<8xf32> to vector<8x1xf32>
    %cst_33 = arith.constant 6.400000e+01 : f32
    %59 = vector.broadcast %cst_33 : f32 to vector<8x1xf32>
    %60 = arith.divf %58, %59 : vector<8x1xf32>
    %cst_34 = arith.constant 9.99999974E-6 : f32
    %61 = vector.broadcast %cst_34 : f32 to vector<8x1xf32>
    %62 = arith.addf %60, %61 : vector<8x1xf32>
    %63 = math.rsqrt %62 : vector<8x1xf32>
    %64 = vector.broadcast %63 : vector<8x1xf32> to vector<8x64xf32>
    %65 = arith.mulf %55, %64 : vector<8x64xf32>
    %66 = vector.broadcast %48 : vector<1x64xf32> to vector<8x64xf32>
    %67 = arith.mulf %65, %66 : vector<8x64xf32>
    %68 = vector.broadcast %49 : vector<1x64xf32> to vector<8x64xf32>
    %69 = arith.addf %67, %68 : vector<8x64xf32>
    %c0_35 = arith.constant 0 : index
    %c0_36 = arith.constant 0 : index
    %c0_37 = arith.constant 0 : index
    %70 = vector.load %arg6[%c0_35, %c0_36, %c0_37] : memref<2x64x192xf32, #tpu.memory_space<vmem>>, vector<1x64x192xf32>
    %71 = vector.shape_cast %70 : vector<1x64x192xf32> to vector<64x192xf32>
    %cst_38 = arith.constant dense<0.000000e+00> : vector<8x192xf32>
    %72 = tpu.matmul %69, %71, %cst_38 {dimension_numbers = #tpu.dot_dimension_numbers<[1], [0], [0], [1], [0, 0, 1, 1], [], []>} : vector<8x64xf32>, vector<64x192xf32>, vector<8x192xf32> -> vector<8x192xf32>
    %c0_39 = arith.constant 0 : index
    %c0_40 = arith.constant 0 : index
    %c0_41 = arith.constant 0 : index
    %73 = vector.load %arg7[%c0_39, %c0_40, %c0_41] : memref<2x1x192xf32, #tpu.memory_space<vmem>>, vector<1x1x192xf32>
    %74 = vector.shape_cast %73 : vector<1x1x192xf32> to vector<1x192xf32>
    %75 = vector.broadcast %74 : vector<1x192xf32> to vector<8x192xf32>
    %76 = arith.addf %72, %75 : vector<8x192xf32>
    %cst_42 = arith.constant 0.000000e+00 : f32
    %77 = vector.broadcast %cst_42 : f32 to vector<8x64xf32>
    %78 = vector.extract_strided_slice %76 {offsets = [0, 0], sizes = [8, 16], strides = [1, 1]} : vector<8x192xf32> to vector<8x16xf32>
    %79 = vector.extract_strided_slice %76 {offsets = [0, 64], sizes = [8, 16], strides = [1, 1]} : vector<8x192xf32> to vector<8x16xf32>
    %80 = vector.extract_strided_slice %76 {offsets = [0, 128], sizes = [8, 16], strides = [1, 1]} : vector<8x192xf32> to vector<8x16xf32>
    %cst_43 = arith.constant dense<0.000000e+00> : vector<8x8xf32>
    %81 = tpu.matmul %78, %79, %cst_43 {dimension_numbers = #tpu.dot_dimension_numbers<[1], [1], [0], [0], [0, 0, 1, 0], [], []>} : vector<8x16xf32>, vector<8x16xf32>, vector<8x8xf32> -> vector<8x8xf32>
    %cst_44 = arith.constant 2.500000e-01 : f32
    %82 = vector.broadcast %cst_44 : f32 to vector<8x8xf32>
    %83 = arith.mulf %81, %82 : vector<8x8xf32>
    %cst_45 = arith.constant -1.000000e+30 : f32
    %84 = vector.broadcast %cst_45 : f32 to vector<8x8xf32>
    %85 = arith.select %45, %83, %84 : vector<8x8xi1>, vector<8x8xf32>
    %cst_46 = arith.constant dense<0xFF800000> : vector<8xf32>
    %86 = vector.multi_reduction <maximumf>, %85, %cst_46 [1] : vector<8x8xf32> to vector<8xf32>
    %87 = vector.shape_cast %86 : vector<8xf32> to vector<8x1xf32>
    %88 = vector.broadcast %87 : vector<8x1xf32> to vector<8x8xf32>
    %89 = arith.subf %85, %88 : vector<8x8xf32>
    %90 = math.exp %89 : vector<8x8xf32>
    %cst_47 = arith.constant dense<0.000000e+00> : vector<8xf32>
    %91 = vector.multi_reduction <add>, %90, %cst_47 [1] : vector<8x8xf32> to vector<8xf32>
    %92 = vector.shape_cast %91 : vector<8xf32> to vector<8x1xf32>
    %93 = tpu.reciprocal %92 {approx = true} : vector<8x1xf32> -> vector<8x1xf32>
    %94 = vector.broadcast %93 : vector<8x1xf32> to vector<8x8xf32>
    %95 = arith.mulf %90, %94 : vector<8x8xf32>
    %cst_48 = arith.constant dense<0.000000e+00> : vector<8x16xf32>
    %96 = tpu.matmul %95, %80, %cst_48 {dimension_numbers = #tpu.dot_dimension_numbers<[1], [0], [0], [1], [0, 0, 1, 1], [], []>} : vector<8x8xf32>, vector<8x16xf32>, vector<8x16xf32> -> vector<8x16xf32>
    %c0_49 = arith.constant 0 : index
    %c0_50 = arith.constant 0 : index
    %c0_51 = arith.constant 0 : index
    %97 = vector.load %arg8[%c0_49, %c0_50, %c0_51] : memref<2x64x64xf32, #tpu.memory_space<vmem>>, vector<1x16x64xf32>
    %98 = vector.shape_cast %97 : vector<1x16x64xf32> to vector<16x64xf32>
    %cst_52 = arith.constant dense<0.000000e+00> : vector<8x64xf32>
    %99 = tpu.matmul %96, %98, %cst_52 {dimension_numbers = #tpu.dot_dimension_numbers<[1], [0], [0], [1], [0, 0, 1, 1], [], []>} : vector<8x16xf32>, vector<16x64xf32>, vector<8x64xf32> -> vector<8x64xf32>
    %100 = arith.addf %77, %99 : vector<8x64xf32>
    %101 = vector.extract_strided_slice %76 {offsets = [0, 16], sizes = [8, 16], strides = [1, 1]} : vector<8x192xf32> to vector<8x16xf32>
    %102 = vector.extract_strided_slice %76 {offsets = [0, 80], sizes = [8, 16], strides = [1, 1]} : vector<8x192xf32> to vector<8x16xf32>
    %103 = vector.extract_strided_slice %76 {offsets = [0, 144], sizes = [8, 16], strides = [1, 1]} : vector<8x192xf32> to vector<8x16xf32>
    %cst_53 = arith.constant dense<0.000000e+00> : vector<8x8xf32>
    %104 = tpu.matmul %101, %102, %cst_53 {dimension_numbers = #tpu.dot_dimension_numbers<[1], [1], [0], [0], [0, 0, 1, 0], [], []>} : vector<8x16xf32>, vector<8x16xf32>, vector<8x8xf32> -> vector<8x8xf32>
    %cst_54 = arith.constant 2.500000e-01 : f32
    %105 = vector.broadcast %cst_54 : f32 to vector<8x8xf32>
    %106 = arith.mulf %104, %105 : vector<8x8xf32>
    %cst_55 = arith.constant -1.000000e+30 : f32
    %107 = vector.broadcast %cst_55 : f32 to vector<8x8xf32>
    %108 = arith.select %45, %106, %107 : vector<8x8xi1>, vector<8x8xf32>
    %cst_56 = arith.constant dense<0xFF800000> : vector<8xf32>
    %109 = vector.multi_reduction <maximumf>, %108, %cst_56 [1] : vector<8x8xf32> to vector<8xf32>
    %110 = vector.shape_cast %109 : vector<8xf32> to vector<8x1xf32>
    %111 = vector.broadcast %110 : vector<8x1xf32> to vector<8x8xf32>
    %112 = arith.subf %108, %111 : vector<8x8xf32>
    %113 = math.exp %112 : vector<8x8xf32>
    %cst_57 = arith.constant dense<0.000000e+00> : vector<8xf32>
    %114 = vector.multi_reduction <add>, %113, %cst_57 [1] : vector<8x8xf32> to vector<8xf32>
    %115 = vector.shape_cast %114 : vector<8xf32> to vector<8x1xf32>
    %116 = tpu.reciprocal %115 {approx = true} : vector<8x1xf32> -> vector<8x1xf32>
    %117 = vector.broadcast %116 : vector<8x1xf32> to vector<8x8xf32>
    %118 = arith.mulf %113, %117 : vector<8x8xf32>
    %cst_58 = arith.constant dense<0.000000e+00> : vector<8x16xf32>
    %119 = tpu.matmul %118, %103, %cst_58 {dimension_numbers = #tpu.dot_dimension_numbers<[1], [0], [0], [1], [0, 0, 1, 1], [], []>} : vector<8x8xf32>, vector<8x16xf32>, vector<8x16xf32> -> vector<8x16xf32>
    %c0_59 = arith.constant 0 : index
    %c16 = arith.constant 16 : index
    %c0_60 = arith.constant 0 : index
    %120 = vector.load %arg8[%c0_59, %c16, %c0_60] : memref<2x64x64xf32, #tpu.memory_space<vmem>>, vector<1x16x64xf32>
    %121 = vector.shape_cast %120 : vector<1x16x64xf32> to vector<16x64xf32>
    %cst_61 = arith.constant dense<0.000000e+00> : vector<8x64xf32>
    %122 = tpu.matmul %119, %121, %cst_61 {dimension_numbers = #tpu.dot_dimension_numbers<[1], [0], [0], [1], [0, 0, 1, 1], [], []>} : vector<8x16xf32>, vector<16x64xf32>, vector<8x64xf32> -> vector<8x64xf32>
    %123 = arith.addf %100, %122 : vector<8x64xf32>
    %124 = vector.extract_strided_slice %76 {offsets = [0, 32], sizes = [8, 16], strides = [1, 1]} : vector<8x192xf32> to vector<8x16xf32>
    %125 = vector.extract_strided_slice %76 {offsets = [0, 96], sizes = [8, 16], strides = [1, 1]} : vector<8x192xf32> to vector<8x16xf32>
    %126 = vector.extract_strided_slice %76 {offsets = [0, 160], sizes = [8, 16], strides = [1, 1]} : vector<8x192xf32> to vector<8x16xf32>
    %cst_62 = arith.constant dense<0.000000e+00> : vector<8x8xf32>
    %127 = tpu.matmul %124, %125, %cst_62 {dimension_numbers = #tpu.dot_dimension_numbers<[1], [1], [0], [0], [0, 0, 1, 0], [], []>} : vector<8x16xf32>, vector<8x16xf32>, vector<8x8xf32> -> vector<8x8xf32>
    %cst_63 = arith.constant 2.500000e-01 : f32
    %128 = vector.broadcast %cst_63 : f32 to vector<8x8xf32>
    %129 = arith.mulf %127, %128 : vector<8x8xf32>
    %cst_64 = arith.constant -1.000000e+30 : f32
    %130 = vector.broadcast %cst_64 : f32 to vector<8x8xf32>
    %131 = arith.select %45, %129, %130 : vector<8x8xi1>, vector<8x8xf32>
    %cst_65 = arith.constant dense<0xFF800000> : vector<8xf32>
    %132 = vector.multi_reduction <maximumf>, %131, %cst_65 [1] : vector<8x8xf32> to vector<8xf32>
    %133 = vector.shape_cast %132 : vector<8xf32> to vector<8x1xf32>
    %134 = vector.broadcast %133 : vector<8x1xf32> to vector<8x8xf32>
    %135 = arith.subf %131, %134 : vector<8x8xf32>
    %136 = math.exp %135 : vector<8x8xf32>
    %cst_66 = arith.constant dense<0.000000e+00> : vector<8xf32>
    %137 = vector.multi_reduction <add>, %136, %cst_66 [1] : vector<8x8xf32> to vector<8xf32>
    %138 = vector.shape_cast %137 : vector<8xf32> to vector<8x1xf32>
    %139 = tpu.reciprocal %138 {approx = true} : vector<8x1xf32> -> vector<8x1xf32>
    %140 = vector.broadcast %139 : vector<8x1xf32> to vector<8x8xf32>
    %141 = arith.mulf %136, %140 : vector<8x8xf32>
    %cst_67 = arith.constant dense<0.000000e+00> : vector<8x16xf32>
    %142 = tpu.matmul %141, %126, %cst_67 {dimension_numbers = #tpu.dot_dimension_numbers<[1], [0], [0], [1], [0, 0, 1, 1], [], []>} : vector<8x8xf32>, vector<8x16xf32>, vector<8x16xf32> -> vector<8x16xf32>
    %c0_68 = arith.constant 0 : index
    %c32 = arith.constant 32 : index
    %c0_69 = arith.constant 0 : index
    %143 = vector.load %arg8[%c0_68, %c32, %c0_69] : memref<2x64x64xf32, #tpu.memory_space<vmem>>, vector<1x16x64xf32>
    %144 = vector.shape_cast %143 : vector<1x16x64xf32> to vector<16x64xf32>
    %cst_70 = arith.constant dense<0.000000e+00> : vector<8x64xf32>
    %145 = tpu.matmul %142, %144, %cst_70 {dimension_numbers = #tpu.dot_dimension_numbers<[1], [0], [0], [1], [0, 0, 1, 1], [], []>} : vector<8x16xf32>, vector<16x64xf32>, vector<8x64xf32> -> vector<8x64xf32>
    %146 = arith.addf %123, %145 : vector<8x64xf32>
    %147 = vector.extract_strided_slice %76 {offsets = [0, 48], sizes = [8, 16], strides = [1, 1]} : vector<8x192xf32> to vector<8x16xf32>
    %148 = vector.extract_strided_slice %76 {offsets = [0, 112], sizes = [8, 16], strides = [1, 1]} : vector<8x192xf32> to vector<8x16xf32>
    %149 = vector.extract_strided_slice %76 {offsets = [0, 176], sizes = [8, 16], strides = [1, 1]} : vector<8x192xf32> to vector<8x16xf32>
    %cst_71 = arith.constant dense<0.000000e+00> : vector<8x8xf32>
    %150 = tpu.matmul %147, %148, %cst_71 {dimension_numbers = #tpu.dot_dimension_numbers<[1], [1], [0], [0], [0, 0, 1, 0], [], []>} : vector<8x16xf32>, vector<8x16xf32>, vector<8x8xf32> -> vector<8x8xf32>
    %cst_72 = arith.constant 2.500000e-01 : f32
    %151 = vector.broadcast %cst_72 : f32 to vector<8x8xf32>
    %152 = arith.mulf %150, %151 : vector<8x8xf32>
    %cst_73 = arith.constant -1.000000e+30 : f32
    %153 = vector.broadcast %cst_73 : f32 to vector<8x8xf32>
    %154 = arith.select %45, %152, %153 : vector<8x8xi1>, vector<8x8xf32>
    %cst_74 = arith.constant dense<0xFF800000> : vector<8xf32>
    %155 = vector.multi_reduction <maximumf>, %154, %cst_74 [1] : vector<8x8xf32> to vector<8xf32>
    %156 = vector.shape_cast %155 : vector<8xf32> to vector<8x1xf32>
    %157 = vector.broadcast %156 : vector<8x1xf32> to vector<8x8xf32>
    %158 = arith.subf %154, %157 : vector<8x8xf32>
    %159 = math.exp %158 : vector<8x8xf32>
    %cst_75 = arith.constant dense<0.000000e+00> : vector<8xf32>
    %160 = vector.multi_reduction <add>, %159, %cst_75 [1] : vector<8x8xf32> to vector<8xf32>
    %161 = vector.shape_cast %160 : vector<8xf32> to vector<8x1xf32>
    %162 = tpu.reciprocal %161 {approx = true} : vector<8x1xf32> -> vector<8x1xf32>
    %163 = vector.broadcast %162 : vector<8x1xf32> to vector<8x8xf32>
    %164 = arith.mulf %159, %163 : vector<8x8xf32>
    %cst_76 = arith.constant dense<0.000000e+00> : vector<8x16xf32>
    %165 = tpu.matmul %164, %149, %cst_76 {dimension_numbers = #tpu.dot_dimension_numbers<[1], [0], [0], [1], [0, 0, 1, 1], [], []>} : vector<8x8xf32>, vector<8x16xf32>, vector<8x16xf32> -> vector<8x16xf32>
    %c0_77 = arith.constant 0 : index
    %c48 = arith.constant 48 : index
    %c0_78 = arith.constant 0 : index
    %166 = vector.load %arg8[%c0_77, %c48, %c0_78] : memref<2x64x64xf32, #tpu.memory_space<vmem>>, vector<1x16x64xf32>
    %167 = vector.shape_cast %166 : vector<1x16x64xf32> to vector<16x64xf32>
    %cst_79 = arith.constant dense<0.000000e+00> : vector<8x64xf32>
    %168 = tpu.matmul %165, %167, %cst_79 {dimension_numbers = #tpu.dot_dimension_numbers<[1], [0], [0], [1], [0, 0, 1, 1], [], []>} : vector<8x16xf32>, vector<16x64xf32>, vector<8x64xf32> -> vector<8x64xf32>
    %169 = arith.addf %146, %168 : vector<8x64xf32>
    %170 = vector.extract_strided_slice %47 {offsets = [4, 0], sizes = [1, 64], strides = [1, 1]} : vector<6x64xf32> to vector<1x64xf32>
    %171 = vector.broadcast %170 : vector<1x64xf32> to vector<8x64xf32>
    %172 = arith.addf %169, %171 : vector<8x64xf32>
    %173 = arith.addf %42, %172 : vector<8x64xf32>
    %174 = vector.extract_strided_slice %47 {offsets = [2, 0], sizes = [1, 64], strides = [1, 1]} : vector<6x64xf32> to vector<1x64xf32>
    %175 = vector.extract_strided_slice %47 {offsets = [3, 0], sizes = [1, 64], strides = [1, 1]} : vector<6x64xf32> to vector<1x64xf32>
    %cst_80 = arith.constant dense<0.000000e+00> : vector<8xf32>
    %176 = vector.multi_reduction <add>, %173, %cst_80 [1] : vector<8x64xf32> to vector<8xf32>
    %177 = vector.shape_cast %176 : vector<8xf32> to vector<8x1xf32>
    %cst_81 = arith.constant 6.400000e+01 : f32
    %178 = vector.broadcast %cst_81 : f32 to vector<8x1xf32>
    %179 = arith.divf %177, %178 : vector<8x1xf32>
    %180 = vector.broadcast %179 : vector<8x1xf32> to vector<8x64xf32>
    %181 = arith.subf %173, %180 : vector<8x64xf32>
    %182 = arith.mulf %181, %181 : vector<8x64xf32>
    %cst_82 = arith.constant dense<0.000000e+00> : vector<8xf32>
    %183 = vector.multi_reduction <add>, %182, %cst_82 [1] : vector<8x64xf32> to vector<8xf32>
    %184 = vector.shape_cast %183 : vector<8xf32> to vector<8x1xf32>
    %cst_83 = arith.constant 6.400000e+01 : f32
    %185 = vector.broadcast %cst_83 : f32 to vector<8x1xf32>
    %186 = arith.divf %184, %185 : vector<8x1xf32>
    %cst_84 = arith.constant 9.99999974E-6 : f32
    %187 = vector.broadcast %cst_84 : f32 to vector<8x1xf32>
    %188 = arith.addf %186, %187 : vector<8x1xf32>
    %189 = math.rsqrt %188 : vector<8x1xf32>
    %190 = vector.broadcast %189 : vector<8x1xf32> to vector<8x64xf32>
    %191 = arith.mulf %181, %190 : vector<8x64xf32>
    %192 = vector.broadcast %174 : vector<1x64xf32> to vector<8x64xf32>
    %193 = arith.mulf %191, %192 : vector<8x64xf32>
    %194 = vector.broadcast %175 : vector<1x64xf32> to vector<8x64xf32>
    %195 = arith.addf %193, %194 : vector<8x64xf32>
    %c0_85 = arith.constant 0 : index
    %c0_86 = arith.constant 0 : index
    %c0_87 = arith.constant 0 : index
    %196 = vector.load %arg9[%c0_85, %c0_86, %c0_87] : memref<2x64x256xf32, #tpu.memory_space<vmem>>, vector<1x64x256xf32>
    %197 = vector.shape_cast %196 : vector<1x64x256xf32> to vector<64x256xf32>
    %cst_88 = arith.constant dense<0.000000e+00> : vector<8x256xf32>
    %198 = tpu.matmul %195, %197, %cst_88 {dimension_numbers = #tpu.dot_dimension_numbers<[1], [0], [0], [1], [0, 0, 1, 1], [], []>} : vector<8x64xf32>, vector<64x256xf32>, vector<8x256xf32> -> vector<8x256xf32>
    %c0_89 = arith.constant 0 : index
    %c0_90 = arith.constant 0 : index
    %c0_91 = arith.constant 0 : index
    %199 = vector.load %arg10[%c0_89, %c0_90, %c0_91] : memref<2x1x256xf32, #tpu.memory_space<vmem>>, vector<1x1x256xf32>
    %200 = vector.shape_cast %199 : vector<1x1x256xf32> to vector<1x256xf32>
    %201 = vector.broadcast %200 : vector<1x256xf32> to vector<8x256xf32>
    %202 = arith.addf %198, %201 : vector<8x256xf32>
    %cst_92 = arith.constant 5.000000e-01 : f32
    %203 = vector.broadcast %cst_92 : f32 to vector<8x256xf32>
    %204 = arith.mulf %203, %202 : vector<8x256xf32>
    %205 = arith.mulf %202, %202 : vector<8x256xf32>
    %206 = arith.mulf %205, %202 : vector<8x256xf32>
    %cst_93 = arith.constant 4.471500e-02 : f32
    %207 = vector.broadcast %cst_93 : f32 to vector<8x256xf32>
    %208 = arith.mulf %207, %206 : vector<8x256xf32>
    %209 = arith.addf %202, %208 : vector<8x256xf32>
    %cst_94 = arith.constant 0.797884583 : f32
    %210 = vector.broadcast %cst_94 : f32 to vector<8x256xf32>
    %211 = arith.mulf %210, %209 : vector<8x256xf32>
    %212 = math.tanh %211 : vector<8x256xf32>
    %cst_95 = arith.constant 1.000000e+00 : f32
    %213 = vector.broadcast %cst_95 : f32 to vector<8x256xf32>
    %214 = arith.addf %213, %212 : vector<8x256xf32>
    %215 = arith.mulf %204, %214 : vector<8x256xf32>
    %c0_96 = arith.constant 0 : index
    %c0_97 = arith.constant 0 : index
    %c0_98 = arith.constant 0 : index
    %216 = vector.load %arg11[%c0_96, %c0_97, %c0_98] : memref<2x256x64xf32, #tpu.memory_space<vmem>>, vector<1x256x64xf32>
    %217 = vector.shape_cast %216 : vector<1x256x64xf32> to vector<256x64xf32>
    %cst_99 = arith.constant dense<0.000000e+00> : vector<8x64xf32>
    %218 = tpu.matmul %215, %217, %cst_99 {dimension_numbers = #tpu.dot_dimension_numbers<[1], [0], [0], [1], [0, 0, 1, 1], [], []>} : vector<8x256xf32>, vector<256x64xf32>, vector<8x64xf32> -> vector<8x64xf32>
    %219 = vector.extract_strided_slice %47 {offsets = [5, 0], sizes = [1, 64], strides = [1, 1]} : vector<6x64xf32> to vector<1x64xf32>
    %220 = vector.broadcast %219 : vector<1x64xf32> to vector<8x64xf32>
    %221 = arith.addf %218, %220 : vector<8x64xf32>
    %222 = arith.addf %195, %221 : vector<8x64xf32>
    %c1_100 = arith.constant 1 : index
    %c0_101 = arith.constant 0 : index
    %c0_102 = arith.constant 0 : index
    %223 = vector.load %arg4[%c1_100, %c0_101, %c0_102] : memref<2x6x64xf32, #tpu.memory_space<vmem>>, vector<1x6x64xf32>
    %224 = vector.shape_cast %223 : vector<1x6x64xf32> to vector<6x64xf32>
    %225 = vector.extract_strided_slice %224 {offsets = [0, 0], sizes = [1, 64], strides = [1, 1]} : vector<6x64xf32> to vector<1x64xf32>
    %226 = vector.extract_strided_slice %224 {offsets = [1, 0], sizes = [1, 64], strides = [1, 1]} : vector<6x64xf32> to vector<1x64xf32>
    %cst_103 = arith.constant dense<0.000000e+00> : vector<8xf32>
    %227 = vector.multi_reduction <add>, %222, %cst_103 [1] : vector<8x64xf32> to vector<8xf32>
    %228 = vector.shape_cast %227 : vector<8xf32> to vector<8x1xf32>
    %cst_104 = arith.constant 6.400000e+01 : f32
    %229 = vector.broadcast %cst_104 : f32 to vector<8x1xf32>
    %230 = arith.divf %228, %229 : vector<8x1xf32>
    %231 = vector.broadcast %230 : vector<8x1xf32> to vector<8x64xf32>
    %232 = arith.subf %222, %231 : vector<8x64xf32>
    %233 = arith.mulf %232, %232 : vector<8x64xf32>
    %cst_105 = arith.constant dense<0.000000e+00> : vector<8xf32>
    %234 = vector.multi_reduction <add>, %233, %cst_105 [1] : vector<8x64xf32> to vector<8xf32>
    %235 = vector.shape_cast %234 : vector<8xf32> to vector<8x1xf32>
    %cst_106 = arith.constant 6.400000e+01 : f32
    %236 = vector.broadcast %cst_106 : f32 to vector<8x1xf32>
    %237 = arith.divf %235, %236 : vector<8x1xf32>
    %cst_107 = arith.constant 9.99999974E-6 : f32
    %238 = vector.broadcast %cst_107 : f32 to vector<8x1xf32>
    %239 = arith.addf %237, %238 : vector<8x1xf32>
    %240 = math.rsqrt %239 : vector<8x1xf32>
    %241 = vector.broadcast %240 : vector<8x1xf32> to vector<8x64xf32>
    %242 = arith.mulf %232, %241 : vector<8x64xf32>
    %243 = vector.broadcast %225 : vector<1x64xf32> to vector<8x64xf32>
    %244 = arith.mulf %242, %243 : vector<8x64xf32>
    %245 = vector.broadcast %226 : vector<1x64xf32> to vector<8x64xf32>
    %246 = arith.addf %244, %245 : vector<8x64xf32>
    %c1_108 = arith.constant 1 : index
    %c0_109 = arith.constant 0 : index
    %c0_110 = arith.constant 0 : index
    %247 = vector.load %arg6[%c1_108, %c0_109, %c0_110] : memref<2x64x192xf32, #tpu.memory_space<vmem>>, vector<1x64x192xf32>
    %248 = vector.shape_cast %247 : vector<1x64x192xf32> to vector<64x192xf32>
    %cst_111 = arith.constant dense<0.000000e+00> : vector<8x192xf32>
    %249 = tpu.matmul %246, %248, %cst_111 {dimension_numbers = #tpu.dot_dimension_numbers<[1], [0], [0], [1], [0, 0, 1, 1], [], []>} : vector<8x64xf32>, vector<64x192xf32>, vector<8x192xf32> -> vector<8x192xf32>
    %c1_112 = arith.constant 1 : index
    %c0_113 = arith.constant 0 : index
    %c0_114 = arith.constant 0 : index
    %250 = vector.load %arg7[%c1_112, %c0_113, %c0_114] : memref<2x1x192xf32, #tpu.memory_space<vmem>>, vector<1x1x192xf32>
    %251 = vector.shape_cast %250 : vector<1x1x192xf32> to vector<1x192xf32>
    %252 = vector.broadcast %251 : vector<1x192xf32> to vector<8x192xf32>
    %253 = arith.addf %249, %252 : vector<8x192xf32>
    %cst_115 = arith.constant 0.000000e+00 : f32
    %254 = vector.broadcast %cst_115 : f32 to vector<8x64xf32>
    %255 = vector.extract_strided_slice %253 {offsets = [0, 0], sizes = [8, 16], strides = [1, 1]} : vector<8x192xf32> to vector<8x16xf32>
    %256 = vector.extract_strided_slice %253 {offsets = [0, 64], sizes = [8, 16], strides = [1, 1]} : vector<8x192xf32> to vector<8x16xf32>
    %257 = vector.extract_strided_slice %253 {offsets = [0, 128], sizes = [8, 16], strides = [1, 1]} : vector<8x192xf32> to vector<8x16xf32>
    %cst_116 = arith.constant dense<0.000000e+00> : vector<8x8xf32>
    %258 = tpu.matmul %255, %256, %cst_116 {dimension_numbers = #tpu.dot_dimension_numbers<[1], [1], [0], [0], [0, 0, 1, 0], [], []>} : vector<8x16xf32>, vector<8x16xf32>, vector<8x8xf32> -> vector<8x8xf32>
    %cst_117 = arith.constant 2.500000e-01 : f32
    %259 = vector.broadcast %cst_117 : f32 to vector<8x8xf32>
    %260 = arith.mulf %258, %259 : vector<8x8xf32>
    %cst_118 = arith.constant -1.000000e+30 : f32
    %261 = vector.broadcast %cst_118 : f32 to vector<8x8xf32>
    %262 = arith.select %45, %260, %261 : vector<8x8xi1>, vector<8x8xf32>
    %cst_119 = arith.constant dense<0xFF800000> : vector<8xf32>
    %263 = vector.multi_reduction <maximumf>, %262, %cst_119 [1] : vector<8x8xf32> to vector<8xf32>
    %264 = vector.shape_cast %263 : vector<8xf32> to vector<8x1xf32>
    %265 = vector.broadcast %264 : vector<8x1xf32> to vector<8x8xf32>
    %266 = arith.subf %262, %265 : vector<8x8xf32>
    %267 = math.exp %266 : vector<8x8xf32>
    %cst_120 = arith.constant dense<0.000000e+00> : vector<8xf32>
    %268 = vector.multi_reduction <add>, %267, %cst_120 [1] : vector<8x8xf32> to vector<8xf32>
    %269 = vector.shape_cast %268 : vector<8xf32> to vector<8x1xf32>
    %270 = tpu.reciprocal %269 {approx = true} : vector<8x1xf32> -> vector<8x1xf32>
    %271 = vector.broadcast %270 : vector<8x1xf32> to vector<8x8xf32>
    %272 = arith.mulf %267, %271 : vector<8x8xf32>
    %cst_121 = arith.constant dense<0.000000e+00> : vector<8x16xf32>
    %273 = tpu.matmul %272, %257, %cst_121 {dimension_numbers = #tpu.dot_dimension_numbers<[1], [0], [0], [1], [0, 0, 1, 1], [], []>} : vector<8x8xf32>, vector<8x16xf32>, vector<8x16xf32> -> vector<8x16xf32>
    %c1_122 = arith.constant 1 : index
    %c0_123 = arith.constant 0 : index
    %c0_124 = arith.constant 0 : index
    %274 = vector.load %arg8[%c1_122, %c0_123, %c0_124] : memref<2x64x64xf32, #tpu.memory_space<vmem>>, vector<1x16x64xf32>
    %275 = vector.shape_cast %274 : vector<1x16x64xf32> to vector<16x64xf32>
    %cst_125 = arith.constant dense<0.000000e+00> : vector<8x64xf32>
    %276 = tpu.matmul %273, %275, %cst_125 {dimension_numbers = #tpu.dot_dimension_numbers<[1], [0], [0], [1], [0, 0, 1, 1], [], []>} : vector<8x16xf32>, vector<16x64xf32>, vector<8x64xf32> -> vector<8x64xf32>
    %277 = arith.addf %254, %276 : vector<8x64xf32>
    %278 = vector.extract_strided_slice %253 {offsets = [0, 16], sizes = [8, 16], strides = [1, 1]} : vector<8x192xf32> to vector<8x16xf32>
    %279 = vector.extract_strided_slice %253 {offsets = [0, 80], sizes = [8, 16], strides = [1, 1]} : vector<8x192xf32> to vector<8x16xf32>
    %280 = vector.extract_strided_slice %253 {offsets = [0, 144], sizes = [8, 16], strides = [1, 1]} : vector<8x192xf32> to vector<8x16xf32>
    %cst_126 = arith.constant dense<0.000000e+00> : vector<8x8xf32>
    %281 = tpu.matmul %278, %279, %cst_126 {dimension_numbers = #tpu.dot_dimension_numbers<[1], [1], [0], [0], [0, 0, 1, 0], [], []>} : vector<8x16xf32>, vector<8x16xf32>, vector<8x8xf32> -> vector<8x8xf32>
    %cst_127 = arith.constant 2.500000e-01 : f32
    %282 = vector.broadcast %cst_127 : f32 to vector<8x8xf32>
    %283 = arith.mulf %281, %282 : vector<8x8xf32>
    %cst_128 = arith.constant -1.000000e+30 : f32
    %284 = vector.broadcast %cst_128 : f32 to vector<8x8xf32>
    %285 = arith.select %45, %283, %284 : vector<8x8xi1>, vector<8x8xf32>
    %cst_129 = arith.constant dense<0xFF800000> : vector<8xf32>
    %286 = vector.multi_reduction <maximumf>, %285, %cst_129 [1] : vector<8x8xf32> to vector<8xf32>
    %287 = vector.shape_cast %286 : vector<8xf32> to vector<8x1xf32>
    %288 = vector.broadcast %287 : vector<8x1xf32> to vector<8x8xf32>
    %289 = arith.subf %285, %288 : vector<8x8xf32>
    %290 = math.exp %289 : vector<8x8xf32>
    %cst_130 = arith.constant dense<0.000000e+00> : vector<8xf32>
    %291 = vector.multi_reduction <add>, %290, %cst_130 [1] : vector<8x8xf32> to vector<8xf32>
    %292 = vector.shape_cast %291 : vector<8xf32> to vector<8x1xf32>
    %293 = tpu.reciprocal %292 {approx = true} : vector<8x1xf32> -> vector<8x1xf32>
    %294 = vector.broadcast %293 : vector<8x1xf32> to vector<8x8xf32>
    %295 = arith.mulf %290, %294 : vector<8x8xf32>
    %cst_131 = arith.constant dense<0.000000e+00> : vector<8x16xf32>
    %296 = tpu.matmul %295, %280, %cst_131 {dimension_numbers = #tpu.dot_dimension_numbers<[1], [0], [0], [1], [0, 0, 1, 1], [], []>} : vector<8x8xf32>, vector<8x16xf32>, vector<8x16xf32> -> vector<8x16xf32>
    %c1_132 = arith.constant 1 : index
    %c16_133 = arith.constant 16 : index
    %c0_134 = arith.constant 0 : index
    %297 = vector.load %arg8[%c1_132, %c16_133, %c0_134] : memref<2x64x64xf32, #tpu.memory_space<vmem>>, vector<1x16x64xf32>
    %298 = vector.shape_cast %297 : vector<1x16x64xf32> to vector<16x64xf32>
    %cst_135 = arith.constant dense<0.000000e+00> : vector<8x64xf32>
    %299 = tpu.matmul %296, %298, %cst_135 {dimension_numbers = #tpu.dot_dimension_numbers<[1], [0], [0], [1], [0, 0, 1, 1], [], []>} : vector<8x16xf32>, vector<16x64xf32>, vector<8x64xf32> -> vector<8x64xf32>
    %300 = arith.addf %277, %299 : vector<8x64xf32>
    %301 = vector.extract_strided_slice %253 {offsets = [0, 32], sizes = [8, 16], strides = [1, 1]} : vector<8x192xf32> to vector<8x16xf32>
    %302 = vector.extract_strided_slice %253 {offsets = [0, 96], sizes = [8, 16], strides = [1, 1]} : vector<8x192xf32> to vector<8x16xf32>
    %303 = vector.extract_strided_slice %253 {offsets = [0, 160], sizes = [8, 16], strides = [1, 1]} : vector<8x192xf32> to vector<8x16xf32>
    %cst_136 = arith.constant dense<0.000000e+00> : vector<8x8xf32>
    %304 = tpu.matmul %301, %302, %cst_136 {dimension_numbers = #tpu.dot_dimension_numbers<[1], [1], [0], [0], [0, 0, 1, 0], [], []>} : vector<8x16xf32>, vector<8x16xf32>, vector<8x8xf32> -> vector<8x8xf32>
    %cst_137 = arith.constant 2.500000e-01 : f32
    %305 = vector.broadcast %cst_137 : f32 to vector<8x8xf32>
    %306 = arith.mulf %304, %305 : vector<8x8xf32>
    %cst_138 = arith.constant -1.000000e+30 : f32
    %307 = vector.broadcast %cst_138 : f32 to vector<8x8xf32>
    %308 = arith.select %45, %306, %307 : vector<8x8xi1>, vector<8x8xf32>
    %cst_139 = arith.constant dense<0xFF800000> : vector<8xf32>
    %309 = vector.multi_reduction <maximumf>, %308, %cst_139 [1] : vector<8x8xf32> to vector<8xf32>
    %310 = vector.shape_cast %309 : vector<8xf32> to vector<8x1xf32>
    %311 = vector.broadcast %310 : vector<8x1xf32> to vector<8x8xf32>
    %312 = arith.subf %308, %311 : vector<8x8xf32>
    %313 = math.exp %312 : vector<8x8xf32>
    %cst_140 = arith.constant dense<0.000000e+00> : vector<8xf32>
    %314 = vector.multi_reduction <add>, %313, %cst_140 [1] : vector<8x8xf32> to vector<8xf32>
    %315 = vector.shape_cast %314 : vector<8xf32> to vector<8x1xf32>
    %316 = tpu.reciprocal %315 {approx = true} : vector<8x1xf32> -> vector<8x1xf32>
    %317 = vector.broadcast %316 : vector<8x1xf32> to vector<8x8xf32>
    %318 = arith.mulf %313, %317 : vector<8x8xf32>
    %cst_141 = arith.constant dense<0.000000e+00> : vector<8x16xf32>
    %319 = tpu.matmul %318, %303, %cst_141 {dimension_numbers = #tpu.dot_dimension_numbers<[1], [0], [0], [1], [0, 0, 1, 1], [], []>} : vector<8x8xf32>, vector<8x16xf32>, vector<8x16xf32> -> vector<8x16xf32>
    %c1_142 = arith.constant 1 : index
    %c32_143 = arith.constant 32 : index
    %c0_144 = arith.constant 0 : index
    %320 = vector.load %arg8[%c1_142, %c32_143, %c0_144] : memref<2x64x64xf32, #tpu.memory_space<vmem>>, vector<1x16x64xf32>
    %321 = vector.shape_cast %320 : vector<1x16x64xf32> to vector<16x64xf32>
    %cst_145 = arith.constant dense<0.000000e+00> : vector<8x64xf32>
    %322 = tpu.matmul %319, %321, %cst_145 {dimension_numbers = #tpu.dot_dimension_numbers<[1], [0], [0], [1], [0, 0, 1, 1], [], []>} : vector<8x16xf32>, vector<16x64xf32>, vector<8x64xf32> -> vector<8x64xf32>
    %323 = arith.addf %300, %322 : vector<8x64xf32>
    %324 = vector.extract_strided_slice %253 {offsets = [0, 48], sizes = [8, 16], strides = [1, 1]} : vector<8x192xf32> to vector<8x16xf32>
    %325 = vector.extract_strided_slice %253 {offsets = [0, 112], sizes = [8, 16], strides = [1, 1]} : vector<8x192xf32> to vector<8x16xf32>
    %326 = vector.extract_strided_slice %253 {offsets = [0, 176], sizes = [8, 16], strides = [1, 1]} : vector<8x192xf32> to vector<8x16xf32>
    %cst_146 = arith.constant dense<0.000000e+00> : vector<8x8xf32>
    %327 = tpu.matmul %324, %325, %cst_146 {dimension_numbers = #tpu.dot_dimension_numbers<[1], [1], [0], [0], [0, 0, 1, 0], [], []>} : vector<8x16xf32>, vector<8x16xf32>, vector<8x8xf32> -> vector<8x8xf32>
    %cst_147 = arith.constant 2.500000e-01 : f32
    %328 = vector.broadcast %cst_147 : f32 to vector<8x8xf32>
    %329 = arith.mulf %327, %328 : vector<8x8xf32>
    %cst_148 = arith.constant -1.000000e+30 : f32
    %330 = vector.broadcast %cst_148 : f32 to vector<8x8xf32>
    %331 = arith.select %45, %329, %330 : vector<8x8xi1>, vector<8x8xf32>
    %cst_149 = arith.constant dense<0xFF800000> : vector<8xf32>
    %332 = vector.multi_reduction <maximumf>, %331, %cst_149 [1] : vector<8x8xf32> to vector<8xf32>
    %333 = vector.shape_cast %332 : vector<8xf32> to vector<8x1xf32>
    %334 = vector.broadcast %333 : vector<8x1xf32> to vector<8x8xf32>
    %335 = arith.subf %331, %334 : vector<8x8xf32>
    %336 = math.exp %335 : vector<8x8xf32>
    %cst_150 = arith.constant dense<0.000000e+00> : vector<8xf32>
    %337 = vector.multi_reduction <add>, %336, %cst_150 [1] : vector<8x8xf32> to vector<8xf32>
    %338 = vector.shape_cast %337 : vector<8xf32> to vector<8x1xf32>
    %339 = tpu.reciprocal %338 {approx = true} : vector<8x1xf32> -> vector<8x1xf32>
    %340 = vector.broadcast %339 : vector<8x1xf32> to vector<8x8xf32>
    %341 = arith.mulf %336, %340 : vector<8x8xf32>
    %cst_151 = arith.constant dense<0.000000e+00> : vector<8x16xf32>
    %342 = tpu.matmul %341, %326, %cst_151 {dimension_numbers = #tpu.dot_dimension_numbers<[1], [0], [0], [1], [0, 0, 1, 1], [], []>} : vector<8x8xf32>, vector<8x16xf32>, vector<8x16xf32> -> vector<8x16xf32>
    %c1_152 = arith.constant 1 : index
    %c48_153 = arith.constant 48 : index
    %c0_154 = arith.constant 0 : index
    %343 = vector.load %arg8[%c1_152, %c48_153, %c0_154] : memref<2x64x64xf32, #tpu.memory_space<vmem>>, vector<1x16x64xf32>
    %344 = vector.shape_cast %343 : vector<1x16x64xf32> to vector<16x64xf32>
    %cst_155 = arith.constant dense<0.000000e+00> : vector<8x64xf32>
    %345 = tpu.matmul %342, %344, %cst_155 {dimension_numbers = #tpu.dot_dimension_numbers<[1], [0], [0], [1], [0, 0, 1, 1], [], []>} : vector<8x16xf32>, vector<16x64xf32>, vector<8x64xf32> -> vector<8x64xf32>
    %346 = arith.addf %323, %345 : vector<8x64xf32>
    %347 = vector.extract_strided_slice %224 {offsets = [4, 0], sizes = [1, 64], strides = [1, 1]} : vector<6x64xf32> to vector<1x64xf32>
    %348 = vector.broadcast %347 : vector<1x64xf32> to vector<8x64xf32>
    %349 = arith.addf %346, %348 : vector<8x64xf32>
    %350 = arith.addf %222, %349 : vector<8x64xf32>
    %351 = vector.extract_strided_slice %224 {offsets = [2, 0], sizes = [1, 64], strides = [1, 1]} : vector<6x64xf32> to vector<1x64xf32>
    %352 = vector.extract_strided_slice %224 {offsets = [3, 0], sizes = [1, 64], strides = [1, 1]} : vector<6x64xf32> to vector<1x64xf32>
    %cst_156 = arith.constant dense<0.000000e+00> : vector<8xf32>
    %353 = vector.multi_reduction <add>, %350, %cst_156 [1] : vector<8x64xf32> to vector<8xf32>
    %354 = vector.shape_cast %353 : vector<8xf32> to vector<8x1xf32>
    %cst_157 = arith.constant 6.400000e+01 : f32
    %355 = vector.broadcast %cst_157 : f32 to vector<8x1xf32>
    %356 = arith.divf %354, %355 : vector<8x1xf32>
    %357 = vector.broadcast %356 : vector<8x1xf32> to vector<8x64xf32>
    %358 = arith.subf %350, %357 : vector<8x64xf32>
    %359 = arith.mulf %358, %358 : vector<8x64xf32>
    %cst_158 = arith.constant dense<0.000000e+00> : vector<8xf32>
    %360 = vector.multi_reduction <add>, %359, %cst_158 [1] : vector<8x64xf32> to vector<8xf32>
    %361 = vector.shape_cast %360 : vector<8xf32> to vector<8x1xf32>
    %cst_159 = arith.constant 6.400000e+01 : f32
    %362 = vector.broadcast %cst_159 : f32 to vector<8x1xf32>
    %363 = arith.divf %361, %362 : vector<8x1xf32>
    %cst_160 = arith.constant 9.99999974E-6 : f32
    %364 = vector.broadcast %cst_160 : f32 to vector<8x1xf32>
    %365 = arith.addf %363, %364 : vector<8x1xf32>
    %366 = math.rsqrt %365 : vector<8x1xf32>
    %367 = vector.broadcast %366 : vector<8x1xf32> to vector<8x64xf32>
    %368 = arith.mulf %358, %367 : vector<8x64xf32>
    %369 = vector.broadcast %351 : vector<1x64xf32> to vector<8x64xf32>
    %370 = arith.mulf %368, %369 : vector<8x64xf32>
    %371 = vector.broadcast %352 : vector<1x64xf32> to vector<8x64xf32>
    %372 = arith.addf %370, %371 : vector<8x64xf32>
    %c1_161 = arith.constant 1 : index
    %c0_162 = arith.constant 0 : index
    %c0_163 = arith.constant 0 : index
    %373 = vector.load %arg9[%c1_161, %c0_162, %c0_163] : memref<2x64x256xf32, #tpu.memory_space<vmem>>, vector<1x64x256xf32>
    %374 = vector.shape_cast %373 : vector<1x64x256xf32> to vector<64x256xf32>
    %cst_164 = arith.constant dense<0.000000e+00> : vector<8x256xf32>
    %375 = tpu.matmul %372, %374, %cst_164 {dimension_numbers = #tpu.dot_dimension_numbers<[1], [0], [0], [1], [0, 0, 1, 1], [], []>} : vector<8x64xf32>, vector<64x256xf32>, vector<8x256xf32> -> vector<8x256xf32>
    %c1_165 = arith.constant 1 : index
    %c0_166 = arith.constant 0 : index
    %c0_167 = arith.constant 0 : index
    %376 = vector.load %arg10[%c1_165, %c0_166, %c0_167] : memref<2x1x256xf32, #tpu.memory_space<vmem>>, vector<1x1x256xf32>
    %377 = vector.shape_cast %376 : vector<1x1x256xf32> to vector<1x256xf32>
    %378 = vector.broadcast %377 : vector<1x256xf32> to vector<8x256xf32>
    %379 = arith.addf %375, %378 : vector<8x256xf32>
    %cst_168 = arith.constant 5.000000e-01 : f32
    %380 = vector.broadcast %cst_168 : f32 to vector<8x256xf32>
    %381 = arith.mulf %380, %379 : vector<8x256xf32>
    %382 = arith.mulf %379, %379 : vector<8x256xf32>
    %383 = arith.mulf %382, %379 : vector<8x256xf32>
    %cst_169 = arith.constant 4.471500e-02 : f32
    %384 = vector.broadcast %cst_169 : f32 to vector<8x256xf32>
    %385 = arith.mulf %384, %383 : vector<8x256xf32>
    %386 = arith.addf %379, %385 : vector<8x256xf32>
    %cst_170 = arith.constant 0.797884583 : f32
    %387 = vector.broadcast %cst_170 : f32 to vector<8x256xf32>
    %388 = arith.mulf %387, %386 : vector<8x256xf32>
    %389 = math.tanh %388 : vector<8x256xf32>
    %cst_171 = arith.constant 1.000000e+00 : f32
    %390 = vector.broadcast %cst_171 : f32 to vector<8x256xf32>
    %391 = arith.addf %390, %389 : vector<8x256xf32>
    %392 = arith.mulf %381, %391 : vector<8x256xf32>
    %c1_172 = arith.constant 1 : index
    %c0_173 = arith.constant 0 : index
    %c0_174 = arith.constant 0 : index
    %393 = vector.load %arg11[%c1_172, %c0_173, %c0_174] : memref<2x256x64xf32, #tpu.memory_space<vmem>>, vector<1x256x64xf32>
    %394 = vector.shape_cast %393 : vector<1x256x64xf32> to vector<256x64xf32>
    %cst_175 = arith.constant dense<0.000000e+00> : vector<8x64xf32>
    %395 = tpu.matmul %392, %394, %cst_175 {dimension_numbers = #tpu.dot_dimension_numbers<[1], [0], [0], [1], [0, 0, 1, 1], [], []>} : vector<8x256xf32>, vector<256x64xf32>, vector<8x64xf32> -> vector<8x64xf32>
    %396 = vector.extract_strided_slice %224 {offsets = [5, 0], sizes = [1, 64], strides = [1, 1]} : vector<6x64xf32> to vector<1x64xf32>
    %397 = vector.broadcast %396 : vector<1x64xf32> to vector<8x64xf32>
    %398 = arith.addf %395, %397 : vector<8x64xf32>
    %399 = arith.addf %372, %398 : vector<8x64xf32>
    %c0_176 = arith.constant 0 : index
    %c0_177 = arith.constant 0 : index
    %400 = vector.load %arg5[%c0_176, %c0_177] : memref<2x64xf32, #tpu.memory_space<vmem>>, vector<2x64xf32>
    %401 = vector.extract_strided_slice %399 {offsets = [7, 0], sizes = [1, 64], strides = [1, 1]} : vector<8x64xf32> to vector<1x64xf32>
    %402 = vector.extract_strided_slice %400 {offsets = [0, 0], sizes = [1, 64], strides = [1, 1]} : vector<2x64xf32> to vector<1x64xf32>
    %403 = vector.extract_strided_slice %400 {offsets = [1, 0], sizes = [1, 64], strides = [1, 1]} : vector<2x64xf32> to vector<1x64xf32>
    %cst_178 = arith.constant dense<0.000000e+00> : vector<1xf32>
    %404 = vector.multi_reduction <add>, %401, %cst_178 [1] : vector<1x64xf32> to vector<1xf32>
    %405 = vector.shape_cast %404 : vector<1xf32> to vector<1x1xf32>
    %cst_179 = arith.constant 6.400000e+01 : f32
    %406 = vector.broadcast %cst_179 : f32 to vector<1x1xf32>
    %407 = arith.divf %405, %406 : vector<1x1xf32>
    %408 = vector.broadcast %407 : vector<1x1xf32> to vector<1x64xf32>
    %409 = arith.subf %401, %408 : vector<1x64xf32>
    %410 = arith.mulf %409, %409 : vector<1x64xf32>
    %cst_180 = arith.constant dense<0.000000e+00> : vector<1xf32>
    %411 = vector.multi_reduction <add>, %410, %cst_180 [1] : vector<1x64xf32> to vector<1xf32>
    %412 = vector.shape_cast %411 : vector<1xf32> to vector<1x1xf32>
    %cst_181 = arith.constant 6.400000e+01 : f32
    %413 = vector.broadcast %cst_181 : f32 to vector<1x1xf32>
    %414 = arith.divf %412, %413 : vector<1x1xf32>
    %cst_182 = arith.constant 9.99999974E-6 : f32
    %415 = vector.broadcast %cst_182 : f32 to vector<1x1xf32>
    %416 = arith.addf %414, %415 : vector<1x1xf32>
    %417 = math.rsqrt %416 : vector<1x1xf32>
    %418 = vector.broadcast %417 : vector<1x1xf32> to vector<1x64xf32>
    %419 = arith.mulf %409, %418 : vector<1x64xf32>
    %420 = arith.mulf %419, %402 : vector<1x64xf32>
    %421 = arith.addf %420, %403 : vector<1x64xf32>
    %c0_183 = arith.constant 0 : index
    %c0_184 = arith.constant 0 : index
    %422 = vector.load %arg2[%c0_183, %c0_184] : memref<512x64xf32, #tpu.memory_space<vmem>>, vector<512x64xf32>
    %cst_185 = arith.constant dense<0.000000e+00> : vector<1x512xf32>
    %423 = tpu.matmul %421, %422, %cst_185 {dimension_numbers = #tpu.dot_dimension_numbers<[1], [1], [0], [0], [0, 0, 1, 0], [], []>} : vector<1x64xf32>, vector<512x64xf32>, vector<1x512xf32> -> vector<1x512xf32>
    %c0_186 = arith.constant 0 : index
    %c0_187 = arith.constant 0 : index
    %c0_188 = arith.constant 0 : index
    %424 = vector.load %arg12[%c0_186, %c0_187, %c0_188] : memref<1x1x512xf32, #tpu.memory_space<vmem>>, vector<1x1x512xf32>
    %425 = vector.shape_cast %424 : vector<1x1x512xf32> to vector<1x512xf32>
    %426 = vector.shape_cast %423 : vector<1x512xf32> to vector<1x1x512xf32>
    tpu.vector_store %arg12[%c0_186, %c0_187, %c0_188], %426 {strides = array<i32>} : memref<1x1x512xf32, #tpu.memory_space<vmem>>, vector<1x1x512xf32>,
    return
  }
  func.func @transform_0(%arg0: i32, %arg1: memref<2x8xi32, #tpu.memory_space<smem>>) -> (i32, i32) {
    %c0_i32 = arith.constant 0 : i32
    %c0_i32_0 = arith.constant 0 : i32
    %c0_i32_1 = arith.constant 0 : i32
    return %c0_i32, %c0_i32_0 : i32, i32
  }
  func.func @transform_1(%arg0: i32, %arg1: memref<2x8xi32, #tpu.memory_space<smem>>) -> (i32, i32) {
    %c0_i32 = arith.constant 0 : i32
    %c0_i32_0 = arith.constant 0 : i32
    %c0_i32_1 = arith.constant 0 : i32
    return %c0_i32, %c0_i32_0 : i32, i32
  }
  func.func @transform_2(%arg0: i32, %arg1: memref<2x8xi32, #tpu.memory_space<smem>>) -> (i32, i32, i32) {
    %c0_i32 = arith.constant 0 : i32
    %c0_i32_0 = arith.constant 0 : i32
    %c0_i32_1 = arith.constant 0 : i32
    %c0_i32_2 = arith.constant 0 : i32
    return %c0_i32, %c0_i32_0, %c0_i32_1 : i32, i32, i32
  }
  func.func @transform_3(%arg0: i32, %arg1: memref<2x8xi32, #tpu.memory_space<smem>>) -> (i32, i32) {
    %c0_i32 = arith.constant 0 : i32
    %c0_i32_0 = arith.constant 0 : i32
    %c0_i32_1 = arith.constant 0 : i32
    return %c0_i32, %c0_i32_0 : i32, i32
  }
  func.func @transform_4(%arg0: i32, %arg1: memref<2x8xi32, #tpu.memory_space<smem>>) -> (i32, i32, i32) {
    %c0_i32 = arith.constant 0 : i32
    %c0_i32_0 = arith.constant 0 : i32
    %c0_i32_1 = arith.constant 0 : i32
    %c0_i32_2 = arith.constant 0 : i32
    return %c0_i32, %c0_i32_0, %c0_i32_1 : i32, i32, i32
  }
  func.func @transform_5(%arg0: i32, %arg1: memref<2x8xi32, #tpu.memory_space<smem>>) -> (i32, i32, i32) {
    %c0_i32 = arith.constant 0 : i32
    %c0_i32_0 = arith.constant 0 : i32
    %c0_i32_1 = arith.constant 0 : i32
    %c0_i32_2 = arith.constant 0 : i32
    return %c0_i32, %c0_i32_0, %c0_i32_1 : i32, i32, i32
  }
  func.func @transform_6(%arg0: i32, %arg1: memref<2x8xi32, #tpu.memory_space<smem>>) -> (i32, i32, i32) {
    %c0_i32 = arith.constant 0 : i32
    %c0_i32_0 = arith.constant 0 : i32
    %c0_i32_1 = arith.constant 0 : i32
    %c0_i32_2 = arith.constant 0 : i32
    return %c0_i32, %c0_i32_0, %c0_i32_1 : i32, i32, i32
  }
  func.func @transform_7(%arg0: i32, %arg1: memref<2x8xi32, #tpu.memory_space<smem>>) -> (i32, i32, i32) {
    %c0_i32 = arith.constant 0 : i32
    %c0_i32_0 = arith.constant 0 : i32
    %c0_i32_1 = arith.constant 0 : i32
    %c0_i32_2 = arith.constant 0 : i32
    return %c0_i32, %c0_i32_0, %c0_i32_1 : i32, i32, i32
  }
  func.func @transform_8(%arg0: i32, %arg1: memref<2x8xi32, #tpu.memory_space<smem>>) -> (i32, i32, i32) {
    %c0_i32 = arith.constant 0 : i32
    %c0_i32_0 = arith.constant 0 : i32
    %c0_i32_1 = arith.constant 0 : i32
    %c0_i32_2 = arith.constant 0 : i32
    return %c0_i32, %c0_i32_0, %c0_i32_1 : i32, i32, i32
  }
  func.func @transform_9(%arg0: i32, %arg1: memref<2x8xi32, #tpu.memory_space<smem>>) -> (i32, i32, i32) {
    %c0_i32 = arith.constant 0 : i32
    %c0_i32_0 = arith.constant 0 : i32
    %c0_i32_1 = arith.constant 0 : i32
    %c0_i32_2 = arith.constant 0 : i32
    return %c0_i32, %c0_i32_0, %c0_i32_1 : i32, i32, i32
  }
  func.func @transform_10(%arg0: i32, %arg1: memref<2x8xi32, #tpu.memory_space<smem>>) -> (i32, i32, i32) {
    %c0_i32 = arith.constant 0 : i32
    %c0_i32_0 = arith.constant 0 : i32
    %c0_i32_1 = arith.constant 0 : i32
    return %arg0, %c0_i32, %c0_i32_0 : i32, i32, i32
  }
}

</mosaic_0001>

<llo_original>
// kernel: gpt_forward.1
$region0: #{gpt_forward.1}
  #allocation0 [shape = 'u32[]', space=smem, size = 0x4, offset = 0x4, fixed_abs, tag = 'smem constant byte address 0x4 - core index']
  #allocation1 [shape = 'u32[144,128]{1,0:T(1,128)}', space=vmem, size = 0x12000, scoped, tag = 'internal scratch']
  #allocation2 [shape = 'f32[8,64]{1,0:T(8,128)}', space=vmem, size = 0x1000, scoped, tag = 'scratch operand']
  #allocation3 [shape = 's32[1]{0}', space=sflag, size = 0x4, scoped, tag = 'scoped memory for gpt_forward.1']
  #allocation4 [shape = 'u8[1024]{0}', space=smem, size = 0x400, scoped, tag = 'prefetched SMEM operand 0']
  %s0 = inlined_call_operand.vmem [shape: s32[2,8], index: 0, kind: input, shape index: {}]
  %s1 = inlined_call_operand.vmem [shape: f32[512,64], index: 1, kind: input, shape index: {}]
  %s2 = inlined_call_operand.vmem [shape: f32[64,64], index: 2, kind: input, shape index: {}]
  %s3 = inlined_call_operand.vmem [shape: f32[2,6,64], index: 3, kind: input, shape index: {}]
  %s4 = inlined_call_operand.vmem [shape: f32[2,64], index: 4, kind: input, shape index: {}]
  %s5 = inlined_call_operand.vmem [shape: f32[2,64,192], index: 5, kind: input, shape index: {}]
  %s6 = inlined_call_operand.vmem [shape: f32[2,1,192], index: 6, kind: input, shape index: {}]
  %s7 = inlined_call_operand.vmem [shape: f32[2,64,64], index: 7, kind: input, shape index: {}]
  %s8 = inlined_call_operand.vmem [shape: f32[2,64,256], index: 8, kind: input, shape index: {}]
  %s9 = inlined_call_operand.vmem [shape: f32[2,1,256], index: 9, kind: input, shape index: {}]
  %s10 = inlined_call_operand.vmem [shape: f32[2,256,64], index: 10, kind: input, shape index: {}]
  %s11 = inlined_call_operand.hbm [shape: f32[2,1,512], index: 11, kind: output, shape index: {}]
  %s12 = sld [smem:[#allocation0]]
  $region73: #{gpt_forward.1} parent=0
    _
  %s14 = ssub.s32 1, %s12
  %s15 = scalar_select 0, %s14, %s12
  %s16 = sshll.u32 %s0, 4
  %s17 = int_to_ptr.vmem [resolvable:$true] %s16
  %19 = dma.vmem_to_smem %s17, 32, [#allocation4], [#allocation3]
  %20 = dma.done [#allocation3], 32
  %21 = sfence
  $region1: #{gpt_forward.1} parent=0
    #allocation5 [shape = 'u8[4096]{0}', space=vmem, size = 0x1000, scoped, tag = 'output window, operand 0']
    #allocation6 [shape = 's32[2]{0}', space=sflag, size = 0x8, scoped, tag = 'scoped memory for gpt_forward.1']
    %22 = vsyncpa [#allocation6], 0
    %s23 = scalar_lea.sflag [#allocation6], 1
    %24 = vsyncpa %s23, 0
    loop: start=0, step=1, limit=4
    $region2: #{gpt_forward.1} parent=1 // loop_pre_header
      _
    $region3: #{gpt_forward.1} parent=1 // loop_header
      %s26 = sphi 0, %s30
      %p27 = scmp.ge.s32.totalorder %s26, 4
      %s34 = sphi 0, %s34
      %s36 = sphi 0, %s34
      %s37 = sphi 0, %s36
      %s51 = sphi 0, %s37
      %s55 = sphi 0, %s55
      %s57 = sphi 0, %s55
      %s58 = sphi 0, %s57
      %s72 = sphi 0, %s58
      %s76 = sphi 0, %s76
      %s78 = sphi 0, %s76
      %s79 = sphi 0, %s78
      %s93 = sphi 0, %s79
      %s97 = sphi 0, %s97
      %s99 = sphi 0, %s97
      %s100 = sphi 0, %s99
      %s114 = sphi 0, %s100
      %s118 = sphi 0, %s118
      %s120 = sphi 0, %s118
      %s121 = sphi 0, %s120
      %s135 = sphi 0, %s121
      %s139 = sphi 0, %s139
      %s141 = sphi 0, %s139
      %s142 = sphi 0, %s141
      %s156 = sphi 0, %s142
      %s160 = sphi 0, %s160
      %s162 = sphi 0, %s160
      %s163 = sphi 0, %s162
      %s177 = sphi 0, %s163
      %s181 = sphi 0, %s181
      %s183 = sphi 0, %s181
      %s184 = sphi 0, %s183
      %s198 = sphi 0, %s184
      %s202 = sphi 0, %s202
      %s204 = sphi 0, %s202
      %s205 = sphi 0, %s204
      %s219 = sphi 0, %s205
      %s223 = sphi 0, %s223
      %s225 = sphi 0, %s223
      %s226 = sphi 0, %s225
      %s240 = sphi 0, %s226
      %s246 = sphi 0, %s248
      %s249 = sphi 0, %s246
      %s250 = sphi 0, %s249
      %s266 = sphi 0, %s250
    $region4: #{gpt_forward.1} parent=1 // loop_header_branch
      %29 = sbr.rel (%p27) target = $region8
    $region5: #{gpt_forward.1} parent=1 // loop_body
      %s31 = ssub.s32 %s26, 1
      %s32 = ssub.s32 %s26, 2
      %s33 = sadd.s32 %s26, 1
      %s35 = sadd.s32 %s34, 1
      %p38 = scmp.eq.s32.totalorder %s26, 1
      %p39 = scmp.ne.s32.totalorder %s34, %s36
      %p40 = scmp.eq.s32.totalorder %s26, 0
      %p41 = por %p39, %p40
      %p42 = scmp.ne.s32.totalorder %s34, %s36
      %p43 = scmp.eq.s32.totalorder %s31, 1
      %p44 = por %p42, %p43
      %p45 = scmp.ne.s32.totalorder %s36, %s37
      %p46 = scmp.eq.s32.totalorder %s31, 0
      %p47 = por %p45, %p46
      %p48 = scmp.ne.s32.totalorder %s36, %s37
      %p49 = scmp.eq.s32.totalorder %s32, 1
      %p50 = por %p48, %p49
      %p52 = scmp.ne.s32.totalorder %s37, %s51
      %p53 = scmp.eq.s32.totalorder %s32, 0
      %p54 = por %p52, %p53
      %s56 = sadd.s32 %s55, 1
      %p59 = scmp.eq.s32.totalorder %s26, 1
      %p60 = scmp.ne.s32.totalorder %s55, %s57
      %p61 = scmp.eq.s32.totalorder %s26, 0
      %p62 = por %p60, %p61
      %p63 = scmp.ne.s32.totalorder %s55, %s57
      %p64 = scmp.eq.s32.totalorder %s31, 1
      %p65 = por %p63, %p64
      %p66 = scmp.ne.s32.totalorder %s57, %s58
      %p67 = scmp.eq.s32.totalorder %s31, 0
      %p68 = por %p66, %p67
      %p69 = scmp.ne.s32.totalorder %s57, %s58
      %p70 = scmp.eq.s32.totalorder %s32, 1
      %p71 = por %p69, %p70
      %p73 = scmp.ne.s32.totalorder %s58, %s72
      %p74 = scmp.eq.s32.totalorder %s32, 0
      %p75 = por %p73, %p74
      %s77 = sadd.s32 %s76, 1
      %p80 = scmp.eq.s32.totalorder %s26, 1
      %p81 = scmp.ne.s32.totalorder %s76, %s78
      %p82 = scmp.eq.s32.totalorder %s26, 0
      %p83 = por %p81, %p82
      %p84 = scmp.ne.s32.totalorder %s76, %s78
      %p85 = scmp.eq.s32.totalorder %s31, 1
      %p86 = por %p84, %p85
      %p87 = scmp.ne.s32.totalorder %s78, %s79
      %p88 = scmp.eq.s32.totalorder %s31, 0
      %p89 = por %p87, %p88
      %p90 = scmp.ne.s32.totalorder %s78, %s79
      %p91 = scmp.eq.s32.totalorder %s32, 1
      %p92 = por %p90, %p91
      %p94 = scmp.ne.s32.totalorder %s79, %s93
      %p95 = scmp.eq.s32.totalorder %s32, 0
      %p96 = por %p94, %p95
      %s98 = sadd.s32 %s97, 1
      %p101 = scmp.eq.s32.totalorder %s26, 1
      %p102 = scmp.ne.s32.totalorder %s97, %s99
      %p103 = scmp.eq.s32.totalorder %s26, 0
      %p104 = por %p102, %p103
      %p105 = scmp.ne.s32.totalorder %s97, %s99
      %p106 = scmp.eq.s32.totalorder %s31, 1
      %p107 = por %p105, %p106
      %p108 = scmp.ne.s32.totalorder %s99, %s100
      %p109 = scmp.eq.s32.totalorder %s31, 0
      %p110 = por %p108, %p109
      %p111 = scmp.ne.s32.totalorder %s99, %s100
      %p112 = scmp.eq.s32.totalorder %s32, 1
      %p113 = por %p111, %p112
      %p115 = scmp.ne.s32.totalorder %s100, %s114
      %p116 = scmp.eq.s32.totalorder %s32, 0
      %p117 = por %p115, %p116
      %s119 = sadd.s32 %s118, 1
      %p122 = scmp.eq.s32.totalorder %s26, 1
      %p123 = scmp.ne.s32.totalorder %s118, %s120
      %p124 = scmp.eq.s32.totalorder %s26, 0
      %p125 = por %p123, %p124
      %p126 = scmp.ne.s32.totalorder %s118, %s120
      %p127 = scmp.eq.s32.totalorder %s31, 1
      %p128 = por %p126, %p127
      %p129 = scmp.ne.s32.totalorder %s120, %s121
      %p130 = scmp.eq.s32.totalorder %s31, 0
      %p131 = por %p129, %p130
      %p132 = scmp.ne.s32.totalorder %s120, %s121
      %p133 = scmp.eq.s32.totalorder %s32, 1
      %p134 = por %p132, %p133
      %p136 = scmp.ne.s32.totalorder %s121, %s135
      %p137 = scmp.eq.s32.totalorder %s32, 0
      %p138 = por %p136, %p137
      %s140 = sadd.s32 %s139, 1
      %p143 = scmp.eq.s32.totalorder %s26, 1
      %p144 = scmp.ne.s32.totalorder %s139, %s141
      %p145 = scmp.eq.s32.totalorder %s26, 0
      %p146 = por %p144, %p145
      %p147 = scmp.ne.s32.totalorder %s139, %s141
      %p148 = scmp.eq.s32.totalorder %s31, 1
      %p149 = por %p147, %p148
      %p150 = scmp.ne.s32.totalorder %s141, %s142
      %p151 = scmp.eq.s32.totalorder %s31, 0
      %p152 = por %p150, %p151
      %p153 = scmp.ne.s32.totalorder %s141, %s142
      %p154 = scmp.eq.s32.totalorder %s32, 1
      %p155 = por %p153, %p154
      %p157 = scmp.ne.s32.totalorder %s142, %s156
      %p158 = scmp.eq.s32.totalorder %s32, 0
      %p159 = por %p157, %p158
      %s161 = sadd.s32 %s160, 1
      %p164 = scmp.eq.s32.totalorder %s26, 1
      %p165 = scmp.ne.s32.totalorder %s160, %s162
      %p166 = scmp.eq.s32.totalorder %s26, 0
      %p167 = por %p165, %p166
      %p168 = scmp.ne.s32.totalorder %s160, %s162
      %p169 = scmp.eq.s32.totalorder %s31, 1
      %p170 = por %p168, %p169
      %p171 = scmp.ne.s32.totalorder %s162, %s163
      %p172 = scmp.eq.s32.totalorder %s31, 0
      %p173 = por %p171, %p172
      %p174 = scmp.ne.s32.totalorder %s162, %s163
      %p175 = scmp.eq.s32.totalorder %s32, 1
      %p176 = por %p174, %p175
      %p178 = scmp.ne.s32.totalorder %s163, %s177
      %p179 = scmp.eq.s32.totalorder %s32, 0
      %p180 = por %p178, %p179
      %s182 = sadd.s32 %s181, 1
      %p185 = scmp.eq.s32.totalorder %s26, 1
      %p186 = scmp.ne.s32.totalorder %s181, %s183
      %p187 = scmp.eq.s32.totalorder %s26, 0
      %p188 = por %p186, %p187
      %p189 = scmp.ne.s32.totalorder %s181, %s183
      %p190 = scmp.eq.s32.totalorder %s31, 1
      %p191 = por %p189, %p190
      %p192 = scmp.ne.s32.totalorder %s183, %s184
      %p193 = scmp.eq.s32.totalorder %s31, 0
      %p194 = por %p192, %p193
      %p195 = scmp.ne.s32.totalorder %s183, %s184
      %p196 = scmp.eq.s32.totalorder %s32, 1
      %p197 = por %p195, %p196
      %p199 = scmp.ne.s32.totalorder %s184, %s198
      %p200 = scmp.eq.s32.totalorder %s32, 0
      %p201 = por %p199, %p200
      %s203 = sadd.s32 %s202, 1
      %p206 = scmp.eq.s32.totalorder %s26, 1
      %p207 = scmp.ne.s32.totalorder %s202, %s204
      %p208 = scmp.eq.s32.totalorder %s26, 0
      %p209 = por %p207, %p208
      %p210 = scmp.ne.s32.totalorder %s202, %s204
      %p211 = scmp.eq.s32.totalorder %s31, 1
      %p212 = por %p210, %p211
      %p213 = scmp.ne.s32.totalorder %s204, %s205
      %p214 = scmp.eq.s32.totalorder %s31, 0
      %p215 = por %p213, %p214
      %p216 = scmp.ne.s32.totalorder %s204, %s205
      %p217 = scmp.eq.s32.totalorder %s32, 1
      %p218 = por %p216, %p217
      %p220 = scmp.ne.s32.totalorder %s205, %s219
      %p221 = scmp.eq.s32.totalorder %s32, 0
      %p222 = por %p220, %p221
      %s224 = sadd.s32 %s223, 1
      %p227 = scmp.eq.s32.totalorder %s26, 1
      %p228 = scmp.ne.s32.totalorder %s223, %s225
      %p229 = scmp.eq.s32.totalorder %s26, 0
      %p230 = por %p228, %p229
      %p231 = scmp.ne.s32.totalorder %s223, %s225
      %p232 = scmp.eq.s32.totalorder %s31, 1
      %p233 = por %p231, %p232
      %p234 = scmp.ne.s32.totalorder %s225, %s226
      %p235 = scmp.eq.s32.totalorder %s31, 0
      %p236 = por %p234, %p235
      %p237 = scmp.ne.s32.totalorder %s225, %s226
      %p238 = scmp.eq.s32.totalorder %s32, 1
      %p239 = por %p237, %p238
      %p241 = scmp.ne.s32.totalorder %s226, %s240
      %p242 = scmp.eq.s32.totalorder %s32, 0
      %p243 = por %p241, %p242
      %s244 = ssub.s32 %s26, %s33
      %p245 = scmp.eq.s32.totalorder %s244, 0
      %s247 = sadd.s32 %s246, 1
      %s248 = scalar_select %p245, %s246, %s247
      %p251 = pneg %p245
      %p252 = scmp.eq.s32.totalorder %s26, 1
      %p253 = por %p251, %p252
      %p254 = scmp.ne.s32.totalorder %s246, %s249
      %p255 = scmp.eq.s32.totalorder %s26, 0
      %p256 = por %p254, %p255
      %p257 = scmp.ne.s32.totalorder %s246, %s249
      %p258 = scmp.eq.s32.totalorder %s31, 1
      %p259 = por %p257, %p258
      %p260 = scmp.ne.s32.totalorder %s249, %s250
      %p261 = scmp.eq.s32.totalorder %s31, 0
      %p262 = por %p260, %p261
      %p263 = scmp.ne.s32.totalorder %s249, %s250
      %p264 = scmp.eq.s32.totalorder %s32, 1
      %p265 = por %p263, %p264
      %p267 = scmp.ne.s32.totalorder %s250, %s266
      %p268 = scmp.eq.s32.totalorder %s32, 0
      %p269 = por %p267, %p268
      %p270 = scmp.le.s32.totalorder 1, %s26
      %p271 = scmp.lt.s32.totalorder %s26, 3
      %p272 = pnand %p270, %p271
      %p273 = pneg %p272
      // Predicated region
      $region9: #{gpt_forward.1} parent=5 // pred_check
        _
      $region10: #{gpt_forward.1} parent=5 // pred_check_branch
        %275 = sbr.rel (%p272) target = $region12
      $region11: #{gpt_forward.1} parent=5 // pred_region
        %s276 = ssub.s32 %s26, 1
        // Predicated region
        $region13: #{gpt_forward.1} parent=11 // pred_check
          %p277 = pneg %p47
        $region14: #{gpt_forward.1} parent=11 // pred_check_branch
          %279 = sbr.rel (%p277) target = $region16
        $region15: #{gpt_forward.1} parent=11 // pred_region
          _
        $region16: #{gpt_forward.1} parent=11 // pred_fallthru
          _
        // Predicated region
        $region17: #{gpt_forward.1} parent=11 // pred_check
          %p280 = pneg %p68
        $region18: #{gpt_forward.1} parent=11 // pred_check_branch
          %282 = sbr.rel (%p280) target = $region20
        $region19: #{gpt_forward.1} parent=11 // pred_region
          _
        $region20: #{gpt_forward.1} parent=11 // pred_fallthru
          _
        // Predicated region
        $region21: #{gpt_forward.1} parent=11 // pred_check
          %p283 = pneg %p89
        $region22: #{gpt_forward.1} parent=11 // pred_check_branch
          %285 = sbr.rel (%p283) target = $region24
        $region23: #{gpt_forward.1} parent=11 // pred_region
          _
        $region24: #{gpt_forward.1} parent=11 // pred_fallthru
          _
        // Predicated region
        $region25: #{gpt_forward.1} parent=11 // pred_check
          %p286 = pneg %p110
        $region26: #{gpt_forward.1} parent=11 // pred_check_branch
          %288 = sbr.rel (%p286) target = $region28
        $region27: #{gpt_forward.1} parent=11 // pred_region
          _
        $region28: #{gpt_forward.1} parent=11 // pred_fallthru
          _
        // Predicated region
        $region29: #{gpt_forward.1} parent=11 // pred_check
          %p289 = pneg %p131
        $region30: #{gpt_forward.1} parent=11 // pred_check_branch
          %291 = sbr.rel (%p289) target = $region32
        $region31: #{gpt_forward.1} parent=11 // pred_region
          _
        $region32: #{gpt_forward.1} parent=11 // pred_fallthru
          _
        // Predicated region
        $region33: #{gpt_forward.1} parent=11 // pred_check
          %p292 = pneg %p152
        $region34: #{gpt_forward.1} parent=11 // pred_check_branch
          %294 = sbr.rel (%p292) target = $region36
        $region35: #{gpt_forward.1} parent=11 // pred_region
          _
        $region36: #{gpt_forward.1} parent=11 // pred_fallthru
          _
        // Predicated region
        $region37: #{gpt_forward.1} parent=11 // pred_check
          %p295 = pneg %p173
        $region38: #{gpt_forward.1} parent=11 // pred_check_branch
          %297 = sbr.rel (%p295) target = $region40
        $region39: #{gpt_forward.1} parent=11 // pred_region
          _
        $region40: #{gpt_forward.1} parent=11 // pred_fallthru
          _
        // Predicated region
        $region41: #{gpt_forward.1} parent=11 // pred_check
          %p298 = pneg %p194
        $region42: #{gpt_forward.1} parent=11 // pred_check_branch
          %300 = sbr.rel (%p298) target = $region44
        $region43: #{gpt_forward.1} parent=11 // pred_region
          _
        $region44: #{gpt_forward.1} parent=11 // pred_fallthru
          _
        // Predicated region
        $region45: #{gpt_forward.1} parent=11 // pred_check
          %p301 = pneg %p215
        $region46: #{gpt_forward.1} parent=11 // pred_check_branch
          %303 = sbr.rel (%p301) target = $region48
        $region47: #{gpt_forward.1} parent=11 // pred_region
          _
        $region48: #{gpt_forward.1} parent=11 // pred_fallthru
          _
        // Predicated region
        $region49: #{gpt_forward.1} parent=11 // pred_check
          %p304 = pneg %p236
        $region50: #{gpt_forward.1} parent=11 // pred_check_branch
          %306 = sbr.rel (%p304) target = $region52
        $region51: #{gpt_forward.1} parent=11 // pred_region
          _
        $region52: #{gpt_forward.1} parent=11 // pred_fallthru
          _
      $region12: #{gpt_forward.1} parent=5 // pred_fallthru
        _
      %p307 = scmp.lt.s32.totalorder %s26, 2
      // Predicated region
      $region53: #{gpt_forward.1} parent=5 // pred_check
        %p308 = pneg %p307
      $region54: #{gpt_forward.1} parent=5 // pred_check_branch
        %310 = sbr.rel (%p308) target = $region56
      $region55: #{gpt_forward.1} parent=5 // pred_region
        _
      $region56: #{gpt_forward.1} parent=5 // pred_fallthru
        _
      %p311 = scmp.le.s32.totalorder 1, %s26
      %p312 = scmp.lt.s32.totalorder %s26, 3
      %p313 = pnand %p311, %p312
      %p314 = pneg %p313
      // Predicated region
      $region57: #{gpt_forward.1} parent=5 // pred_check
        _
      $region58: #{gpt_forward.1} parent=5 // pred_check_branch
        %316 = sbr.rel (%p313) target = $region60
      $region59: #{gpt_forward.1} parent=5 // pred_region
        %s317 = ssub.s32 %s26, 1
        %p318 = pneg %p47
        %p319 = pneg %p44
        %p320 = pneg %p68
        %p321 = pneg %p65
        %p322 = pneg %p89
        %p323 = pneg %p86
        %p324 = pneg %p110
        %p325 = pneg %p107
        %p326 = pneg %p131
        %p327 = pneg %p128
        %p328 = pneg %p152
        %p329 = pneg %p149
        %p330 = pneg %p173
        %p331 = pneg %p170
        %p332 = pneg %p194
        %p333 = pneg %p191
        %p334 = pneg %p215
        %p335 = pneg %p212
        %p336 = pneg %p236
        %p337 = pneg %p233
        %p338 = pneg %p262
        %p339 = pneg %p259
        %s340 = sand.u32 %s249, 1
        %s341 = scalar_lea.sflag [#allocation6], %s340
        %s342 = sand.u32 %s249, 1
        %s343 = smul.addr %s342, 4
        %s344 = scalar_lea.vmem [#allocation5], %s343
        %s345 = smul.u32 %s31, 128
        %s346 = sld [smem:[#allocation4 + %s345]]
        %s347 = scalar_lea.vmem %s1, %s346
        %v348 = vld [vmem:[%s347] sm:$0x1]
        %vm349 = vcmask 516096
        %350 = vst.msk [vmem:[#allocation2] sm:$0x1] %vm349, %v348
        %s351 = sadd.s32 %s345, 1
        %s352 = sld [smem:[#allocation4 + %s351]]
        %s353 = scalar_lea.vmem %s1, %s352
        %v354 = vld [vmem:[%s353] sm:$0x1]
        %355 = vst.msk [vmem:[#allocation2 + $0x1] sm:$0x1] %vm349, %v354
        %s356 = sadd.s32 %s345, 2
        %s357 = sld [smem:[#allocation4 + %s356]]
        %s358 = scalar_lea.vmem %s1, %s357
        %v359 = vld [vmem:[%s358] sm:$0x1]
        %360 = vst.msk [vmem:[#allocation2 + $0x2] sm:$0x1] %vm349, %v359
        %s361 = sadd.s32 %s345, 3
        %s362 = sld [smem:[#allocation4 + %s361]]
        %s363 = scalar_lea.vmem %s1, %s362
        %v364 = vld [vmem:[%s363] sm:$0x1]
        %365 = vst.msk [vmem:[#allocation2 + $0x3] sm:$0x1] %vm349, %v364
        %s366 = sadd.s32 %s345, 4
        %s367 = sld [smem:[#allocation4 + %s366]]
        %s368 = scalar_lea.vmem %s1, %s367
        %v369 = vld [vmem:[%s368] sm:$0x1]
        %370 = vst.msk [vmem:[#allocation2 + $0x4] sm:$0x1] %vm349, %v369
        %s371 = sadd.s32 %s345, 5
        %s372 = sld [smem:[#allocation4 + %s371]]
        %s373 = scalar_lea.vmem %s1, %s372
        %v374 = vld [vmem:[%s373] sm:$0x1]
        %375 = vst.msk [vmem:[#allocation2 + $0x5] sm:$0x1] %vm349, %v374
        %s376 = sadd.s32 %s345, 6
        %s377 = sld [smem:[#allocation4 + %s376]]
        %s378 = scalar_lea.vmem %s1, %s377
        %v379 = vld [vmem:[%s378] sm:$0x1]
        %380 = vst.msk [vmem:[#allocation2 + $0x6] sm:$0x1] %vm349, %v379
        %s381 = sadd.s32 %s345, 7
        %s382 = sld [smem:[#allocation4 + %s381]]
        %s383 = scalar_lea.vmem %s1, %s382
        %v384 = vld [vmem:[%s383] sm:$0x1]
        %385 = vst.msk [vmem:[#allocation2 + $0x7] sm:$0x1] %vm349, %v384
        %v386 = vld [vmem:[#allocation2] sm:$0xff]
        %v387 = vld [vmem:[%s2] sm:$0xff]
        %v388 = vadd.f32 %v386, %v387
        %v389 = vlaneseq
        %v390 = vshrl.u32 %v389, 7
        %v391 = vlaneseq
        %v392 = vand.u32 %v391, 127
        %vm393 = vcmp.le.s32.totalorder %v392, %v390
        %v394 = vld [vmem:[%s3] sm:$0x3f]
        %vm395 = vcmask 523264
        %v396 = vsel %vm395, %v388, 0.0
        %397 = vadd.xlane.f32.xlu0 %v396
        %v398 = vpop.xlane.xlu0 %397
        %v399 = vrcp.pop 64.0
        %v400 = vmul.f32 %v398, %v399
        %v401 = vsub.f32 %v388, %v400
        %v402 = vmul.f32 %v401, %v401
        %v403 = vsel %vm395, %v402, 0.0
        %404 = vadd.xlane.f32.xlu0 %v403
        %v405 = vpop.xlane.xlu0 %404
        %v406 = vmul.f32 %v405, %v399
        %v407 = vadd.f32 %v406, 1e-05
        %v408 = vrsqrt.pop %v407
        %v409 = vmul.f32 %v401, %v408
        %v410 = vlaneseq
        %v411 = vshrl.u32 %v410, 7
        %v412 = vsub.s32 0, %v411
        %v413 = vrot.slane %v394, %v412
        %v414 = vmul.f32 %v409, %v413
        %v415 = vlaneseq
        %v416 = vshrl.u32 %v415, 7
        %v417 = vsub.s32 1, %v416
        %v418 = vrot.slane %v394, %v417
        %v419 = vadd.f32 %v414, %v418
        %v420 = vld [vmem:[%s5] sm:$0xff]
        %v421 = vld [vmem:[%s5 + $0x8] sm:$0xff]
        %v422 = vld [vmem:[%s5 + $0x10] sm:$0xff]
        %v423 = vld [vmem:[%s5 + $0x18] sm:$0xff]
        %v424 = vld [vmem:[%s5 + $0x20] sm:$0xff]
        %v425 = vld [vmem:[%s5 + $0x28] sm:$0xff]
        %v426 = vld [vmem:[%s5 + $0x30] sm:$0xff]
        %v427 = vld [vmem:[%s5 + $0x38] sm:$0xff]
        %v428 = vld [vmem:[%s5 + $0x40] sm:$0xff]
        %v429 = vld [vmem:[%s5 + $0x48] sm:$0xff]
        %v430 = vld [vmem:[%s5 + $0x50] sm:$0xff]
        %v431 = vld [vmem:[%s5 + $0x58] sm:$0xff]
        %v432 = vld [vmem:[%s5 + $0x60] sm:$0xff]
        %v433 = vld [vmem:[%s5 + $0x68] sm:$0xff]
        %v434 = vld [vmem:[%s5 + $0x70] sm:$0xff]
        %v435 = vld [vmem:[%s5 + $0x78] sm:$0xff]
        %v436 = vld [vmem:[%s6] sm:$0x3]
        %v438 = vlaneseq
        %v439 = vshrl.u32 %v438, 7
        %v440 = vsub.s32 0, %v439
        %v441 = vrot.slane %v436, %v440
        %v442 = vlaneseq
        %v443 = vshrl.u32 %v442, 7
        %v444 = vsub.s32 1, %v443
        %v445 = vrot.slane %v436, %v444
        %v449 = vsel %vm395, %v419, 0
        %451 = vmatprep.subr.mxu0 %v421
        %452 = vmatpush1.msra.mxu0 %v420
        %453 = vmatprep.subr.mxu0 %v423
        %454 = vmatpush1.msra.mxu0 %v422
        %455 = vmatprep.subr.mxu0 %v425
        %456 = vmatpush1.msra.mxu0 %v424
        %457 = vmatprep.subr.mxu0 %v427
        %458 = vmatpush1.msra.mxu0 %v426
        %459 = vmatprep.subr.mxu0 %v429
        %460 = vmatpush1.msra.mxu0 %v428
        %461 = vmatprep.subr.mxu0 %v431
        %462 = vmatpush1.msra.mxu0 %v430
        %463 = vmatprep.subr.mxu0 %v433
        %464 = vmatpush1.msra.mxu0 %v432
        %465 = vmatprep.subr.mxu0 %v435
        %466 = vmatpush1.msra.mxu0 %v434
        %467 = vmatprep.subr.mxu0 0.0
        %468 = vmatpush1.msra.mxu0 0.0
        %469 = vmatprep.subr.mxu0 0.0
        %470 = vmatpush1.msra.mxu0 0.0
        %471 = vmatprep.subr.mxu0 0.0
        %472 = vmatpush1.msra.mxu0 0.0
        %473 = vmatprep.subr.mxu0 0.0
        %474 = vmatpush1.msra.mxu0 0.0
        %475 = vmatprep.subr.mxu0 0.0
        %476 = vmatpush1.msra.mxu0 0.0
        %477 = vmatprep.subr.mxu0 0.0
        %478 = vmatpush1.msra.mxu0 0.0
        %479 = vmatprep.subr.mxu0 0.0
        %480 = vmatpush1.msra.mxu0 0.0
        %481 = vmatprep.subr.mxu0 0.0
        %482 = vmatpush1.msra.mxu0 0.0
        %483 = vmatprep.subr.mxu0 0.0
        %484 = vmatpush1.msra.mxu0 0.0
        %485 = vmatprep.subr.mxu0 0.0
        %486 = vmatpush1.msra.mxu0 0.0
        %487 = vmatprep.subr.mxu0 0.0
        %488 = vmatpush1.msra.mxu0 0.0
        %489 = vmatprep.subr.mxu0 0.0
        %490 = vmatpush1.msra.mxu0 0.0
        %491 = vmatprep.subr.mxu0 0.0
        %492 = vmatpush1.msra.mxu0 0.0
        %493 = vmatprep.subr.mxu0 0.0
        %494 = vmatpush1.msra.mxu0 0.0
        %495 = vmatprep.subr.mxu0 0.0
        %496 = vmatpush1.msra.mxu0 0.0
        %497 = vmatprep.subr.mxu0 0.0
        %498 = vmatpush1.msra.mxu0 0.0
        %499 = vmatprep.subr.mxu0 0.0
        %500 = vmatpush1.msra.mxu0 0.0
        %501 = vmatprep.subr.mxu0 0.0
        %502 = vmatpush1.msra.mxu0 0.0
        %503 = vmatprep.subr.mxu0 0.0
        %504 = vmatpush1.msra.mxu0 0.0
        %505 = vmatprep.subr.mxu0 0.0
        %506 = vmatpush1.msra.mxu0 0.0
        %507 = vmatprep.subr.mxu0 0.0
        %508 = vmatpush1.msra.mxu0 0.0
        %509 = vmatprep.subr.mxu0 0.0
        %510 = vmatpush1.msra.mxu0 0.0
        %511 = vmatprep.subr.mxu0 0.0
        %512 = vmatpush1.msra.mxu0 0.0
        %513 = vmatprep.subr.mxu0 0.0
        %514 = vmatpush1.msra.mxu0 0.0
        %515 = vmatprep.mubr.f32.mxu0 0.0
        %516 = vmatmul.mubr.f32.gmra.mrb[0].mxu0 %v449
        %v517 = vpop.f32.mrb[0].mxu0
        %v518 = vadd.f32 %v441, %v517
        %v519 = vpop.f32.mrb[0].mxu0
        %v520 = vadd.f32 %v445, %v519
        %521 = vdwg.mxu0
        %523 = vrot.lane.b32.xlu0 %v518, 64
        %v524 = vpop.permute.xlu0 %523
        %vm525 = vcmask 130048
        %v526 = vsel %vm525, %v518, 0
        %v528 = vsel %vm525, %v524, 0
        %530 = vmatprep.subr.mxu0 0.0
        %531 = vmatpush1.xpose.msra.mxu0 %v528
        %532 = vmatprep.subr.mxu0 0.0
        %533 = vmatpush1.xpose.msra.mxu0 0.0
        %534 = vmatprep.subr.mxu0 0.0
        %535 = vmatpush1.xpose.msra.mxu0 0.0
        %536 = vmatprep.subr.mxu0 0.0
        %537 = vmatpush1.xpose.msra.mxu0 0.0
        %538 = vmatprep.subr.mxu0 0.0
        %539 = vmatpush1.xpose.msra.mxu0 0.0
        %540 = vmatprep.subr.mxu0 0.0
        %541 = vmatpush1.xpose.msra.mxu0 0.0
        %542 = vmatprep.subr.mxu0 0.0
        %543 = vmatpush1.xpose.msra.mxu0 0.0
        %544 = vmatprep.subr.mxu0 0.0
        %545 = vmatpush1.xpose.msra.mxu0 0.0
        %546 = vmatprep.subr.mxu0 0.0
        %547 = vmatpush1.xpose.msra.mxu0 0.0
        %548 = vmatprep.subr.mxu0 0.0
        %549 = vmatpush1.xpose.msra.mxu0 0.0
        %550 = vmatprep.subr.mxu0 0.0
        %551 = vmatpush1.xpose.msra.mxu0 0.0
        %552 = vmatprep.subr.mxu0 0.0
        %553 = vmatpush1.xpose.msra.mxu0 0.0
        %554 = vmatprep.subr.mxu0 0.0
        %555 = vmatpush1.xpose.msra.mxu0 0.0
        %556 = vmatprep.subr.mxu0 0.0
        %557 = vmatpush1.xpose.msra.mxu0 0.0
        %558 = vmatprep.subr.mxu0 0.0
        %559 = vmatpush1.xpose.msra.mxu0 0.0
        %560 = vmatprep.subr.mxu0 0.0
        %561 = vmatpush1.xpose.msra.mxu0 0.0
        %562 = vmatprep.subr.mxu0 0.0
        %563 = vmatpush1.xpose.msra.mxu0 0.0
        %564 = vmatprep.subr.mxu0 0.0
        %565 = vmatpush1.xpose.msra.mxu0 0.0
        %566 = vmatprep.subr.mxu0 0.0
        %567 = vmatpush1.xpose.msra.mxu0 0.0
        %568 = vmatprep.subr.mxu0 0.0
        %569 = vmatpush1.xpose.msra.mxu0 0.0
        %570 = vmatprep.subr.mxu0 0.0
        %571 = vmatpush1.xpose.msra.mxu0 0.0
        %572 = vmatprep.subr.mxu0 0.0
        %573 = vmatpush1.xpose.msra.mxu0 0.0
        %574 = vmatprep.subr.mxu0 0.0
        %575 = vmatpush1.xpose.msra.mxu0 0.0
        %576 = vmatprep.subr.mxu0 0.0
        %577 = vmatpush1.xpose.msra.mxu0 0.0
        %578 = vmatprep.subr.mxu0 0.0
        %579 = vmatpush1.xpose.msra.mxu0 0.0
        %580 = vmatprep.subr.mxu0 0.0
        %581 = vmatpush1.xpose.msra.mxu0 0.0
        %582 = vmatprep.subr.mxu0 0.0
        %583 = vmatpush1.xpose.msra.mxu0 0.0
        %584 = vmatprep.subr.mxu0 0.0
        %585 = vmatpush1.xpose.msra.mxu0 0.0
        %586 = vmatprep.subr.mxu0 0.0
        %587 = vmatpush1.xpose.msra.mxu0 0.0
        %588 = vmatprep.subr.mxu0 0.0
        %589 = vmatpush1.xpose.msra.mxu0 0.0
        %590 = vmatprep.subr.mxu0 0.0
        %591 = vmatpush1.xpose.msra.mxu0 0.0
        %592 = vmatprep.subr.mxu0 0.0
        %593 = vmatpush1.xpose.msra.mxu0 0.0
        %594 = vmatprep.mubr.f32.mxu0 0.0
        %595 = vmatmul.mubr.f32.gmra.mrb[0].mxu0 %v526
        %v596 = vpop.f32.mrb[0].mxu0
        %v597 = vadd.f32 0.0, %v596
        %v598 = vpop.f32.mrb[0].mxu0
        %599 = vdwg.mxu0
        %v600 = vmul.f32 %v597, 0.25
        %v601 = vsel %vm393, %v600, -1e+30
        %vm602 = vcmask 64512
        %v603 = vsel %vm602, %v601, -inf
        %604 = vmax.xlane.f32.xlu0 %v603
        %v605 = vpop.xlane.xlu0 %604
        %v606 = vsub.f32 %v601, %v605
        %v607 = vmul.f32 %v606, 1.442695
        %v608 = vpow.pop %v607
        %v609 = vsel %vm602, %v608, 0.0
        %610 = vadd.xlane.f32.xlu0 %v609
        %v611 = vpop.xlane.xlu0 %610
        %v612 = vrcp.pop %v611
        %v613 = vmul.f32 %v608, %v612
        %v615 = vsel %vm602, %v613, 0
        %617 = vmatprep.subr.mxu0 0.0
        %618 = vmatpush1.msra.mxu0 %v520
        %619 = vmatprep.subr.mxu0 0.0
        %620 = vmatpush1.msra.mxu0 0.0
        %621 = vmatprep.subr.mxu0 0.0
        %622 = vmatpush1.msra.mxu0 0.0
        %623 = vmatprep.subr.mxu0 0.0
        %624 = vmatpush1.msra.mxu0 0.0
        %625 = vmatprep.subr.mxu0 0.0
        %626 = vmatpush1.msra.mxu0 0.0
        %627 = vmatprep.subr.mxu0 0.0
        %628 = vmatpush1.msra.mxu0 0.0
        %629 = vmatprep.subr.mxu0 0.0
        %630 = vmatpush1.msra.mxu0 0.0
        %631 = vmatprep.subr.mxu0 0.0
        %632 = vmatpush1.msra.mxu0 0.0
        %633 = vmatprep.subr.mxu0 0.0
        %634 = vmatpush1.msra.mxu0 0.0
        %635 = vmatprep.subr.mxu0 0.0
        %636 = vmatpush1.msra.mxu0 0.0
        %637 = vmatprep.subr.mxu0 0.0
        %638 = vmatpush1.msra.mxu0 0.0
        %639 = vmatprep.subr.mxu0 0.0
        %640 = vmatpush1.msra.mxu0 0.0
        %641 = vmatprep.subr.mxu0 0.0
        %642 = vmatpush1.msra.mxu0 0.0
        %643 = vmatprep.subr.mxu0 0.0
        %644 = vmatpush1.msra.mxu0 0.0
        %645 = vmatprep.subr.mxu0 0.0
        %646 = vmatpush1.msra.mxu0 0.0
        %647 = vmatprep.subr.mxu0 0.0
        %648 = vmatpush1.msra.mxu0 0.0
        %649 = vmatprep.subr.mxu0 0.0
        %650 = vmatpush1.msra.mxu0 0.0
        %651 = vmatprep.subr.mxu0 0.0
        %652 = vmatpush1.msra.mxu0 0.0
        %653 = vmatprep.subr.mxu0 0.0
        %654 = vmatpush1.msra.mxu0 0.0
        %655 = vmatprep.subr.mxu0 0.0
        %656 = vmatpush1.msra.mxu0 0.0
        %657 = vmatprep.subr.mxu0 0.0
        %658 = vmatpush1.msra.mxu0 0.0
        %659 = vmatprep.subr.mxu0 0.0
        %660 = vmatpush1.msra.mxu0 0.0
        %661 = vmatprep.subr.mxu0 0.0
        %662 = vmatpush1.msra.mxu0 0.0
        %663 = vmatprep.subr.mxu0 0.0
        %664 = vmatpush1.msra.mxu0 0.0
        %665 = vmatprep.subr.mxu0 0.0
        %666 = vmatpush1.msra.mxu0 0.0
        %667 = vmatprep.subr.mxu0 0.0
        %668 = vmatpush1.msra.mxu0 0.0
        %669 = vmatprep.subr.mxu0 0.0
        %670 = vmatpush1.msra.mxu0 0.0
        %671 = vmatprep.subr.mxu0 0.0
        %672 = vmatpush1.msra.mxu0 0.0
        %673 = vmatprep.subr.mxu0 0.0
        %674 = vmatpush1.msra.mxu0 0.0
        %675 = vmatprep.subr.mxu0 0.0
        %676 = vmatpush1.msra.mxu0 0.0
        %677 = vmatprep.subr.mxu0 0.0
        %678 = vmatpush1.msra.mxu0 0.0
        %679 = vmatprep.subr.mxu0 0.0
        %680 = vmatpush1.msra.mxu0 0.0
        %681 = vmatprep.mubr.f32.mxu0 0.0
        %682 = vmatmul.mubr.f32.gmra.mrb[0].mxu0 %v615
        %v683 = vpop.f32.mrb[0].mxu0
        %v684 = vadd.f32 0.0, %v683
        %v685 = vpop.f32.mrb[0].mxu0
        %686 = vdwg.mxu0
        %v687 = vld [vmem:[%s7] sm:$0xff]
        %v688 = vld [vmem:[%s7 + $0x8] sm:$0xff]
        %689 = vrot.lane.b32.xlu0 %v518, 112
        %v690 = vpop.permute.xlu0 %689
        %691 = vrot.lane.b32.xlu0 %v518, 48
        %v692 = vpop.permute.xlu0 %691
        %v693 = vsel %vm525, %v690, 0
        %v695 = vsel %vm525, %v692, 0
        %697 = vmatprep.subr.mxu0 0.0
        %698 = vmatpush1.xpose.msra.mxu0 %v695
        %699 = vmatprep.subr.mxu0 0.0
        %700 = vmatpush1.xpose.msra.mxu0 0.0
        %701 = vmatprep.subr.mxu0 0.0
        %702 = vmatpush1.xpose.msra.mxu0 0.0
        %703 = vmatprep.subr.mxu0 0.0
        %704 = vmatpush1.xpose.msra.mxu0 0.0
        %705 = vmatprep.subr.mxu0 0.0
        %706 = vmatpush1.xpose.msra.mxu0 0.0
        %707 = vmatprep.subr.mxu0 0.0
        %708 = vmatpush1.xpose.msra.mxu0 0.0
        %709 = vmatprep.subr.mxu0 0.0
        %710 = vmatpush1.xpose.msra.mxu0 0.0
        %711 = vmatprep.subr.mxu0 0.0
        %712 = vmatpush1.xpose.msra.mxu0 0.0
        %713 = vmatprep.subr.mxu0 0.0
        %714 = vmatpush1.xpose.msra.mxu0 0.0
        %715 = vmatprep.subr.mxu0 0.0
        %716 = vmatpush1.xpose.msra.mxu0 0.0
        %717 = vmatprep.subr.mxu0 0.0
        %718 = vmatpush1.xpose.msra.mxu0 0.0
        %719 = vmatprep.subr.mxu0 0.0
        %720 = vmatpush1.xpose.msra.mxu0 0.0
        %721 = vmatprep.subr.mxu0 0.0
        %722 = vmatpush1.xpose.msra.mxu0 0.0
        %723 = vmatprep.subr.mxu0 0.0
        %724 = vmatpush1.xpose.msra.mxu0 0.0
        %725 = vmatprep.subr.mxu0 0.0
        %726 = vmatpush1.xpose.msra.mxu0 0.0
        %727 = vmatprep.subr.mxu0 0.0
        %728 = vmatpush1.xpose.msra.mxu0 0.0
        %729 = vmatprep.subr.mxu0 0.0
        %730 = vmatpush1.xpose.msra.mxu0 0.0
        %731 = vmatprep.subr.mxu0 0.0
        %732 = vmatpush1.xpose.msra.mxu0 0.0
        %733 = vmatprep.subr.mxu0 0.0
        %734 = vmatpush1.xpose.msra.mxu0 0.0
        %735 = vmatprep.subr.mxu0 0.0
        %736 = vmatpush1.xpose.msra.mxu0 0.0
        %737 = vmatprep.subr.mxu0 0.0
        %738 = vmatpush1.xpose.msra.mxu0 0.0
        %739 = vmatprep.subr.mxu0 0.0
        %740 = vmatpush1.xpose.msra.mxu0 0.0
        %741 = vmatprep.subr.mxu0 0.0
        %742 = vmatpush1.xpose.msra.mxu0 0.0
        %743 = vmatprep.subr.mxu0 0.0
        %744 = vmatpush1.xpose.msra.mxu0 0.0
        %745 = vmatprep.subr.mxu0 0.0
        %746 = vmatpush1.xpose.msra.mxu0 0.0
        %747 = vmatprep.subr.mxu0 0.0
        %748 = vmatpush1.xpose.msra.mxu0 0.0
        %749 = vmatprep.subr.mxu0 0.0
        %750 = vmatpush1.xpose.msra.mxu0 0.0
        %751 = vmatprep.subr.mxu0 0.0
        %752 = vmatpush1.xpose.msra.mxu0 0.0
        %753 = vmatprep.subr.mxu0 0.0
        %754 = vmatpush1.xpose.msra.mxu0 0.0
        %755 = vmatprep.subr.mxu0 0.0
        %756 = vmatpush1.xpose.msra.mxu0 0.0
        %757 = vmatprep.subr.mxu0 0.0
        %758 = vmatpush1.xpose.msra.mxu0 0.0
        %759 = vmatprep.subr.mxu0 0.0
        %760 = vmatpush1.xpose.msra.mxu0 0.0
        %761 = vmatprep.mubr.f32.mxu0 0.0
        %762 = vmatmul.mubr.f32.gmra.mrb[0].mxu0 %v693
        %v763 = vpop.f32.mrb[0].mxu0
        %v764 = vadd.f32 0.0, %v763
        %v765 = vpop.f32.mrb[0].mxu0
        %766 = vdwg.mxu0
        %v767 = vmul.f32 %v764, 0.25
        %v768 = vsel %vm393, %v767, -1e+30
        %v769 = vsel %vm602, %v768, -inf
        %770 = vmax.xlane.f32.xlu0 %v769
        %v771 = vpop.xlane.xlu0 %770
        %v772 = vsub.f32 %v768, %v771
        %v773 = vmul.f32 %v772, 1.442695
        %v774 = vpow.pop %v773
        %v775 = vsel %vm602, %v774, 0.0
        %776 = vadd.xlane.f32.xlu0 %v775
        %v777 = vpop.xlane.xlu0 %776
        %v778 = vrcp.pop %v777
        %v779 = vmul.f32 %v774, %v778
        %781 = vrot.lane.b32.xlu0 %v520, 112
        %v782 = vpop.permute.xlu0 %781
        %v785 = vsel %vm602, %v779, 0
        %787 = vmatprep.subr.mxu0 0.0
        %788 = vmatpush1.msra.mxu0 %v782
        %789 = vmatprep.subr.mxu0 0.0
        %790 = vmatpush1.msra.mxu0 0.0
        %791 = vmatprep.subr.mxu0 0.0
        %792 = vmatpush1.msra.mxu0 0.0
        %793 = vmatprep.subr.mxu0 0.0
        %794 = vmatpush1.msra.mxu0 0.0
        %795 = vmatprep.subr.mxu0 0.0
        %796 = vmatpush1.msra.mxu0 0.0
        %797 = vmatprep.subr.mxu0 0.0
        %798 = vmatpush1.msra.mxu0 0.0
        %799 = vmatprep.subr.mxu0 0.0
        %800 = vmatpush1.msra.mxu0 0.0
        %801 = vmatprep.subr.mxu0 0.0
        %802 = vmatpush1.msra.mxu0 0.0
        %803 = vmatprep.subr.mxu0 0.0
        %804 = vmatpush1.msra.mxu0 0.0
        %805 = vmatprep.subr.mxu0 0.0
        %806 = vmatpush1.msra.mxu0 0.0
        %807 = vmatprep.subr.mxu0 0.0
        %808 = vmatpush1.msra.mxu0 0.0
        %809 = vmatprep.subr.mxu0 0.0
        %810 = vmatpush1.msra.mxu0 0.0
        %811 = vmatprep.subr.mxu0 0.0
        %812 = vmatpush1.msra.mxu0 0.0
        %813 = vmatprep.subr.mxu0 0.0
        %814 = vmatpush1.msra.mxu0 0.0
        %815 = vmatprep.subr.mxu0 0.0
        %816 = vmatpush1.msra.mxu0 0.0
        %817 = vmatprep.subr.mxu0 0.0
        %818 = vmatpush1.msra.mxu0 0.0
        %819 = vmatprep.subr.mxu0 0.0
        %820 = vmatpush1.msra.mxu0 0.0
        %821 = vmatprep.subr.mxu0 0.0
        %822 = vmatpush1.msra.mxu0 0.0
        %823 = vmatprep.subr.mxu0 0.0
        %824 = vmatpush1.msra.mxu0 0.0
        %825 = vmatprep.subr.mxu0 0.0
        %826 = vmatpush1.msra.mxu0 0.0
        %827 = vmatprep.subr.mxu0 0.0
        %828 = vmatpush1.msra.mxu0 0.0
        %829 = vmatprep.subr.mxu0 0.0
        %830 = vmatpush1.msra.mxu0 0.0
        %831 = vmatprep.subr.mxu0 0.0
        %832 = vmatpush1.msra.mxu0 0.0
        %833 = vmatprep.subr.mxu0 0.0
        %834 = vmatpush1.msra.mxu0 0.0
        %835 = vmatprep.subr.mxu0 0.0
        %836 = vmatpush1.msra.mxu0 0.0
        %837 = vmatprep.subr.mxu0 0.0
        %838 = vmatpush1.msra.mxu0 0.0
        %839 = vmatprep.subr.mxu0 0.0
        %840 = vmatpush1.msra.mxu0 0.0
        %841 = vmatprep.subr.mxu0 0.0
        %842 = vmatpush1.msra.mxu0 0.0
        %843 = vmatprep.subr.mxu0 0.0
        %844 = vmatpush1.msra.mxu0 0.0
        %845 = vmatprep.subr.mxu0 0.0
        %846 = vmatpush1.msra.mxu0 0.0
        %847 = vmatprep.subr.mxu0 0.0
        %848 = vmatpush1.msra.mxu0 0.0
        %849 = vmatprep.subr.mxu0 0.0
        %850 = vmatpush1.msra.mxu0 0.0
        %851 = vmatprep.mubr.f32.mxu0 0.0
        %852 = vmatmul.mubr.f32.gmra.mrb[0].mxu0 %v785
        %v853 = vpop.f32.mrb[0].mxu0
        %v854 = vadd.f32 0.0, %v853
        %v855 = vpop.f32.mrb[0].mxu0
        %856 = vdwg.mxu0
        %v857 = vld [vmem:[%s7 + $0x10] sm:$0xff]
        %v858 = vld [vmem:[%s7 + $0x18] sm:$0xff]
        %v860 = vsel %vm525, %v854, 0
        %862 = vmatprep.subr.mxu0 0.0
        %863 = vmatpush1.msra.mxu0 %v857
        %864 = vmatprep.subr.mxu0 0.0
        %865 = vmatpush1.msra.mxu0 %v858
        %866 = vmatprep.subr.mxu0 0.0
        %867 = vmatpush1.msra.mxu0 0.0
        %868 = vmatprep.subr.mxu0 0.0
        %869 = vmatpush1.msra.mxu0 0.0
        %870 = vmatprep.subr.mxu0 0.0
        %871 = vmatpush1.msra.mxu0 0.0
        %872 = vmatprep.subr.mxu0 0.0
        %873 = vmatpush1.msra.mxu0 0.0
        %874 = vmatprep.subr.mxu0 0.0
        %875 = vmatpush1.msra.mxu0 0.0
        %876 = vmatprep.subr.mxu0 0.0
        %877 = vmatpush1.msra.mxu0 0.0
        %878 = vmatprep.subr.mxu0 0.0
        %879 = vmatpush1.msra.mxu0 0.0
        %880 = vmatprep.subr.mxu0 0.0
        %881 = vmatpush1.msra.mxu0 0.0
        %882 = vmatprep.subr.mxu0 0.0
        %883 = vmatpush1.msra.mxu0 0.0
        %884 = vmatprep.subr.mxu0 0.0
        %885 = vmatpush1.msra.mxu0 0.0
        %886 = vmatprep.subr.mxu0 0.0
        %887 = vmatpush1.msra.mxu0 0.0
        %888 = vmatprep.subr.mxu0 0.0
        %889 = vmatpush1.msra.mxu0 0.0
        %890 = vmatprep.subr.mxu0 0.0
        %891 = vmatpush1.msra.mxu0 0.0
        %892 = vmatprep.subr.mxu0 0.0
        %893 = vmatpush1.msra.mxu0 0.0
        %894 = vmatprep.subr.mxu0 0.0
        %895 = vmatpush1.msra.mxu0 0.0
        %896 = vmatprep.subr.mxu0 0.0
        %897 = vmatpush1.msra.mxu0 0.0
        %898 = vmatprep.subr.mxu0 0.0
        %899 = vmatpush1.msra.mxu0 0.0
        %900 = vmatprep.subr.mxu0 0.0
        %901 = vmatpush1.msra.mxu0 0.0
        %902 = vmatprep.subr.mxu0 0.0
        %903 = vmatpush1.msra.mxu0 0.0
        %904 = vmatprep.subr.mxu0 0.0
        %905 = vmatpush1.msra.mxu0 0.0
        %906 = vmatprep.subr.mxu0 0.0
        %907 = vmatpush1.msra.mxu0 0.0
        %908 = vmatprep.subr.mxu0 0.0
        %909 = vmatpush1.msra.mxu0 0.0
        %910 = vmatprep.subr.mxu0 0.0
        %911 = vmatpush1.msra.mxu0 0.0
        %912 = vmatprep.subr.mxu0 0.0
        %913 = vmatpush1.msra.mxu0 0.0
        %914 = vmatprep.subr.mxu0 0.0
        %915 = vmatpush1.msra.mxu0 0.0
        %916 = vmatprep.subr.mxu0 0.0
        %917 = vmatpush1.msra.mxu0 0.0
        %918 = vmatprep.subr.mxu0 0.0
        %919 = vmatpush1.msra.mxu0 0.0
        %920 = vmatprep.subr.mxu0 0.0
        %921 = vmatpush1.msra.mxu0 0.0
        %922 = vmatprep.subr.mxu0 0.0
        %923 = vmatpush1.msra.mxu0 0.0
        %924 = vmatprep.subr.mxu0 0.0
        %925 = vmatpush1.msra.mxu0 0.0
        %926 = vmatprep.mubr.f32.mxu0 0.0
        %927 = vmatmul.mubr.f32.gmra.mrb[0].mxu0 %v860
        %v928 = vpop.f32.mrb[0].mxu0
        %v929 = vadd.f32 0.0, %v928
        %v930 = vpop.f32.mrb[0].mxu0
        %931 = vdwg.mxu0
        %v933 = vsel %vm525, %v684, 0
        %935 = vmatprep.subr.mxu0 0.0
        %936 = vmatpush1.msra.mxu0 %v687
        %937 = vmatprep.subr.mxu0 0.0
        %938 = vmatpush1.msra.mxu0 %v688
        %939 = vmatprep.subr.mxu0 0.0
        %940 = vmatpush1.msra.mxu0 0.0
        %941 = vmatprep.subr.mxu0 0.0
        %942 = vmatpush1.msra.mxu0 0.0
        %943 = vmatprep.subr.mxu0 0.0
        %944 = vmatpush1.msra.mxu0 0.0
        %945 = vmatprep.subr.mxu0 0.0
        %946 = vmatpush1.msra.mxu0 0.0
        %947 = vmatprep.subr.mxu0 0.0
        %948 = vmatpush1.msra.mxu0 0.0
        %949 = vmatprep.subr.mxu0 0.0
        %950 = vmatpush1.msra.mxu0 0.0
        %951 = vmatprep.subr.mxu0 0.0
        %952 = vmatpush1.msra.mxu0 0.0
        %953 = vmatprep.subr.mxu0 0.0
        %954 = vmatpush1.msra.mxu0 0.0
        %955 = vmatprep.subr.mxu0 0.0
        %956 = vmatpush1.msra.mxu0 0.0
        %957 = vmatprep.subr.mxu0 0.0
        %958 = vmatpush1.msra.mxu0 0.0
        %959 = vmatprep.subr.mxu0 0.0
        %960 = vmatpush1.msra.mxu0 0.0
        %961 = vmatprep.subr.mxu0 0.0
        %962 = vmatpush1.msra.mxu0 0.0
        %963 = vmatprep.subr.mxu0 0.0
        %964 = vmatpush1.msra.mxu0 0.0
        %965 = vmatprep.subr.mxu0 0.0
        %966 = vmatpush1.msra.mxu0 0.0
        %967 = vmatprep.subr.mxu0 0.0
        %968 = vmatpush1.msra.mxu0 0.0
        %969 = vmatprep.subr.mxu0 0.0
        %970 = vmatpush1.msra.mxu0 0.0
        %971 = vmatprep.subr.mxu0 0.0
        %972 = vmatpush1.msra.mxu0 0.0
        %973 = vmatprep.subr.mxu0 0.0
        %974 = vmatpush1.msra.mxu0 0.0
        %975 = vmatprep.subr.mxu0 0.0
        %976 = vmatpush1.msra.mxu0 0.0
        %977 = vmatprep.subr.mxu0 0.0
        %978 = vmatpush1.msra.mxu0 0.0
        %979 = vmatprep.subr.mxu0 0.0
        %980 = vmatpush1.msra.mxu0 0.0
        %981 = vmatprep.subr.mxu0 0.0
        %982 = vmatpush1.msra.mxu0 0.0
        %983 = vmatprep.subr.mxu0 0.0
        %984 = vmatpush1.msra.mxu0 0.0
        %985 = vmatprep.subr.mxu0 0.0
        %986 = vmatpush1.msra.mxu0 0.0
        %987 = vmatprep.subr.mxu0 0.0
        %988 = vmatpush1.msra.mxu0 0.0
        %989 = vmatprep.subr.mxu0 0.0
        %990 = vmatpush1.msra.mxu0 0.0
        %991 = vmatprep.subr.mxu0 0.0
        %992 = vmatpush1.msra.mxu0 0.0
        %993 = vmatprep.subr.mxu0 0.0
        %994 = vmatpush1.msra.mxu0 0.0
        %995 = vmatprep.subr.mxu0 0.0
        %996 = vmatpush1.msra.mxu0 0.0
        %997 = vmatprep.subr.mxu0 0.0
        %998 = vmatpush1.msra.mxu0 0.0
        %999 = vmatprep.mubr.f32.mxu0 0.0
        %1000 = vmatmul.mubr.f32.gmra.mrb[0].mxu0 %v933
        %v1001 = vpop.f32.mrb[0].mxu0
        %v1002 = vadd.f32 %v929, %v1001
        %v1003 = vpop.f32.mrb[0].mxu0
        %1004 = vdwg.mxu0
        %1005 = vrot.lane.b32.xlu0 %v518, 96
        %v1006 = vpop.permute.xlu0 %1005
        %1007 = vrot.lane.b32.xlu0 %v518, 32
        %v1008 = vpop.permute.xlu0 %1007
        %v1009 = vsel %vm525, %v1006, 0
        %v1011 = vsel %vm525, %v1008, 0
        %1013 = vmatprep.subr.mxu0 0.0
        %1014 = vmatpush1.xpose.msra.mxu0 %v1011
        %1015 = vmatprep.subr.mxu0 0.0
        %1016 = vmatpush1.xpose.msra.mxu0 0.0
        %1017 = vmatprep.subr.mxu0 0.0
        %1018 = vmatpush1.xpose.msra.mxu0 0.0
        %1019 = vmatprep.subr.mxu0 0.0
        %1020 = vmatpush1.xpose.msra.mxu0 0.0
        %1021 = vmatprep.subr.mxu0 0.0
        %1022 = vmatpush1.xpose.msra.mxu0 0.0
        %1023 = vmatprep.subr.mxu0 0.0
        %1024 = vmatpush1.xpose.msra.mxu0 0.0
        %1025 = vmatprep.subr.mxu0 0.0
        %1026 = vmatpush1.xpose.msra.mxu0 0.0
        %1027 = vmatprep.subr.mxu0 0.0
        %1028 = vmatpush1.xpose.msra.mxu0 0.0
        %1029 = vmatprep.subr.mxu0 0.0
        %1030 = vmatpush1.xpose.msra.mxu0 0.0
        %1031 = vmatprep.subr.mxu0 0.0
        %1032 = vmatpush1.xpose.msra.mxu0 0.0
        %1033 = vmatprep.subr.mxu0 0.0
        %1034 = vmatpush1.xpose.msra.mxu0 0.0
        %1035 = vmatprep.subr.mxu0 0.0
        %1036 = vmatpush1.xpose.msra.mxu0 0.0
        %1037 = vmatprep.subr.mxu0 0.0
        %1038 = vmatpush1.xpose.msra.mxu0 0.0
        %1039 = vmatprep.subr.mxu0 0.0
        %1040 = vmatpush1.xpose.msra.mxu0 0.0
        %1041 = vmatprep.subr.mxu0 0.0
        %1042 = vmatpush1.xpose.msra.mxu0 0.0
        %1043 = vmatprep.subr.mxu0 0.0
        %1044 = vmatpush1.xpose.msra.mxu0 0.0
        %1045 = vmatprep.subr.mxu0 0.0
        %1046 = vmatpush1.xpose.msra.mxu0 0.0
        %1047 = vmatprep.subr.mxu0 0.0
        %1048 = vmatpush1.xpose.msra.mxu0 0.0
        %1049 = vmatprep.subr.mxu0 0.0
        %1050 = vmatpush1.xpose.msra.mxu0 0.0
        %1051 = vmatprep.subr.mxu0 0.0
        %1052 = vmatpush1.xpose.msra.mxu0 0.0
        %1053 = vmatprep.subr.mxu0 0.0
        %1054 = vmatpush1.xpose.msra.mxu0 0.0
        %1055 = vmatprep.subr.mxu0 0.0
        %1056 = vmatpush1.xpose.msra.mxu0 0.0
        %1057 = vmatprep.subr.mxu0 0.0
        %1058 = vmatpush1.xpose.msra.mxu0 0.0
        %1059 = vmatprep.subr.mxu0 0.0
        %1060 = vmatpush1.xpose.msra.mxu0 0.0
        %1061 = vmatprep.subr.mxu0 0.0
        %1062 = vmatpush1.xpose.msra.mxu0 0.0
        %1063 = vmatprep.subr.mxu0 0.0
        %1064 = vmatpush1.xpose.msra.mxu0 0.0
        %1065 = vmatprep.subr.mxu0 0.0
        %1066 = vmatpush1.xpose.msra.mxu0 0.0
        %1067 = vmatprep.subr.mxu0 0.0
        %1068 = vmatpush1.xpose.msra.mxu0 0.0
        %1069 = vmatprep.subr.mxu0 0.0
        %1070 = vmatpush1.xpose.msra.mxu0 0.0
        %1071 = vmatprep.subr.mxu0 0.0
        %1072 = vmatpush1.xpose.msra.mxu0 0.0
        %1073 = vmatprep.subr.mxu0 0.0
        %1074 = vmatpush1.xpose.msra.mxu0 0.0
        %1075 = vmatprep.subr.mxu0 0.0
        %1076 = vmatpush1.xpose.msra.mxu0 0.0
        %1077 = vmatprep.mubr.f32.mxu0 0.0
        %1078 = vmatmul.mubr.f32.gmra.mrb[0].mxu0 %v1009
        %v1079 = vpop.f32.mrb[0].mxu0
        %v1080 = vadd.f32 0.0, %v1079
        %v1081 = vpop.f32.mrb[0].mxu0
        %1082 = vdwg.mxu0
        %v1083 = vmul.f32 %v1080, 0.25
        %v1084 = vsel %vm393, %v1083, -1e+30
        %v1085 = vsel %vm602, %v1084, -inf
        %1086 = vmax.xlane.f32.xlu0 %v1085
        %v1087 = vpop.xlane.xlu0 %1086
        %v1088 = vsub.f32 %v1084, %v1087
        %v1089 = vmul.f32 %v1088, 1.442695
        %v1090 = vpow.pop %v1089
        %v1091 = vsel %vm602, %v1090, 0.0
        %1092 = vadd.xlane.f32.xlu0 %v1091
        %v1093 = vpop.xlane.xlu0 %1092
        %v1094 = vrcp.pop %v1093
        %v1095 = vmul.f32 %v1090, %v1094
        %1096 = vrot.lane.b32.xlu0 %v520, 96
        %v1097 = vpop.permute.xlu0 %1096
        %v1100 = vsel %vm602, %v1095, 0
        %1102 = vmatprep.subr.mxu0 0.0
        %1103 = vmatpush1.msra.mxu0 %v1097
        %1104 = vmatprep.subr.mxu0 0.0
        %1105 = vmatpush1.msra.mxu0 0.0
        %1106 = vmatprep.subr.mxu0 0.0
        %1107 = vmatpush1.msra.mxu0 0.0
        %1108 = vmatprep.subr.mxu0 0.0
        %1109 = vmatpush1.msra.mxu0 0.0
        %1110 = vmatprep.subr.mxu0 0.0
        %1111 = vmatpush1.msra.mxu0 0.0
        %1112 = vmatprep.subr.mxu0 0.0
        %1113 = vmatpush1.msra.mxu0 0.0
        %1114 = vmatprep.subr.mxu0 0.0
        %1115 = vmatpush1.msra.mxu0 0.0
        %1116 = vmatprep.subr.mxu0 0.0
        %1117 = vmatpush1.msra.mxu0 0.0
        %1118 = vmatprep.subr.mxu0 0.0
        %1119 = vmatpush1.msra.mxu0 0.0
        %1120 = vmatprep.subr.mxu0 0.0
        %1121 = vmatpush1.msra.mxu0 0.0
        %1122 = vmatprep.subr.mxu0 0.0
        %1123 = vmatpush1.msra.mxu0 0.0
        %1124 = vmatprep.subr.mxu0 0.0
        %1125 = vmatpush1.msra.mxu0 0.0
        %1126 = vmatprep.subr.mxu0 0.0
        %1127 = vmatpush1.msra.mxu0 0.0
        %1128 = vmatprep.subr.mxu0 0.0
        %1129 = vmatpush1.msra.mxu0 0.0
        %1130 = vmatprep.subr.mxu0 0.0
        %1131 = vmatpush1.msra.mxu0 0.0
        %1132 = vmatprep.subr.mxu0 0.0
        %1133 = vmatpush1.msra.mxu0 0.0
        %1134 = vmatprep.subr.mxu0 0.0
        %1135 = vmatpush1.msra.mxu0 0.0
        %1136 = vmatprep.subr.mxu0 0.0
        %1137 = vmatpush1.msra.mxu0 0.0
        %1138 = vmatprep.subr.mxu0 0.0
        %1139 = vmatpush1.msra.mxu0 0.0
        %1140 = vmatprep.subr.mxu0 0.0
        %1141 = vmatpush1.msra.mxu0 0.0
        %1142 = vmatprep.subr.mxu0 0.0
        %1143 = vmatpush1.msra.mxu0 0.0
        %1144 = vmatprep.subr.mxu0 0.0
        %1145 = vmatpush1.msra.mxu0 0.0
        %1146 = vmatprep.subr.mxu0 0.0
        %1147 = vmatpush1.msra.mxu0 0.0
        %1148 = vmatprep.subr.mxu0 0.0
        %1149 = vmatpush1.msra.mxu0 0.0
        %1150 = vmatprep.subr.mxu0 0.0
        %1151 = vmatpush1.msra.mxu0 0.0
        %1152 = vmatprep.subr.mxu0 0.0
        %1153 = vmatpush1.msra.mxu0 0.0
        %1154 = vmatprep.subr.mxu0 0.0
        %1155 = vmatpush1.msra.mxu0 0.0
        %1156 = vmatprep.subr.mxu0 0.0
        %1157 = vmatpush1.msra.mxu0 0.0
        %1158 = vmatprep.subr.mxu0 0.0
        %1159 = vmatpush1.msra.mxu0 0.0
        %1160 = vmatprep.subr.mxu0 0.0
        %1161 = vmatpush1.msra.mxu0 0.0
        %1162 = vmatprep.subr.mxu0 0.0
        %1163 = vmatpush1.msra.mxu0 0.0
        %1164 = vmatprep.subr.mxu0 0.0
        %1165 = vmatpush1.msra.mxu0 0.0
        %1166 = vmatprep.mubr.f32.mxu0 0.0
        %1167 = vmatmul.mubr.f32.gmra.mrb[0].mxu0 %v1100
        %v1168 = vpop.f32.mrb[0].mxu0
        %v1169 = vadd.f32 0.0, %v1168
        %v1170 = vpop.f32.mrb[0].mxu0
        %1171 = vdwg.mxu0
        %v1172 = vld [vmem:[%s7 + $0x20] sm:$0xff]
        %v1173 = vld [vmem:[%s7 + $0x28] sm:$0xff]
        %v1175 = vsel %vm525, %v1169, 0
        %1177 = vmatprep.subr.mxu0 0.0
        %1178 = vmatpush1.msra.mxu0 %v1172
        %1179 = vmatprep.subr.mxu0 0.0
        %1180 = vmatpush1.msra.mxu0 %v1173
        %1181 = vmatprep.subr.mxu0 0.0
        %1182 = vmatpush1.msra.mxu0 0.0
        %1183 = vmatprep.subr.mxu0 0.0
        %1184 = vmatpush1.msra.mxu0 0.0
        %1185 = vmatprep.subr.mxu0 0.0
        %1186 = vmatpush1.msra.mxu0 0.0
        %1187 = vmatprep.subr.mxu0 0.0
        %1188 = vmatpush1.msra.mxu0 0.0
        %1189 = vmatprep.subr.mxu0 0.0
        %1190 = vmatpush1.msra.mxu0 0.0
        %1191 = vmatprep.subr.mxu0 0.0
        %1192 = vmatpush1.msra.mxu0 0.0
        %1193 = vmatprep.subr.mxu0 0.0
        %1194 = vmatpush1.msra.mxu0 0.0
        %1195 = vmatprep.subr.mxu0 0.0
        %1196 = vmatpush1.msra.mxu0 0.0
        %1197 = vmatprep.subr.mxu0 0.0
        %1198 = vmatpush1.msra.mxu0 0.0
        %1199 = vmatprep.subr.mxu0 0.0
        %1200 = vmatpush1.msra.mxu0 0.0
        %1201 = vmatprep.subr.mxu0 0.0
        %1202 = vmatpush1.msra.mxu0 0.0
        %1203 = vmatprep.subr.mxu0 0.0
        %1204 = vmatpush1.msra.mxu0 0.0
        %1205 = vmatprep.subr.mxu0 0.0
        %1206 = vmatpush1.msra.mxu0 0.0
        %1207 = vmatprep.subr.mxu0 0.0
        %1208 = vmatpush1.msra.mxu0 0.0
        %1209 = vmatprep.subr.mxu0 0.0
        %1210 = vmatpush1.msra.mxu0 0.0
        %1211 = vmatprep.subr.mxu0 0.0
        %1212 = vmatpush1.msra.mxu0 0.0
        %1213 = vmatprep.subr.mxu0 0.0
        %1214 = vmatpush1.msra.mxu0 0.0
        %1215 = vmatprep.subr.mxu0 0.0
        %1216 = vmatpush1.msra.mxu0 0.0
        %1217 = vmatprep.subr.mxu0 0.0
        %1218 = vmatpush1.msra.mxu0 0.0
        %1219 = vmatprep.subr.mxu0 0.0
        %1220 = vmatpush1.msra.mxu0 0.0
        %1221 = vmatprep.subr.mxu0 0.0
        %1222 = vmatpush1.msra.mxu0 0.0
        %1223 = vmatprep.subr.mxu0 0.0
        %1224 = vmatpush1.msra.mxu0 0.0
        %1225 = vmatprep.subr.mxu0 0.0
        %1226 = vmatpush1.msra.mxu0 0.0
        %1227 = vmatprep.subr.mxu0 0.0
        %1228 = vmatpush1.msra.mxu0 0.0
        %1229 = vmatprep.subr.mxu0 0.0
        %1230 = vmatpush1.msra.mxu0 0.0
        %1231 = vmatprep.subr.mxu0 0.0
        %1232 = vmatpush1.msra.mxu0 0.0
        %1233 = vmatprep.subr.mxu0 0.0
        %1234 = vmatpush1.msra.mxu0 0.0
        %1235 = vmatprep.subr.mxu0 0.0
        %1236 = vmatpush1.msra.mxu0 0.0
        %1237 = vmatprep.subr.mxu0 0.0
        %1238 = vmatpush1.msra.mxu0 0.0
        %1239 = vmatprep.subr.mxu0 0.0
        %1240 = vmatpush1.msra.mxu0 0.0
        %1241 = vmatprep.mubr.f32.mxu0 0.0
        %1242 = vmatmul.mubr.f32.gmra.mrb[0].mxu0 %v1175
        %v1243 = vpop.f32.mrb[0].mxu0
        %v1244 = vadd.f32 0.0, %v1243
        %v1245 = vpop.f32.mrb[0].mxu0
        %1246 = vdwg.mxu0
        %v1247 = vadd.f32 %v1002, %v1244
        %1248 = vrot.lane.b32.xlu0 %v518, 80
        %v1249 = vpop.permute.xlu0 %1248
        %1250 = vrot.lane.b32.xlu0 %v518, 16
        %v1251 = vpop.permute.xlu0 %1250
        %v1252 = vsel %vm525, %v1249, 0
        %v1254 = vsel %vm525, %v1251, 0
        %1256 = vmatprep.subr.mxu0 0.0
        %1257 = vmatpush1.xpose.msra.mxu0 %v1254
        %1258 = vmatprep.subr.mxu0 0.0
        %1259 = vmatpush1.xpose.msra.mxu0 0.0
        %1260 = vmatprep.subr.mxu0 0.0
        %1261 = vmatpush1.xpose.msra.mxu0 0.0
        %1262 = vmatprep.subr.mxu0 0.0
        %1263 = vmatpush1.xpose.msra.mxu0 0.0
        %1264 = vmatprep.subr.mxu0 0.0
        %1265 = vmatpush1.xpose.msra.mxu0 0.0
        %1266 = vmatprep.subr.mxu0 0.0
        %1267 = vmatpush1.xpose.msra.mxu0 0.0
        %1268 = vmatprep.subr.mxu0 0.0
        %1269 = vmatpush1.xpose.msra.mxu0 0.0
        %1270 = vmatprep.subr.mxu0 0.0
        %1271 = vmatpush1.xpose.msra.mxu0 0.0
        %1272 = vmatprep.subr.mxu0 0.0
        %1273 = vmatpush1.xpose.msra.mxu0 0.0
        %1274 = vmatprep.subr.mxu0 0.0
        %1275 = vmatpush1.xpose.msra.mxu0 0.0
        %1276 = vmatprep.subr.mxu0 0.0
        %1277 = vmatpush1.xpose.msra.mxu0 0.0
        %1278 = vmatprep.subr.mxu0 0.0
        %1279 = vmatpush1.xpose.msra.mxu0 0.0
        %1280 = vmatprep.subr.mxu0 0.0
        %1281 = vmatpush1.xpose.msra.mxu0 0.0
        %1282 = vmatprep.subr.mxu0 0.0
        %1283 = vmatpush1.xpose.msra.mxu0 0.0
        %1284 = vmatprep.subr.mxu0 0.0
        %1285 = vmatpush1.xpose.msra.mxu0 0.0
        %1286 = vmatprep.subr.mxu0 0.0
        %1287 = vmatpush1.xpose.msra.mxu0 0.0
        %1288 = vmatprep.subr.mxu0 0.0
        %1289 = vmatpush1.xpose.msra.mxu0 0.0
        %1290 = vmatprep.subr.mxu0 0.0
        %1291 = vmatpush1.xpose.msra.mxu0 0.0
        %1292 = vmatprep.subr.mxu0 0.0
        %1293 = vmatpush1.xpose.msra.mxu0 0.0
        %1294 = vmatprep.subr.mxu0 0.0
        %1295 = vmatpush1.xpose.msra.mxu0 0.0
        %1296 = vmatprep.subr.mxu0 0.0
        %1297 = vmatpush1.xpose.msra.mxu0 0.0
        %1298 = vmatprep.subr.mxu0 0.0
        %1299 = vmatpush1.xpose.msra.mxu0 0.0
        %1300 = vmatprep.subr.mxu0 0.0
        %1301 = vmatpush1.xpose.msra.mxu0 0.0
        %1302 = vmatprep.subr.mxu0 0.0
        %1303 = vmatpush1.xpose.msra.mxu0 0.0
        %1304 = vmatprep.subr.mxu0 0.0
        %1305 = vmatpush1.xpose.msra.mxu0 0.0
        %1306 = vmatprep.subr.mxu0 0.0
        %1307 = vmatpush1.xpose.msra.mxu0 0.0
        %1308 = vmatprep.subr.mxu0 0.0
        %1309 = vmatpush1.xpose.msra.mxu0 0.0
        %1310 = vmatprep.subr.mxu0 0.0
        %1311 = vmatpush1.xpose.msra.mxu0 0.0
        %1312 = vmatprep.subr.mxu0 0.0
        %1313 = vmatpush1.xpose.msra.mxu0 0.0
        %1314 = vmatprep.subr.mxu0 0.0
        %1315 = vmatpush1.xpose.msra.mxu0 0.0
        %1316 = vmatprep.subr.mxu0 0.0
        %1317 = vmatpush1.xpose.msra.mxu0 0.0
        %1318 = vmatprep.subr.mxu0 0.0
        %1319 = vmatpush1.xpose.msra.mxu0 0.0
        %1320 = vmatprep.mubr.f32.mxu0 0.0
        %1321 = vmatmul.mubr.f32.gmra.mrb[0].mxu0 %v1252
        %v1322 = vpop.f32.mrb[0].mxu0
        %v1323 = vadd.f32 0.0, %v1322
        %v1324 = vpop.f32.mrb[0].mxu0
        %1325 = vdwg.mxu0
        %v1326 = vmul.f32 %v1323, 0.25
        %v1327 = vsel %vm393, %v1326, -1e+30
        %v1328 = vsel %vm602, %v1327, -inf
        %1329 = vmax.xlane.f32.xlu0 %v1328
        %v1330 = vpop.xlane.xlu0 %1329
        %v1331 = vsub.f32 %v1327, %v1330
        %v1332 = vmul.f32 %v1331, 1.442695
        %v1333 = vpow.pop %v1332
        %v1334 = vsel %vm602, %v1333, 0.0
        %1335 = vadd.xlane.f32.xlu0 %v1334
        %v1336 = vpop.xlane.xlu0 %1335
        %v1337 = vrcp.pop %v1336
        %v1338 = vmul.f32 %v1333, %v1337
        %1339 = vrot.lane.b32.xlu0 %v520, 80
        %v1340 = vpop.permute.xlu0 %1339
        %v1343 = vsel %vm602, %v1338, 0
        %1345 = vmatprep.subr.mxu0 0.0
        %1346 = vmatpush1.msra.mxu0 %v1340
        %1347 = vmatprep.subr.mxu0 0.0
        %1348 = vmatpush1.msra.mxu0 0.0
        %1349 = vmatprep.subr.mxu0 0.0
        %1350 = vmatpush1.msra.mxu0 0.0
        %1351 = vmatprep.subr.mxu0 0.0
        %1352 = vmatpush1.msra.mxu0 0.0
        %1353 = vmatprep.subr.mxu0 0.0
        %1354 = vmatpush1.msra.mxu0 0.0
        %1355 = vmatprep.subr.mxu0 0.0
        %1356 = vmatpush1.msra.mxu0 0.0
        %1357 = vmatprep.subr.mxu0 0.0
        %1358 = vmatpush1.msra.mxu0 0.0
        %1359 = vmatprep.subr.mxu0 0.0
        %1360 = vmatpush1.msra.mxu0 0.0
        %1361 = vmatprep.subr.mxu0 0.0
        %1362 = vmatpush1.msra.mxu0 0.0
        %1363 = vmatprep.subr.mxu0 0.0
        %1364 = vmatpush1.msra.mxu0 0.0
        %1365 = vmatprep.subr.mxu0 0.0
        %1366 = vmatpush1.msra.mxu0 0.0
        %1367 = vmatprep.subr.mxu0 0.0
        %1368 = vmatpush1.msra.mxu0 0.0
        %1369 = vmatprep.subr.mxu0 0.0
        %1370 = vmatpush1.msra.mxu0 0.0
        %1371 = vmatprep.subr.mxu0 0.0
        %1372 = vmatpush1.msra.mxu0 0.0
        %1373 = vmatprep.subr.mxu0 0.0
        %1374 = vmatpush1.msra.mxu0 0.0
        %1375 = vmatprep.subr.mxu0 0.0
        %1376 = vmatpush1.msra.mxu0 0.0
        %1377 = vmatprep.subr.mxu0 0.0
        %1378 = vmatpush1.msra.mxu0 0.0
        %1379 = vmatprep.subr.mxu0 0.0
        %1380 = vmatpush1.msra.mxu0 0.0
        %1381 = vmatprep.subr.mxu0 0.0
        %1382 = vmatpush1.msra.mxu0 0.0
        %1383 = vmatprep.subr.mxu0 0.0
        %1384 = vmatpush1.msra.mxu0 0.0
        %1385 = vmatprep.subr.mxu0 0.0
        %1386 = vmatpush1.msra.mxu0 0.0
        %1387 = vmatprep.subr.mxu0 0.0
        %1388 = vmatpush1.msra.mxu0 0.0
        %1389 = vmatprep.subr.mxu0 0.0
        %1390 = vmatpush1.msra.mxu0 0.0
        %1391 = vmatprep.subr.mxu0 0.0
        %1392 = vmatpush1.msra.mxu0 0.0
        %1393 = vmatprep.subr.mxu0 0.0
        %1394 = vmatpush1.msra.mxu0 0.0
        %1395 = vmatprep.subr.mxu0 0.0
        %1396 = vmatpush1.msra.mxu0 0.0
        %1397 = vmatprep.subr.mxu0 0.0
        %1398 = vmatpush1.msra.mxu0 0.0
        %1399 = vmatprep.subr.mxu0 0.0
        %1400 = vmatpush1.msra.mxu0 0.0
        %1401 = vmatprep.subr.mxu0 0.0
        %1402 = vmatpush1.msra.mxu0 0.0
        %1403 = vmatprep.subr.mxu0 0.0
        %1404 = vmatpush1.msra.mxu0 0.0
        %1405 = vmatprep.subr.mxu0 0.0
        %1406 = vmatpush1.msra.mxu0 0.0
        %1407 = vmatprep.subr.mxu0 0.0
        %1408 = vmatpush1.msra.mxu0 0.0
        %1409 = vmatprep.mubr.f32.mxu0 0.0
        %1410 = vmatmul.mubr.f32.gmra.mrb[0].mxu0 %v1343
        %v1411 = vpop.f32.mrb[0].mxu0
        %v1412 = vadd.f32 0.0, %v1411
        %v1413 = vpop.f32.mrb[0].mxu0
        %1414 = vdwg.mxu0
        %v1415 = vld [vmem:[%s7 + $0x30] sm:$0xff]
        %v1416 = vld [vmem:[%s7 + $0x38] sm:$0xff]
        %v1418 = vsel %vm525, %v1412, 0
        %1420 = vmatprep.subr.mxu0 0.0
        %1421 = vmatpush1.msra.mxu0 %v1415
        %1422 = vmatprep.subr.mxu0 0.0
        %1423 = vmatpush1.msra.mxu0 %v1416
        %1424 = vmatprep.subr.mxu0 0.0
        %1425 = vmatpush1.msra.mxu0 0.0
        %1426 = vmatprep.subr.mxu0 0.0
        %1427 = vmatpush1.msra.mxu0 0.0
        %1428 = vmatprep.subr.mxu0 0.0
        %1429 = vmatpush1.msra.mxu0 0.0
        %1430 = vmatprep.subr.mxu0 0.0
        %1431 = vmatpush1.msra.mxu0 0.0
        %1432 = vmatprep.subr.mxu0 0.0
        %1433 = vmatpush1.msra.mxu0 0.0
        %1434 = vmatprep.subr.mxu0 0.0
        %1435 = vmatpush1.msra.mxu0 0.0
        %1436 = vmatprep.subr.mxu0 0.0
        %1437 = vmatpush1.msra.mxu0 0.0
        %1438 = vmatprep.subr.mxu0 0.0
        %1439 = vmatpush1.msra.mxu0 0.0
        %1440 = vmatprep.subr.mxu0 0.0
        %1441 = vmatpush1.msra.mxu0 0.0
        %1442 = vmatprep.subr.mxu0 0.0
        %1443 = vmatpush1.msra.mxu0 0.0
        %1444 = vmatprep.subr.mxu0 0.0
        %1445 = vmatpush1.msra.mxu0 0.0
        %1446 = vmatprep.subr.mxu0 0.0
        %1447 = vmatpush1.msra.mxu0 0.0
        %1448 = vmatprep.subr.mxu0 0.0
        %1449 = vmatpush1.msra.mxu0 0.0
        %1450 = vmatprep.subr.mxu0 0.0
        %1451 = vmatpush1.msra.mxu0 0.0
        %1452 = vmatprep.subr.mxu0 0.0
        %1453 = vmatpush1.msra.mxu0 0.0
        %1454 = vmatprep.subr.mxu0 0.0
        %1455 = vmatpush1.msra.mxu0 0.0
        %1456 = vmatprep.subr.mxu0 0.0
        %1457 = vmatpush1.msra.mxu0 0.0
        %1458 = vmatprep.subr.mxu0 0.0
        %1459 = vmatpush1.msra.mxu0 0.0
        %1460 = vmatprep.subr.mxu0 0.0
        %1461 = vmatpush1.msra.mxu0 0.0
        %1462 = vmatprep.subr.mxu0 0.0
        %1463 = vmatpush1.msra.mxu0 0.0
        %1464 = vmatprep.subr.mxu0 0.0
        %1465 = vmatpush1.msra.mxu0 0.0
        %1466 = vmatprep.subr.mxu0 0.0
        %1467 = vmatpush1.msra.mxu0 0.0
        %1468 = vmatprep.subr.mxu0 0.0
        %1469 = vmatpush1.msra.mxu0 0.0
        %1470 = vmatprep.subr.mxu0 0.0
        %1471 = vmatpush1.msra.mxu0 0.0
        %1472 = vmatprep.subr.mxu0 0.0
        %1473 = vmatpush1.msra.mxu0 0.0
        %1474 = vmatprep.subr.mxu0 0.0
        %1475 = vmatpush1.msra.mxu0 0.0
        %1476 = vmatprep.subr.mxu0 0.0
        %1477 = vmatpush1.msra.mxu0 0.0
        %1478 = vmatprep.subr.mxu0 0.0
        %1479 = vmatpush1.msra.mxu0 0.0
        %1480 = vmatprep.subr.mxu0 0.0
        %1481 = vmatpush1.msra.mxu0 0.0
        %1482 = vmatprep.subr.mxu0 0.0
        %1483 = vmatpush1.msra.mxu0 0.0
        %1484 = vmatprep.mubr.f32.mxu0 0.0
        %1485 = vmatmul.mubr.f32.gmra.mrb[0].mxu0 %v1418
        %v1486 = vpop.f32.mrb[0].mxu0
        %v1487 = vadd.f32 0.0, %v1486
        %v1488 = vpop.f32.mrb[0].mxu0
        %1489 = vdwg.mxu0
        %v1490 = vadd.f32 %v1247, %v1487
        %v1491 = vlaneseq
        %v1492 = vshrl.u32 %v1491, 7
        %v1493 = vsub.s32 4, %v1492
        %v1494 = vrot.slane %v394, %v1493
        %v1495 = vadd.f32 %v1490, %v1494
        %v1496 = vadd.f32 %v388, %v1495
        %v1497 = vsel %vm395, %v1496, 0.0
        %1498 = vadd.xlane.f32.xlu0 %v1497
        %v1499 = vpop.xlane.xlu0 %1498
        %v1500 = vmul.f32 %v1499, %v399
        %v1501 = vsub.f32 %v1496, %v1500
        %v1502 = vmul.f32 %v1501, %v1501
        %v1503 = vsel %vm395, %v1502, 0.0
        %1504 = vadd.xlane.f32.xlu0 %v1503
        %v1505 = vpop.xlane.xlu0 %1504
        %v1506 = vmul.f32 %v1505, %v399
        %v1507 = vadd.f32 %v1506, 1e-05
        %v1508 = vrsqrt.pop %v1507
        %v1509 = vmul.f32 %v1501, %v1508
        %v1510 = vlaneseq
        %v1511 = vshrl.u32 %v1510, 7
        %v1512 = vsub.s32 2, %v1511
        %v1513 = vrot.slane %v394, %v1512
        %v1514 = vmul.f32 %v1509, %v1513
        %v1515 = vlaneseq
        %v1516 = vshrl.u32 %v1515, 7
        %v1517 = vsub.s32 3, %v1516
        %v1518 = vrot.slane %v394, %v1517
        %v1519 = vadd.f32 %v1514, %v1518
        %v1520 = vld [vmem:[%s8] sm:$0xff]
        %v1521 = vld [vmem:[%s8 + $0x8] sm:$0xff]
        %v1522 = vld [vmem:[%s8 + $0x10] sm:$0xff]
        %v1523 = vld [vmem:[%s8 + $0x18] sm:$0xff]
        %v1524 = vld [vmem:[%s8 + $0x20] sm:$0xff]
        %v1525 = vld [vmem:[%s8 + $0x28] sm:$0xff]
        %v1526 = vld [vmem:[%s8 + $0x30] sm:$0xff]
        %v1527 = vld [vmem:[%s8 + $0x38] sm:$0xff]
        %v1528 = vld [vmem:[%s8 + $0x40] sm:$0xff]
        %v1529 = vld [vmem:[%s8 + $0x48] sm:$0xff]
        %v1530 = vld [vmem:[%s8 + $0x50] sm:$0xff]
        %v1531 = vld [vmem:[%s8 + $0x58] sm:$0xff]
        %v1532 = vld [vmem:[%s8 + $0x60] sm:$0xff]
        %v1533 = vld [vmem:[%s8 + $0x68] sm:$0xff]
        %v1534 = vld [vmem:[%s8 + $0x70] sm:$0xff]
        %v1535 = vld [vmem:[%s8 + $0x78] sm:$0xff]
        %v1536 = vld [vmem:[%s9] sm:$0x3]
        %v1538 = vlaneseq
        %v1539 = vshrl.u32 %v1538, 7
        %v1540 = vsub.s32 0, %v1539
        %v1541 = vrot.slane %v1536, %v1540
        %v1542 = vlaneseq
        %v1543 = vshrl.u32 %v1542, 7
        %v1544 = vsub.s32 1, %v1543
        %v1545 = vrot.slane %v1536, %v1544
        %v1549 = vsel %vm395, %v1519, 0
        %1551 = vmatprep.subr.mxu0 %v1521
        %1552 = vmatpush1.msra.mxu0 %v1520
        %1553 = vmatprep.subr.mxu0 %v1523
        %1554 = vmatpush1.msra.mxu0 %v1522
        %1555 = vmatprep.subr.mxu0 %v1525
        %1556 = vmatpush1.msra.mxu0 %v1524
        %1557 = vmatprep.subr.mxu0 %v1527
        %1558 = vmatpush1.msra.mxu0 %v1526
        %1559 = vmatprep.subr.mxu0 %v1529
        %1560 = vmatpush1.msra.mxu0 %v1528
        %1561 = vmatprep.subr.mxu0 %v1531
        %1562 = vmatpush1.msra.mxu0 %v1530
        %1563 = vmatprep.subr.mxu0 %v1533
        %1564 = vmatpush1.msra.mxu0 %v1532
        %1565 = vmatprep.subr.mxu0 %v1535
        %1566 = vmatpush1.msra.mxu0 %v1534
        %1567 = vmatprep.subr.mxu0 0.0
        %1568 = vmatpush1.msra.mxu0 0.0
        %1569 = vmatprep.subr.mxu0 0.0
        %1570 = vmatpush1.msra.mxu0 0.0
        %1571 = vmatprep.subr.mxu0 0.0
        %1572 = vmatpush1.msra.mxu0 0.0
        %1573 = vmatprep.subr.mxu0 0.0
        %1574 = vmatpush1.msra.mxu0 0.0
        %1575 = vmatprep.subr.mxu0 0.0
        %1576 = vmatpush1.msra.mxu0 0.0
        %1577 = vmatprep.subr.mxu0 0.0
        %1578 = vmatpush1.msra.mxu0 0.0
        %1579 = vmatprep.subr.mxu0 0.0
        %1580 = vmatpush1.msra.mxu0 0.0
        %1581 = vmatprep.subr.mxu0 0.0
        %1582 = vmatpush1.msra.mxu0 0.0
        %1583 = vmatprep.subr.mxu0 0.0
        %1584 = vmatpush1.msra.mxu0 0.0
        %1585 = vmatprep.subr.mxu0 0.0
        %1586 = vmatpush1.msra.mxu0 0.0
        %1587 = vmatprep.subr.mxu0 0.0
        %1588 = vmatpush1.msra.mxu0 0.0
        %1589 = vmatprep.subr.mxu0 0.0
        %1590 = vmatpush1.msra.mxu0 0.0
        %1591 = vmatprep.subr.mxu0 0.0
        %1592 = vmatpush1.msra.mxu0 0.0
        %1593 = vmatprep.subr.mxu0 0.0
        %1594 = vmatpush1.msra.mxu0 0.0
        %1595 = vmatprep.subr.mxu0 0.0
        %1596 = vmatpush1.msra.mxu0 0.0
        %1597 = vmatprep.subr.mxu0 0.0
        %1598 = vmatpush1.msra.mxu0 0.0
        %1599 = vmatprep.subr.mxu0 0.0
        %1600 = vmatpush1.msra.mxu0 0.0
        %1601 = vmatprep.subr.mxu0 0.0
        %1602 = vmatpush1.msra.mxu0 0.0
        %1603 = vmatprep.subr.mxu0 0.0
        %1604 = vmatpush1.msra.mxu0 0.0
        %1605 = vmatprep.subr.mxu0 0.0
        %1606 = vmatpush1.msra.mxu0 0.0
        %1607 = vmatprep.subr.mxu0 0.0
        %1608 = vmatpush1.msra.mxu0 0.0
        %1609 = vmatprep.subr.mxu0 0.0
        %1610 = vmatpush1.msra.mxu0 0.0
        %1611 = vmatprep.subr.mxu0 0.0
        %1612 = vmatpush1.msra.mxu0 0.0
        %1613 = vmatprep.subr.mxu0 0.0
        %1614 = vmatpush1.msra.mxu0 0.0
        %1615 = vmatprep.mubr.f32.mxu0 0.0
        %1616 = vmatmul.mubr.f32.gmra.mrb[0].mxu0 %v1549
        %v1617 = vpop.f32.mrb[0].mxu0
        %v1618 = vadd.f32 %v1541, %v1617
        %v1619 = vpop.f32.mrb[0].mxu0
        %v1620 = vadd.f32 %v1545, %v1619
        %1621 = vdwg.mxu0
        %v1622 = vmul.f32 %v1618, 0.5
        %v1623 = vmul.f32 %v1620, 0.5
        %v1624 = vmul.f32 %v1618, %v1618
        %v1625 = vmul.f32 %v1620, %v1620
        %v1626 = vmul.f32 %v1624, %v1618
        %v1627 = vmul.f32 %v1625, %v1620
        %v1628 = vmul.f32 %v1626, 0.044715
        %v1629 = vmul.f32 %v1627, 0.044715
        %v1630 = vadd.f32 %v1618, %v1628
        %v1631 = vadd.f32 %v1620, %v1629
        %v1632 = vmul.f32 %v1630, 0.7978846
        %v1633 = vmul.f32 %v1631, 0.7978846
        %v1634 = vtanh.pop %v1632
        %v1635 = vtanh.pop %v1633
        %v1636 = vadd.f32 %v1634, 1.0
        %v1637 = vadd.f32 %v1635, 1.0
        %v1638 = vmul.f32 %v1622, %v1636
        %v1639 = vmul.f32 %v1623, %v1637
        %v1640 = vld [vmem:[%s10] sm:$0xff]
        %v1641 = vld [vmem:[%s10 + $0x8] sm:$0xff]
        %v1642 = vld [vmem:[%s10 + $0x10] sm:$0xff]
        %v1643 = vld [vmem:[%s10 + $0x18] sm:$0xff]
        %v1644 = vld [vmem:[%s10 + $0x20] sm:$0xff]
        %v1645 = vld [vmem:[%s10 + $0x28] sm:$0xff]
        %v1646 = vld [vmem:[%s10 + $0x30] sm:$0xff]
        %v1647 = vld [vmem:[%s10 + $0x38] sm:$0xff]
        %v1648 = vld [vmem:[%s10 + $0x40] sm:$0xff]
        %v1649 = vld [vmem:[%s10 + $0x48] sm:$0xff]
        %v1650 = vld [vmem:[%s10 + $0x50] sm:$0xff]
        %v1651 = vld [vmem:[%s10 + $0x58] sm:$0xff]
        %v1652 = vld [vmem:[%s10 + $0x60] sm:$0xff]
        %v1653 = vld [vmem:[%s10 + $0x68] sm:$0xff]
        %v1654 = vld [vmem:[%s10 + $0x70] sm:$0xff]
        %v1655 = vld [vmem:[%s10 + $0x78] sm:$0xff]
        %v1656 = vld [vmem:[%s10 + $0x80] sm:$0xff]
        %v1657 = vld [vmem:[%s10 + $0x88] sm:$0xff]
        %v1658 = vld [vmem:[%s10 + $0x90] sm:$0xff]
        %v1659 = vld [vmem:[%s10 + $0x98] sm:$0xff]
        %v1660 = vld [vmem:[%s10 + $0xa0] sm:$0xff]
        %v1661 = vld [vmem:[%s10 + $0xa8] sm:$0xff]
        %v1662 = vld [vmem:[%s10 + $0xb0] sm:$0xff]
        %v1663 = vld [vmem:[%s10 + $0xb8] sm:$0xff]
        %v1664 = vld [vmem:[%s10 + $0xc0] sm:$0xff]
        %v1665 = vld [vmem:[%s10 + $0xc8] sm:$0xff]
        %v1666 = vld [vmem:[%s10 + $0xd0] sm:$0xff]
        %v1667 = vld [vmem:[%s10 + $0xd8] sm:$0xff]
        %v1668 = vld [vmem:[%s10 + $0xe0] sm:$0xff]
        %v1669 = vld [vmem:[%s10 + $0xe8] sm:$0xff]
        %v1670 = vld [vmem:[%s10 + $0xf0] sm:$0xff]
        %v1671 = vld [vmem:[%s10 + $0xf8] sm:$0xff]
        %v1672 = vlaneseq
        %v1673 = vshrl.u32 %v1672, 7
        %v1674 = vsub.s32 5, %v1673
        %v1675 = vrot.slane %v394, %v1674
        %1676 = vmatprep.subr.mxu0 0.0
        %1677 = vmatpush1.msra.mxu0 %v1640
        %1678 = vmatprep.subr.mxu0 0.0
        %1679 = vmatpush1.msra.mxu0 %v1641
        %1680 = vmatprep.subr.mxu0 0.0
        %1681 = vmatpush1.msra.mxu0 %v1642
        %1682 = vmatprep.subr.mxu0 0.0
        %1683 = vmatpush1.msra.mxu0 %v1643
        %1684 = vmatprep.subr.mxu0 0.0
        %1685 = vmatpush1.msra.mxu0 %v1644
        %1686 = vmatprep.subr.mxu0 0.0
        %1687 = vmatpush1.msra.mxu0 %v1645
        %1688 = vmatprep.subr.mxu0 0.0
        %1689 = vmatpush1.msra.mxu0 %v1646
        %1690 = vmatprep.subr.mxu0 0.0
        %1691 = vmatpush1.msra.mxu0 %v1647
        %1692 = vmatprep.subr.mxu0 0.0
        %1693 = vmatpush1.msra.mxu0 %v1648
        %1694 = vmatprep.subr.mxu0 0.0
        %1695 = vmatpush1.msra.mxu0 %v1649
        %1696 = vmatprep.subr.mxu0 0.0
        %1697 = vmatpush1.msra.mxu0 %v1650
        %1698 = vmatprep.subr.mxu0 0.0
        %1699 = vmatpush1.msra.mxu0 %v1651
        %1700 = vmatprep.subr.mxu0 0.0
        %1701 = vmatpush1.msra.mxu0 %v1652
        %1702 = vmatprep.subr.mxu0 0.0
        %1703 = vmatpush1.msra.mxu0 %v1653
        %1704 = vmatprep.subr.mxu0 0.0
        %1705 = vmatpush1.msra.mxu0 %v1654
        %1706 = vmatprep.subr.mxu0 0.0
        %1707 = vmatpush1.msra.mxu0 %v1655
        %1708 = vmatprep.subr.mxu0 0.0
        %1709 = vmatpush1.msra.mxu0 %v1656
        %1710 = vmatprep.subr.mxu0 0.0
        %1711 = vmatpush1.msra.mxu0 %v1657
        %1712 = vmatprep.subr.mxu0 0.0
        %1713 = vmatpush1.msra.mxu0 %v1658
        %1714 = vmatprep.subr.mxu0 0.0
        %1715 = vmatpush1.msra.mxu0 %v1659
        %1716 = vmatprep.subr.mxu0 0.0
        %1717 = vmatpush1.msra.mxu0 %v1660
        %1718 = vmatprep.subr.mxu0 0.0
        %1719 = vmatpush1.msra.mxu0 %v1661
        %1720 = vmatprep.subr.mxu0 0.0
        %1721 = vmatpush1.msra.mxu0 %v1662
        %1722 = vmatprep.subr.mxu0 0.0
        %1723 = vmatpush1.msra.mxu0 %v1663
        %1724 = vmatprep.subr.mxu0 0.0
        %1725 = vmatpush1.msra.mxu0 %v1664
        %1726 = vmatprep.subr.mxu0 0.0
        %1727 = vmatpush1.msra.mxu0 %v1665
        %1728 = vmatprep.subr.mxu0 0.0
        %1729 = vmatpush1.msra.mxu0 %v1666
        %1730 = vmatprep.subr.mxu0 0.0
        %1731 = vmatpush1.msra.mxu0 %v1667
        %1732 = vmatprep.subr.mxu0 0.0
        %1733 = vmatpush1.msra.mxu0 %v1668
        %1734 = vmatprep.subr.mxu0 0.0
        %1735 = vmatpush1.msra.mxu0 %v1669
        %1736 = vmatprep.subr.mxu0 0.0
        %1737 = vmatpush1.msra.mxu0 %v1670
        %1738 = vmatprep.subr.mxu0 0.0
        %1739 = vmatpush1.msra.mxu0 %v1671
        %1740 = vmatprep.mubr.f32.mxu0 %v1639
        %1741 = vmatmul.mubr.f32.gmra.mrb[0].mxu0 %v1638
        %v1742 = vpop.f32.mrb[0].mxu0
        %v1743 = vadd.f32 %v1675, %v1742
        %v1744 = vpop.f32.mrb[0].mxu0
        %1745 = vdwg.mxu0
        %v1746 = vadd.f32 %v1519, %v1743
        %s1747 = scalar_lea.vmem %s3, 8
        %v1748 = vld [vmem:[%s1747] sm:$0x3f]
        %v1749 = vsel %vm395, %v1746, 0.0
        %1750 = vadd.xlane.f32.xlu0 %v1749
        %v1751 = vpop.xlane.xlu0 %1750
        %v1752 = vmul.f32 %v1751, %v399
        %v1753 = vsub.f32 %v1746, %v1752
        %v1754 = vmul.f32 %v1753, %v1753
        %v1755 = vsel %vm395, %v1754, 0.0
        %1756 = vadd.xlane.f32.xlu0 %v1755
        %v1757 = vpop.xlane.xlu0 %1756
        %v1758 = vmul.f32 %v1757, %v399
        %v1759 = vadd.f32 %v1758, 1e-05
        %v1760 = vrsqrt.pop %v1759
        %v1761 = vmul.f32 %v1753, %v1760
        %v1762 = vlaneseq
        %v1763 = vshrl.u32 %v1762, 7
        %v1764 = vsub.s32 0, %v1763
        %v1765 = vrot.slane %v1748, %v1764
        %v1766 = vmul.f32 %v1761, %v1765
        %v1767 = vlaneseq
        %v1768 = vshrl.u32 %v1767, 7
        %v1769 = vsub.s32 1, %v1768
        %v1770 = vrot.slane %v1748, %v1769
        %v1771 = vadd.f32 %v1766, %v1770
        %s1772 = scalar_lea.vmem %s5, 128
        %v1773 = vld [vmem:[%s1772] sm:$0xff]
        %v1774 = vld [vmem:[%s1772 + $0x8] sm:$0xff]
        %v1775 = vld [vmem:[%s1772 + $0x10] sm:$0xff]
        %v1776 = vld [vmem:[%s1772 + $0x18] sm:$0xff]
        %v1777 = vld [vmem:[%s1772 + $0x20] sm:$0xff]
        %v1778 = vld [vmem:[%s1772 + $0x28] sm:$0xff]
        %v1779 = vld [vmem:[%s1772 + $0x30] sm:$0xff]
        %v1780 = vld [vmem:[%s1772 + $0x38] sm:$0xff]
        %v1781 = vld [vmem:[%s1772 + $0x40] sm:$0xff]
        %v1782 = vld [vmem:[%s1772 + $0x48] sm:$0xff]
        %v1783 = vld [vmem:[%s1772 + $0x50] sm:$0xff]
        %v1784 = vld [vmem:[%s1772 + $0x58] sm:$0xff]
        %v1785 = vld [vmem:[%s1772 + $0x60] sm:$0xff]
        %v1786 = vld [vmem:[%s1772 + $0x68] sm:$0xff]
        %v1787 = vld [vmem:[%s1772 + $0x70] sm:$0xff]
        %v1788 = vld [vmem:[%s1772 + $0x78] sm:$0xff]
        %s1789 = scalar_lea.vmem %s6, 2
        %v1790 = vld [vmem:[%s1789] sm:$0x3]
        %v1792 = vlaneseq
        %v1793 = vshrl.u32 %v1792, 7
        %v1794 = vsub.s32 0, %v1793
        %v1795 = vrot.slane %v1790, %v1794
        %v1796 = vlaneseq
        %v1797 = vshrl.u32 %v1796, 7
        %v1798 = vsub.s32 1, %v1797
        %v1799 = vrot.slane %v1790, %v1798
        %v1803 = vsel %vm395, %v1771, 0
        %1805 = vmatprep.subr.mxu0 %v1774
        %1806 = vmatpush1.msra.mxu0 %v1773
        %1807 = vmatprep.subr.mxu0 %v1776
        %1808 = vmatpush1.msra.mxu0 %v1775
        %1809 = vmatprep.subr.mxu0 %v1778
        %1810 = vmatpush1.msra.mxu0 %v1777
        %1811 = vmatprep.subr.mxu0 %v1780
        %1812 = vmatpush1.msra.mxu0 %v1779
        %1813 = vmatprep.subr.mxu0 %v1782
        %1814 = vmatpush1.msra.mxu0 %v1781
        %1815 = vmatprep.subr.mxu0 %v1784
        %1816 = vmatpush1.msra.mxu0 %v1783
        %1817 = vmatprep.subr.mxu0 %v1786
        %1818 = vmatpush1.msra.mxu0 %v1785
        %1819 = vmatprep.subr.mxu0 %v1788
        %1820 = vmatpush1.msra.mxu0 %v1787
        %1821 = vmatprep.subr.mxu0 0.0
        %1822 = vmatpush1.msra.mxu0 0.0
        %1823 = vmatprep.subr.mxu0 0.0
        %1824 = vmatpush1.msra.mxu0 0.0
        %1825 = vmatprep.subr.mxu0 0.0
        %1826 = vmatpush1.msra.mxu0 0.0
        %1827 = vmatprep.subr.mxu0 0.0
        %1828 = vmatpush1.msra.mxu0 0.0
        %1829 = vmatprep.subr.mxu0 0.0
        %1830 = vmatpush1.msra.mxu0 0.0
        %1831 = vmatprep.subr.mxu0 0.0
        %1832 = vmatpush1.msra.mxu0 0.0
        %1833 = vmatprep.subr.mxu0 0.0
        %1834 = vmatpush1.msra.mxu0 0.0
        %1835 = vmatprep.subr.mxu0 0.0
        %1836 = vmatpush1.msra.mxu0 0.0
        %1837 = vmatprep.subr.mxu0 0.0
        %1838 = vmatpush1.msra.mxu0 0.0
        %1839 = vmatprep.subr.mxu0 0.0
        %1840 = vmatpush1.msra.mxu0 0.0
        %1841 = vmatprep.subr.mxu0 0.0
        %1842 = vmatpush1.msra.mxu0 0.0
        %1843 = vmatprep.subr.mxu0 0.0
        %1844 = vmatpush1.msra.mxu0 0.0
        %1845 = vmatprep.subr.mxu0 0.0
        %1846 = vmatpush1.msra.mxu0 0.0
        %1847 = vmatprep.subr.mxu0 0.0
        %1848 = vmatpush1.msra.mxu0 0.0
        %1849 = vmatprep.subr.mxu0 0.0
        %1850 = vmatpush1.msra.mxu0 0.0
        %1851 = vmatprep.subr.mxu0 0.0
        %1852 = vmatpush1.msra.mxu0 0.0
        %1853 = vmatprep.subr.mxu0 0.0
        %1854 = vmatpush1.msra.mxu0 0.0
        %1855 = vmatprep.subr.mxu0 0.0
        %1856 = vmatpush1.msra.mxu0 0.0
        %1857 = vmatprep.subr.mxu0 0.0
        %1858 = vmatpush1.msra.mxu0 0.0
        %1859 = vmatprep.subr.mxu0 0.0
        %1860 = vmatpush1.msra.mxu0 0.0
        %1861 = vmatprep.subr.mxu0 0.0
        %1862 = vmatpush1.msra.mxu0 0.0
        %1863 = vmatprep.subr.mxu0 0.0
        %1864 = vmatpush1.msra.mxu0 0.0
        %1865 = vmatprep.subr.mxu0 0.0
        %1866 = vmatpush1.msra.mxu0 0.0
        %1867 = vmatprep.subr.mxu0 0.0
        %1868 = vmatpush1.msra.mxu0 0.0
        %1869 = vmatprep.mubr.f32.mxu0 0.0
        %1870 = vmatmul.mubr.f32.gmra.mrb[0].mxu0 %v1803
        %v1871 = vpop.f32.mrb[0].mxu0
        %v1872 = vadd.f32 %v1795, %v1871
        %v1873 = vpop.f32.mrb[0].mxu0
        %v1874 = vadd.f32 %v1799, %v1873
        %1875 = vdwg.mxu0
        %1877 = vrot.lane.b32.xlu0 %v1872, 64
        %v1878 = vpop.permute.xlu0 %1877
        %v1879 = vsel %vm525, %v1872, 0
        %v1881 = vsel %vm525, %v1878, 0
        %1883 = vmatprep.subr.mxu0 0.0
        %1884 = vmatpush1.xpose.msra.mxu0 %v1881
        %1885 = vmatprep.subr.mxu0 0.0
        %1886 = vmatpush1.xpose.msra.mxu0 0.0
        %1887 = vmatprep.subr.mxu0 0.0
        %1888 = vmatpush1.xpose.msra.mxu0 0.0
        %1889 = vmatprep.subr.mxu0 0.0
        %1890 = vmatpush1.xpose.msra.mxu0 0.0
        %1891 = vmatprep.subr.mxu0 0.0
        %1892 = vmatpush1.xpose.msra.mxu0 0.0
        %1893 = vmatprep.subr.mxu0 0.0
        %1894 = vmatpush1.xpose.msra.mxu0 0.0
        %1895 = vmatprep.subr.mxu0 0.0
        %1896 = vmatpush1.xpose.msra.mxu0 0.0
        %1897 = vmatprep.subr.mxu0 0.0
        %1898 = vmatpush1.xpose.msra.mxu0 0.0
        %1899 = vmatprep.subr.mxu0 0.0
        %1900 = vmatpush1.xpose.msra.mxu0 0.0
        %1901 = vmatprep.subr.mxu0 0.0
        %1902 = vmatpush1.xpose.msra.mxu0 0.0
        %1903 = vmatprep.subr.mxu0 0.0
        %1904 = vmatpush1.xpose.msra.mxu0 0.0
        %1905 = vmatprep.subr.mxu0 0.0
        %1906 = vmatpush1.xpose.msra.mxu0 0.0
        %1907 = vmatprep.subr.mxu0 0.0
        %1908 = vmatpush1.xpose.msra.mxu0 0.0
        %1909 = vmatprep.subr.mxu0 0.0
        %1910 = vmatpush1.xpose.msra.mxu0 0.0
        %1911 = vmatprep.subr.mxu0 0.0
        %1912 = vmatpush1.xpose.msra.mxu0 0.0
        %1913 = vmatprep.subr.mxu0 0.0
        %1914 = vmatpush1.xpose.msra.mxu0 0.0
        %1915 = vmatprep.subr.mxu0 0.0
        %1916 = vmatpush1.xpose.msra.mxu0 0.0
        %1917 = vmatprep.subr.mxu0 0.0
        %1918 = vmatpush1.xpose.msra.mxu0 0.0
        %1919 = vmatprep.subr.mxu0 0.0
        %1920 = vmatpush1.xpose.msra.mxu0 0.0
        %1921 = vmatprep.subr.mxu0 0.0
        %1922 = vmatpush1.xpose.msra.mxu0 0.0
        %1923 = vmatprep.subr.mxu0 0.0
        %1924 = vmatpush1.xpose.msra.mxu0 0.0
        %1925 = vmatprep.subr.mxu0 0.0
        %1926 = vmatpush1.xpose.msra.mxu0 0.0
        %1927 = vmatprep.subr.mxu0 0.0
        %1928 = vmatpush1.xpose.msra.mxu0 0.0
        %1929 = vmatprep.subr.mxu0 0.0
        %1930 = vmatpush1.xpose.msra.mxu0 0.0
        %1931 = vmatprep.subr.mxu0 0.0
        %1932 = vmatpush1.xpose.msra.mxu0 0.0
        %1933 = vmatprep.subr.mxu0 0.0
        %1934 = vmatpush1.xpose.msra.mxu0 0.0
        %1935 = vmatprep.subr.mxu0 0.0
        %1936 = vmatpush1.xpose.msra.mxu0 0.0
        %1937 = vmatprep.subr.mxu0 0.0
        %1938 = vmatpush1.xpose.msra.mxu0 0.0
        %1939 = vmatprep.subr.mxu0 0.0
        %1940 = vmatpush1.xpose.msra.mxu0 0.0
        %1941 = vmatprep.subr.mxu0 0.0
        %1942 = vmatpush1.xpose.msra.mxu0 0.0
        %1943 = vmatprep.subr.mxu0 0.0
        %1944 = vmatpush1.xpose.msra.mxu0 0.0
        %1945 = vmatprep.subr.mxu0 0.0
        %1946 = vmatpush1.xpose.msra.mxu0 0.0
        %1947 = vmatprep.mubr.f32.mxu0 0.0
        %1948 = vmatmul.mubr.f32.gmra.mrb[0].mxu0 %v1879
        %v1949 = vpop.f32.mrb[0].mxu0
        %v1950 = vadd.f32 0.0, %v1949
        %v1951 = vpop.f32.mrb[0].mxu0
        %1952 = vdwg.mxu0
        %v1953 = vmul.f32 %v1950, 0.25
        %v1954 = vsel %vm393, %v1953, -1e+30
        %v1955 = vsel %vm602, %v1954, -inf
        %1956 = vmax.xlane.f32.xlu0 %v1955
        %v1957 = vpop.xlane.xlu0 %1956
        %v1958 = vsub.f32 %v1954, %v1957
        %v1959 = vmul.f32 %v1958, 1.442695
        %v1960 = vpow.pop %v1959
        %v1961 = vsel %vm602, %v1960, 0.0
        %1962 = vadd.xlane.f32.xlu0 %v1961
        %v1963 = vpop.xlane.xlu0 %1962
        %v1964 = vrcp.pop %v1963
        %v1965 = vmul.f32 %v1960, %v1964
        %v1967 = vsel %vm602, %v1965, 0
        %1969 = vmatprep.subr.mxu0 0.0
        %1970 = vmatpush1.msra.mxu0 %v1874
        %1971 = vmatprep.subr.mxu0 0.0
        %1972 = vmatpush1.msra.mxu0 0.0
        %1973 = vmatprep.subr.mxu0 0.0
        %1974 = vmatpush1.msra.mxu0 0.0
        %1975 = vmatprep.subr.mxu0 0.0
        %1976 = vmatpush1.msra.mxu0 0.0
        %1977 = vmatprep.subr.mxu0 0.0
        %1978 = vmatpush1.msra.mxu0 0.0
        %1979 = vmatprep.subr.mxu0 0.0
        %1980 = vmatpush1.msra.mxu0 0.0
        %1981 = vmatprep.subr.mxu0 0.0
        %1982 = vmatpush1.msra.mxu0 0.0
        %1983 = vmatprep.subr.mxu0 0.0
        %1984 = vmatpush1.msra.mxu0 0.0
        %1985 = vmatprep.subr.mxu0 0.0
        %1986 = vmatpush1.msra.mxu0 0.0
        %1987 = vmatprep.subr.mxu0 0.0
        %1988 = vmatpush1.msra.mxu0 0.0
        %1989 = vmatprep.subr.mxu0 0.0
        %1990 = vmatpush1.msra.mxu0 0.0
        %1991 = vmatprep.subr.mxu0 0.0
        %1992 = vmatpush1.msra.mxu0 0.0
        %1993 = vmatprep.subr.mxu0 0.0
        %1994 = vmatpush1.msra.mxu0 0.0
        %1995 = vmatprep.subr.mxu0 0.0
        %1996 = vmatpush1.msra.mxu0 0.0
        %1997 = vmatprep.subr.mxu0 0.0
        %1998 = vmatpush1.msra.mxu0 0.0
        %1999 = vmatprep.subr.mxu0 0.0
        %2000 = vmatpush1.msra.mxu0 0.0
        %2001 = vmatprep.subr.mxu0 0.0
        %2002 = vmatpush1.msra.mxu0 0.0
        %2003 = vmatprep.subr.mxu0 0.0
        %2004 = vmatpush1.msra.mxu0 0.0
        %2005 = vmatprep.subr.mxu0 0.0
        %2006 = vmatpush1.msra.mxu0 0.0
        %2007 = vmatprep.subr.mxu0 0.0
        %2008 = vmatpush1.msra.mxu0 0.0
        %2009 = vmatprep.subr.mxu0 0.0
        %2010 = vmatpush1.msra.mxu0 0.0
        %2011 = vmatprep.subr.mxu0 0.0
        %2012 = vmatpush1.msra.mxu0 0.0
        %2013 = vmatprep.subr.mxu0 0.0
        %2014 = vmatpush1.msra.mxu0 0.0
        %2015 = vmatprep.subr.mxu0 0.0
        %2016 = vmatpush1.msra.mxu0 0.0
        %2017 = vmatprep.subr.mxu0 0.0
        %2018 = vmatpush1.msra.mxu0 0.0
        %2019 = vmatprep.subr.mxu0 0.0
        %2020 = vmatpush1.msra.mxu0 0.0
        %2021 = vmatprep.subr.mxu0 0.0
        %2022 = vmatpush1.msra.mxu0 0.0
        %2023 = vmatprep.subr.mxu0 0.0
        %2024 = vmatpush1.msra.mxu0 0.0
        %2025 = vmatprep.subr.mxu0 0.0
        %2026 = vmatpush1.msra.mxu0 0.0
        %2027 = vmatprep.subr.mxu0 0.0
        %2028 = vmatpush1.msra.mxu0 0.0
        %2029 = vmatprep.subr.mxu0 0.0
        %2030 = vmatpush1.msra.mxu0 0.0
        %2031 = vmatprep.subr.mxu0 0.0
        %2032 = vmatpush1.msra.mxu0 0.0
        %2033 = vmatprep.mubr.f32.mxu0 0.0
        %2034 = vmatmul.mubr.f32.gmra.mrb[0].mxu0 %v1967
        %v2035 = vpop.f32.mrb[0].mxu0
        %v2036 = vadd.f32 0.0, %v2035
        %v2037 = vpop.f32.mrb[0].mxu0
        %2038 = vdwg.mxu0
        %s2039 = scalar_lea.vmem %s7, 64
        %v2040 = vld [vmem:[%s2039] sm:$0xff]
        %v2041 = vld [vmem:[%s2039 + $0x8] sm:$0xff]
        %2042 = vrot.lane.b32.xlu0 %v1872, 112
        %v2043 = vpop.permute.xlu0 %2042
        %2044 = vrot.lane.b32.xlu0 %v1872, 48
        %v2045 = vpop.permute.xlu0 %2044
        %v2046 = vsel %vm525, %v2043, 0
        %v2048 = vsel %vm525, %v2045, 0
        %2050 = vmatprep.subr.mxu0 0.0
        %2051 = vmatpush1.xpose.msra.mxu0 %v2048
        %2052 = vmatprep.subr.mxu0 0.0
        %2053 = vmatpush1.xpose.msra.mxu0 0.0
        %2054 = vmatprep.subr.mxu0 0.0
        %2055 = vmatpush1.xpose.msra.mxu0 0.0
        %2056 = vmatprep.subr.mxu0 0.0
        %2057 = vmatpush1.xpose.msra.mxu0 0.0
        %2058 = vmatprep.subr.mxu0 0.0
        %2059 = vmatpush1.xpose.msra.mxu0 0.0
        %2060 = vmatprep.subr.mxu0 0.0
        %2061 = vmatpush1.xpose.msra.mxu0 0.0
        %2062 = vmatprep.subr.mxu0 0.0
        %2063 = vmatpush1.xpose.msra.mxu0 0.0
        %2064 = vmatprep.subr.mxu0 0.0
        %2065 = vmatpush1.xpose.msra.mxu0 0.0
        %2066 = vmatprep.subr.mxu0 0.0
        %2067 = vmatpush1.xpose.msra.mxu0 0.0
        %2068 = vmatprep.subr.mxu0 0.0
        %2069 = vmatpush1.xpose.msra.mxu0 0.0
        %2070 = vmatprep.subr.mxu0 0.0
        %2071 = vmatpush1.xpose.msra.mxu0 0.0
        %2072 = vmatprep.subr.mxu0 0.0
        %2073 = vmatpush1.xpose.msra.mxu0 0.0
        %2074 = vmatprep.subr.mxu0 0.0
        %2075 = vmatpush1.xpose.msra.mxu0 0.0
        %2076 = vmatprep.subr.mxu0 0.0
        %2077 = vmatpush1.xpose.msra.mxu0 0.0
        %2078 = vmatprep.subr.mxu0 0.0
        %2079 = vmatpush1.xpose.msra.mxu0 0.0
        %2080 = vmatprep.subr.mxu0 0.0
        %2081 = vmatpush1.xpose.msra.mxu0 0.0
        %2082 = vmatprep.subr.mxu0 0.0
        %2083 = vmatpush1.xpose.msra.mxu0 0.0
        %2084 = vmatprep.subr.mxu0 0.0
        %2085 = vmatpush1.xpose.msra.mxu0 0.0
        %2086 = vmatprep.subr.mxu0 0.0
        %2087 = vmatpush1.xpose.msra.mxu0 0.0
        %2088 = vmatprep.subr.mxu0 0.0
        %2089 = vmatpush1.xpose.msra.mxu0 0.0
        %2090 = vmatprep.subr.mxu0 0.0
        %2091 = vmatpush1.xpose.msra.mxu0 0.0
        %2092 = vmatprep.subr.mxu0 0.0
        %2093 = vmatpush1.xpose.msra.mxu0 0.0
        %2094 = vmatprep.subr.mxu0 0.0
        %2095 = vmatpush1.xpose.msra.mxu0 0.0
        %2096 = vmatprep.subr.mxu0 0.0
        %2097 = vmatpush1.xpose.msra.mxu0 0.0
        %2098 = vmatprep.subr.mxu0 0.0
        %2099 = vmatpush1.xpose.msra.mxu0 0.0
        %2100 = vmatprep.subr.mxu0 0.0
        %2101 = vmatpush1.xpose.msra.mxu0 0.0
        %2102 = vmatprep.subr.mxu0 0.0
        %2103 = vmatpush1.xpose.msra.mxu0 0.0
        %2104 = vmatprep.subr.mxu0 0.0
        %2105 = vmatpush1.xpose.msra.mxu0 0.0
        %2106 = vmatprep.subr.mxu0 0.0
        %2107 = vmatpush1.xpose.msra.mxu0 0.0
        %2108 = vmatprep.subr.mxu0 0.0
        %2109 = vmatpush1.xpose.msra.mxu0 0.0
        %2110 = vmatprep.subr.mxu0 0.0
        %2111 = vmatpush1.xpose.msra.mxu0 0.0
        %2112 = vmatprep.subr.mxu0 0.0
        %2113 = vmatpush1.xpose.msra.mxu0 0.0
        %2114 = vmatprep.mubr.f32.mxu0 0.0
        %2115 = vmatmul.mubr.f32.gmra.mrb[0].mxu0 %v2046
        %v2116 = vpop.f32.mrb[0].mxu0
        %v2117 = vadd.f32 0.0, %v2116
        %v2118 = vpop.f32.mrb[0].mxu0
        %2119 = vdwg.mxu0
        %v2120 = vmul.f32 %v2117, 0.25
        %v2121 = vsel %vm393, %v2120, -1e+30
        %v2122 = vsel %vm602, %v2121, -inf
        %2123 = vmax.xlane.f32.xlu0 %v2122
        %v2124 = vpop.xlane.xlu0 %2123
        %v2125 = vsub.f32 %v2121, %v2124
        %v2126 = vmul.f32 %v2125, 1.442695
        %v2127 = vpow.pop %v2126
        %v2128 = vsel %vm602, %v2127, 0.0
        %2129 = vadd.xlane.f32.xlu0 %v2128
        %v2130 = vpop.xlane.xlu0 %2129
        %v2131 = vrcp.pop %v2130
        %v2132 = vmul.f32 %v2127, %v2131
        %2134 = vrot.lane.b32.xlu0 %v1874, 112
        %v2135 = vpop.permute.xlu0 %2134
        %v2138 = vsel %vm602, %v2132, 0
        %2140 = vmatprep.subr.mxu0 0.0
        %2141 = vmatpush1.msra.mxu0 %v2135
        %2142 = vmatprep.subr.mxu0 0.0
        %2143 = vmatpush1.msra.mxu0 0.0
        %2144 = vmatprep.subr.mxu0 0.0
        %2145 = vmatpush1.msra.mxu0 0.0
        %2146 = vmatprep.subr.mxu0 0.0
        %2147 = vmatpush1.msra.mxu0 0.0
        %2148 = vmatprep.subr.mxu0 0.0
        %2149 = vmatpush1.msra.mxu0 0.0
        %2150 = vmatprep.subr.mxu0 0.0
        %2151 = vmatpush1.msra.mxu0 0.0
        %2152 = vmatprep.subr.mxu0 0.0
        %2153 = vmatpush1.msra.mxu0 0.0
        %2154 = vmatprep.subr.mxu0 0.0
        %2155 = vmatpush1.msra.mxu0 0.0
        %2156 = vmatprep.subr.mxu0 0.0
        %2157 = vmatpush1.msra.mxu0 0.0
        %2158 = vmatprep.subr.mxu0 0.0
        %2159 = vmatpush1.msra.mxu0 0.0
        %2160 = vmatprep.subr.mxu0 0.0
        %2161 = vmatpush1.msra.mxu0 0.0
        %2162 = vmatprep.subr.mxu0 0.0
        %2163 = vmatpush1.msra.mxu0 0.0
        %2164 = vmatprep.subr.mxu0 0.0
        %2165 = vmatpush1.msra.mxu0 0.0
        %2166 = vmatprep.subr.mxu0 0.0
        %2167 = vmatpush1.msra.mxu0 0.0
        %2168 = vmatprep.subr.mxu0 0.0
        %2169 = vmatpush1.msra.mxu0 0.0
        %2170 = vmatprep.subr.mxu0 0.0
        %2171 = vmatpush1.msra.mxu0 0.0
        %2172 = vmatprep.subr.mxu0 0.0
        %2173 = vmatpush1.msra.mxu0 0.0
        %2174 = vmatprep.subr.mxu0 0.0
        %2175 = vmatpush1.msra.mxu0 0.0
        %2176 = vmatprep.subr.mxu0 0.0
        %2177 = vmatpush1.msra.mxu0 0.0
        %2178 = vmatprep.subr.mxu0 0.0
        %2179 = vmatpush1.msra.mxu0 0.0
        %2180 = vmatprep.subr.mxu0 0.0
        %2181 = vmatpush1.msra.mxu0 0.0
        %2182 = vmatprep.subr.mxu0 0.0
        %2183 = vmatpush1.msra.mxu0 0.0
        %2184 = vmatprep.subr.mxu0 0.0
        %2185 = vmatpush1.msra.mxu0 0.0
        %2186 = vmatprep.subr.mxu0 0.0
        %2187 = vmatpush1.msra.mxu0 0.0
        %2188 = vmatprep.subr.mxu0 0.0
        %2189 = vmatpush1.msra.mxu0 0.0
        %2190 = vmatprep.subr.mxu0 0.0
        %2191 = vmatpush1.msra.mxu0 0.0
        %2192 = vmatprep.subr.mxu0 0.0
        %2193 = vmatpush1.msra.mxu0 0.0
        %2194 = vmatprep.subr.mxu0 0.0
        %2195 = vmatpush1.msra.mxu0 0.0
        %2196 = vmatprep.subr.mxu0 0.0
        %2197 = vmatpush1.msra.mxu0 0.0
        %2198 = vmatprep.subr.mxu0 0.0
        %2199 = vmatpush1.msra.mxu0 0.0
        %2200 = vmatprep.subr.mxu0 0.0
        %2201 = vmatpush1.msra.mxu0 0.0
        %2202 = vmatprep.subr.mxu0 0.0
        %2203 = vmatpush1.msra.mxu0 0.0
        %2204 = vmatprep.mubr.f32.mxu0 0.0
        %2205 = vmatmul.mubr.f32.gmra.mrb[0].mxu0 %v2138
        %v2206 = vpop.f32.mrb[0].mxu0
        %v2207 = vadd.f32 0.0, %v2206
        %v2208 = vpop.f32.mrb[0].mxu0
        %2209 = vdwg.mxu0
        %v2210 = vld [vmem:[%s2039 + $0x10] sm:$0xff]
        %v2211 = vld [vmem:[%s2039 + $0x18] sm:$0xff]
        %v2213 = vsel %vm525, %v2207, 0
        %2215 = vmatprep.subr.mxu0 0.0
        %2216 = vmatpush1.msra.mxu0 %v2210
        %2217 = vmatprep.subr.mxu0 0.0
        %2218 = vmatpush1.msra.mxu0 %v2211
        %2219 = vmatprep.subr.mxu0 0.0
        %2220 = vmatpush1.msra.mxu0 0.0
        %2221 = vmatprep.subr.mxu0 0.0
        %2222 = vmatpush1.msra.mxu0 0.0
        %2223 = vmatprep.subr.mxu0 0.0
        %2224 = vmatpush1.msra.mxu0 0.0
        %2225 = vmatprep.subr.mxu0 0.0
        %2226 = vmatpush1.msra.mxu0 0.0
        %2227 = vmatprep.subr.mxu0 0.0
        %2228 = vmatpush1.msra.mxu0 0.0
        %2229 = vmatprep.subr.mxu0 0.0
        %2230 = vmatpush1.msra.mxu0 0.0
        %2231 = vmatprep.subr.mxu0 0.0
        %2232 = vmatpush1.msra.mxu0 0.0
        %2233 = vmatprep.subr.mxu0 0.0
        %2234 = vmatpush1.msra.mxu0 0.0
        %2235 = vmatprep.subr.mxu0 0.0
        %2236 = vmatpush1.msra.mxu0 0.0
        %2237 = vmatprep.subr.mxu0 0.0
        %2238 = vmatpush1.msra.mxu0 0.0
        %2239 = vmatprep.subr.mxu0 0.0
        %2240 = vmatpush1.msra.mxu0 0.0
        %2241 = vmatprep.subr.mxu0 0.0
        %2242 = vmatpush1.msra.mxu0 0.0
        %2243 = vmatprep.subr.mxu0 0.0
        %2244 = vmatpush1.msra.mxu0 0.0
        %2245 = vmatprep.subr.mxu0 0.0
        %2246 = vmatpush1.msra.mxu0 0.0
        %2247 = vmatprep.subr.mxu0 0.0
        %2248 = vmatpush1.msra.mxu0 0.0
        %2249 = vmatprep.subr.mxu0 0.0
        %2250 = vmatpush1.msra.mxu0 0.0
        %2251 = vmatprep.subr.mxu0 0.0
        %2252 = vmatpush1.msra.mxu0 0.0
        %2253 = vmatprep.subr.mxu0 0.0
        %2254 = vmatpush1.msra.mxu0 0.0
        %2255 = vmatprep.subr.mxu0 0.0
        %2256 = vmatpush1.msra.mxu0 0.0
        %2257 = vmatprep.subr.mxu0 0.0
        %2258 = vmatpush1.msra.mxu0 0.0
        %2259 = vmatprep.subr.mxu0 0.0
        %2260 = vmatpush1.msra.mxu0 0.0
        %2261 = vmatprep.subr.mxu0 0.0
        %2262 = vmatpush1.msra.mxu0 0.0
        %2263 = vmatprep.subr.mxu0 0.0
        %2264 = vmatpush1.msra.mxu0 0.0
        %2265 = vmatprep.subr.mxu0 0.0
        %2266 = vmatpush1.msra.mxu0 0.0
        %2267 = vmatprep.subr.mxu0 0.0
        %2268 = vmatpush1.msra.mxu0 0.0
        %2269 = vmatprep.subr.mxu0 0.0
        %2270 = vmatpush1.msra.mxu0 0.0
        %2271 = vmatprep.subr.mxu0 0.0
        %2272 = vmatpush1.msra.mxu0 0.0
        %2273 = vmatprep.subr.mxu0 0.0
        %2274 = vmatpush1.msra.mxu0 0.0
        %2275 = vmatprep.subr.mxu0 0.0
        %2276 = vmatpush1.msra.mxu0 0.0
        %2277 = vmatprep.subr.mxu0 0.0
        %2278 = vmatpush1.msra.mxu0 0.0
        %2279 = vmatprep.mubr.f32.mxu0 0.0
        %2280 = vmatmul.mubr.f32.gmra.mrb[0].mxu0 %v2213
        %v2281 = vpop.f32.mrb[0].mxu0
        %v2282 = vadd.f32 0.0, %v2281
        %v2283 = vpop.f32.mrb[0].mxu0
        %2284 = vdwg.mxu0
        %v2286 = vsel %vm525, %v2036, 0
        %2288 = vmatprep.subr.mxu0 0.0
        %2289 = vmatpush1.msra.mxu0 %v2040
        %2290 = vmatprep.subr.mxu0 0.0
        %2291 = vmatpush1.msra.mxu0 %v2041
        %2292 = vmatprep.subr.mxu0 0.0
        %2293 = vmatpush1.msra.mxu0 0.0
        %2294 = vmatprep.subr.mxu0 0.0
        %2295 = vmatpush1.msra.mxu0 0.0
        %2296 = vmatprep.subr.mxu0 0.0
        %2297 = vmatpush1.msra.mxu0 0.0
        %2298 = vmatprep.subr.mxu0 0.0
        %2299 = vmatpush1.msra.mxu0 0.0
        %2300 = vmatprep.subr.mxu0 0.0
        %2301 = vmatpush1.msra.mxu0 0.0
        %2302 = vmatprep.subr.mxu0 0.0
        %2303 = vmatpush1.msra.mxu0 0.0
        %2304 = vmatprep.subr.mxu0 0.0
        %2305 = vmatpush1.msra.mxu0 0.0
        %2306 = vmatprep.subr.mxu0 0.0
        %2307 = vmatpush1.msra.mxu0 0.0
        %2308 = vmatprep.subr.mxu0 0.0
        %2309 = vmatpush1.msra.mxu0 0.0
        %2310 = vmatprep.subr.mxu0 0.0
        %2311 = vmatpush1.msra.mxu0 0.0
        %2312 = vmatprep.subr.mxu0 0.0
        %2313 = vmatpush1.msra.mxu0 0.0
        %2314 = vmatprep.subr.mxu0 0.0
        %2315 = vmatpush1.msra.mxu0 0.0
        %2316 = vmatprep.subr.mxu0 0.0
        %2317 = vmatpush1.msra.mxu0 0.0
        %2318 = vmatprep.subr.mxu0 0.0
        %2319 = vmatpush1.msra.mxu0 0.0
        %2320 = vmatprep.subr.mxu0 0.0
        %2321 = vmatpush1.msra.mxu0 0.0
        %2322 = vmatprep.subr.mxu0 0.0
        %2323 = vmatpush1.msra.mxu0 0.0
        %2324 = vmatprep.subr.mxu0 0.0
        %2325 = vmatpush1.msra.mxu0 0.0
        %2326 = vmatprep.subr.mxu0 0.0
        %2327 = vmatpush1.msra.mxu0 0.0
        %2328 = vmatprep.subr.mxu0 0.0
        %2329 = vmatpush1.msra.mxu0 0.0
        %2330 = vmatprep.subr.mxu0 0.0
        %2331 = vmatpush1.msra.mxu0 0.0
        %2332 = vmatprep.subr.mxu0 0.0
        %2333 = vmatpush1.msra.mxu0 0.0
        %2334 = vmatprep.subr.mxu0 0.0
        %2335 = vmatpush1.msra.mxu0 0.0
        %2336 = vmatprep.subr.mxu0 0.0
        %2337 = vmatpush1.msra.mxu0 0.0
        %2338 = vmatprep.subr.mxu0 0.0
        %2339 = vmatpush1.msra.mxu0 0.0
        %2340 = vmatprep.subr.mxu0 0.0
        %2341 = vmatpush1.msra.mxu0 0.0
        %2342 = vmatprep.subr.mxu0 0.0
        %2343 = vmatpush1.msra.mxu0 0.0
        %2344 = vmatprep.subr.mxu0 0.0
        %2345 = vmatpush1.msra.mxu0 0.0
        %2346 = vmatprep.subr.mxu0 0.0
        %2347 = vmatpush1.msra.mxu0 0.0
        %2348 = vmatprep.subr.mxu0 0.0
        %2349 = vmatpush1.msra.mxu0 0.0
        %2350 = vmatprep.subr.mxu0 0.0
        %2351 = vmatpush1.msra.mxu0 0.0
        %2352 = vmatprep.mubr.f32.mxu0 0.0
        %2353 = vmatmul.mubr.f32.gmra.mrb[0].mxu0 %v2286
        %v2354 = vpop.f32.mrb[0].mxu0
        %v2355 = vadd.f32 %v2282, %v2354
        %v2356 = vpop.f32.mrb[0].mxu0
        %2357 = vdwg.mxu0
        %2358 = vrot.lane.b32.xlu0 %v1872, 96
        %v2359 = vpop.permute.xlu0 %2358
        %2360 = vrot.lane.b32.xlu0 %v1872, 32
        %v2361 = vpop.permute.xlu0 %2360
        %v2362 = vsel %vm525, %v2359, 0
        %v2364 = vsel %vm525, %v2361, 0
        %2366 = vmatprep.subr.mxu0 0.0
        %2367 = vmatpush1.xpose.msra.mxu0 %v2364
        %2368 = vmatprep.subr.mxu0 0.0
        %2369 = vmatpush1.xpose.msra.mxu0 0.0
        %2370 = vmatprep.subr.mxu0 0.0
        %2371 = vmatpush1.xpose.msra.mxu0 0.0
        %2372 = vmatprep.subr.mxu0 0.0
        %2373 = vmatpush1.xpose.msra.mxu0 0.0
        %2374 = vmatprep.subr.mxu0 0.0
        %2375 = vmatpush1.xpose.msra.mxu0 0.0
        %2376 = vmatprep.subr.mxu0 0.0
        %2377 = vmatpush1.xpose.msra.mxu0 0.0
        %2378 = vmatprep.subr.mxu0 0.0
        %2379 = vmatpush1.xpose.msra.mxu0 0.0
        %2380 = vmatprep.subr.mxu0 0.0
        %2381 = vmatpush1.xpose.msra.mxu0 0.0
        %2382 = vmatprep.subr.mxu0 0.0
        %2383 = vmatpush1.xpose.msra.mxu0 0.0
        %2384 = vmatprep.subr.mxu0 0.0
        %2385 = vmatpush1.xpose.msra.mxu0 0.0
        %2386 = vmatprep.subr.mxu0 0.0
        %2387 = vmatpush1.xpose.msra.mxu0 0.0
        %2388 = vmatprep.subr.mxu0 0.0
        %2389 = vmatpush1.xpose.msra.mxu0 0.0
        %2390 = vmatprep.subr.mxu0 0.0
        %2391 = vmatpush1.xpose.msra.mxu0 0.0
        %2392 = vmatprep.subr.mxu0 0.0
        %2393 = vmatpush1.xpose.msra.mxu0 0.0
        %2394 = vmatprep.subr.mxu0 0.0
        %2395 = vmatpush1.xpose.msra.mxu0 0.0
        %2396 = vmatprep.subr.mxu0 0.0
        %2397 = vmatpush1.xpose.msra.mxu0 0.0
        %2398 = vmatprep.subr.mxu0 0.0
        %2399 = vmatpush1.xpose.msra.mxu0 0.0
        %2400 = vmatprep.subr.mxu0 0.0
        %2401 = vmatpush1.xpose.msra.mxu0 0.0
        %2402 = vmatprep.subr.mxu0 0.0
        %2403 = vmatpush1.xpose.msra.mxu0 0.0
        %2404 = vmatprep.subr.mxu0 0.0
        %2405 = vmatpush1.xpose.msra.mxu0 0.0
        %2406 = vmatprep.subr.mxu0 0.0
        %2407 = vmatpush1.xpose.msra.mxu0 0.0
        %2408 = vmatprep.subr.mxu0 0.0
        %2409 = vmatpush1.xpose.msra.mxu0 0.0
        %2410 = vmatprep.subr.mxu0 0.0
        %2411 = vmatpush1.xpose.msra.mxu0 0.0
        %2412 = vmatprep.subr.mxu0 0.0
        %2413 = vmatpush1.xpose.msra.mxu0 0.0
        %2414 = vmatprep.subr.mxu0 0.0
        %2415 = vmatpush1.xpose.msra.mxu0 0.0
        %2416 = vmatprep.subr.mxu0 0.0
        %2417 = vmatpush1.xpose.msra.mxu0 0.0
        %2418 = vmatprep.subr.mxu0 0.0
        %2419 = vmatpush1.xpose.msra.mxu0 0.0
        %2420 = vmatprep.subr.mxu0 0.0
        %2421 = vmatpush1.xpose.msra.mxu0 0.0
        %2422 = vmatprep.subr.mxu0 0.0
        %2423 = vmatpush1.xpose.msra.mxu0 0.0
        %2424 = vmatprep.subr.mxu0 0.0
        %2425 = vmatpush1.xpose.msra.mxu0 0.0
        %2426 = vmatprep.subr.mxu0 0.0
        %2427 = vmatpush1.xpose.msra.mxu0 0.0
        %2428 = vmatprep.subr.mxu0 0.0
        %2429 = vmatpush1.xpose.msra.mxu0 0.0
        %2430 = vmatprep.mubr.f32.mxu0 0.0
        %2431 = vmatmul.mubr.f32.gmra.mrb[0].mxu0 %v2362
        %v2432 = vpop.f32.mrb[0].mxu0
        %v2433 = vadd.f32 0.0, %v2432
        %v2434 = vpop.f32.mrb[0].mxu0
        %2435 = vdwg.mxu0
        %v2436 = vmul.f32 %v2433, 0.25
        %v2437 = vsel %vm393, %v2436, -1e+30
        %v2438 = vsel %vm602, %v2437, -inf
        %2439 = vmax.xlane.f32.xlu0 %v2438
        %v2440 = vpop.xlane.xlu0 %2439
        %v2441 = vsub.f32 %v2437, %v2440
        %v2442 = vmul.f32 %v2441, 1.442695
        %v2443 = vpow.pop %v2442
        %v2444 = vsel %vm602, %v2443, 0.0
        %2445 = vadd.xlane.f32.xlu0 %v2444
        %v2446 = vpop.xlane.xlu0 %2445
        %v2447 = vrcp.pop %v2446
        %v2448 = vmul.f32 %v2443, %v2447
        %2449 = vrot.lane.b32.xlu0 %v1874, 96
        %v2450 = vpop.permute.xlu0 %2449
        %v2453 = vsel %vm602, %v2448, 0
        %2455 = vmatprep.subr.mxu0 0.0
        %2456 = vmatpush1.msra.mxu0 %v2450
        %2457 = vmatprep.subr.mxu0 0.0
        %2458 = vmatpush1.msra.mxu0 0.0
        %2459 = vmatprep.subr.mxu0 0.0
        %2460 = vmatpush1.msra.mxu0 0.0
        %2461 = vmatprep.subr.mxu0 0.0
        %2462 = vmatpush1.msra.mxu0 0.0
        %2463 = vmatprep.subr.mxu0 0.0
        %2464 = vmatpush1.msra.mxu0 0.0
        %2465 = vmatprep.subr.mxu0 0.0
        %2466 = vmatpush1.msra.mxu0 0.0
        %2467 = vmatprep.subr.mxu0 0.0
        %2468 = vmatpush1.msra.mxu0 0.0
        %2469 = vmatprep.subr.mxu0 0.0
        %2470 = vmatpush1.msra.mxu0 0.0
        %2471 = vmatprep.subr.mxu0 0.0
        %2472 = vmatpush1.msra.mxu0 0.0
        %2473 = vmatprep.subr.mxu0 0.0
        %2474 = vmatpush1.msra.mxu0 0.0
        %2475 = vmatprep.subr.mxu0 0.0
        %2476 = vmatpush1.msra.mxu0 0.0
        %2477 = vmatprep.subr.mxu0 0.0
        %2478 = vmatpush1.msra.mxu0 0.0
        %2479 = vmatprep.subr.mxu0 0.0
        %2480 = vmatpush1.msra.mxu0 0.0
        %2481 = vmatprep.subr.mxu0 0.0
        %2482 = vmatpush1.msra.mxu0 0.0
        %2483 = vmatprep.subr.mxu0 0.0
        %2484 = vmatpush1.msra.mxu0 0.0
        %2485 = vmatprep.subr.mxu0 0.0
        %2486 = vmatpush1.msra.mxu0 0.0
        %2487 = vmatprep.subr.mxu0 0.0
        %2488 = vmatpush1.msra.mxu0 0.0
        %2489 = vmatprep.subr.mxu0 0.0
        %2490 = vmatpush1.msra.mxu0 0.0
        %2491 = vmatprep.subr.mxu0 0.0
        %2492 = vmatpush1.msra.mxu0 0.0
        %2493 = vmatprep.subr.mxu0 0.0
        %2494 = vmatpush1.msra.mxu0 0.0
        %2495 = vmatprep.subr.mxu0 0.0
        %2496 = vmatpush1.msra.mxu0 0.0
        %2497 = vmatprep.subr.mxu0 0.0
        %2498 = vmatpush1.msra.mxu0 0.0
        %2499 = vmatprep.subr.mxu0 0.0
        %2500 = vmatpush1.msra.mxu0 0.0
        %2501 = vmatprep.subr.mxu0 0.0
        %2502 = vmatpush1.msra.mxu0 0.0
        %2503 = vmatprep.subr.mxu0 0.0
        %2504 = vmatpush1.msra.mxu0 0.0
        %2505 = vmatprep.subr.mxu0 0.0
        %2506 = vmatpush1.msra.mxu0 0.0
        %2507 = vmatprep.subr.mxu0 0.0
        %2508 = vmatpush1.msra.mxu0 0.0
        %2509 = vmatprep.subr.mxu0 0.0
        %2510 = vmatpush1.msra.mxu0 0.0
        %2511 = vmatprep.subr.mxu0 0.0
        %2512 = vmatpush1.msra.mxu0 0.0
        %2513 = vmatprep.subr.mxu0 0.0
        %2514 = vmatpush1.msra.mxu0 0.0
        %2515 = vmatprep.subr.mxu0 0.0
        %2516 = vmatpush1.msra.mxu0 0.0
        %2517 = vmatprep.subr.mxu0 0.0
        %2518 = vmatpush1.msra.mxu0 0.0
        %2519 = vmatprep.mubr.f32.mxu0 0.0
        %2520 = vmatmul.mubr.f32.gmra.mrb[0].mxu0 %v2453
        %v2521 = vpop.f32.mrb[0].mxu0
        %v2522 = vadd.f32 0.0, %v2521
        %v2523 = vpop.f32.mrb[0].mxu0
        %2524 = vdwg.mxu0
        %v2525 = vld [vmem:[%s2039 + $0x20] sm:$0xff]
        %v2526 = vld [vmem:[%s2039 + $0x28] sm:$0xff]
        %v2528 = vsel %vm525, %v2522, 0
        %2530 = vmatprep.subr.mxu0 0.0
        %2531 = vmatpush1.msra.mxu0 %v2525
        %2532 = vmatprep.subr.mxu0 0.0
        %2533 = vmatpush1.msra.mxu0 %v2526
        %2534 = vmatprep.subr.mxu0 0.0
        %2535 = vmatpush1.msra.mxu0 0.0
        %2536 = vmatprep.subr.mxu0 0.0
        %2537 = vmatpush1.msra.mxu0 0.0
        %2538 = vmatprep.subr.mxu0 0.0
        %2539 = vmatpush1.msra.mxu0 0.0
        %2540 = vmatprep.subr.mxu0 0.0
        %2541 = vmatpush1.msra.mxu0 0.0
        %2542 = vmatprep.subr.mxu0 0.0
        %2543 = vmatpush1.msra.mxu0 0.0
        %2544 = vmatprep.subr.mxu0 0.0
        %2545 = vmatpush1.msra.mxu0 0.0
        %2546 = vmatprep.subr.mxu0 0.0
        %2547 = vmatpush1.msra.mxu0 0.0
        %2548 = vmatprep.subr.mxu0 0.0
        %2549 = vmatpush1.msra.mxu0 0.0
        %2550 = vmatprep.subr.mxu0 0.0
        %2551 = vmatpush1.msra.mxu0 0.0
        %2552 = vmatprep.subr.mxu0 0.0
        %2553 = vmatpush1.msra.mxu0 0.0
        %2554 = vmatprep.subr.mxu0 0.0
        %2555 = vmatpush1.msra.mxu0 0.0
        %2556 = vmatprep.subr.mxu0 0.0
        %2557 = vmatpush1.msra.mxu0 0.0
        %2558 = vmatprep.subr.mxu0 0.0
        %2559 = vmatpush1.msra.mxu0 0.0
        %2560 = vmatprep.subr.mxu0 0.0
        %2561 = vmatpush1.msra.mxu0 0.0
        %2562 = vmatprep.subr.mxu0 0.0
        %2563 = vmatpush1.msra.mxu0 0.0
        %2564 = vmatprep.subr.mxu0 0.0
        %2565 = vmatpush1.msra.mxu0 0.0
        %2566 = vmatprep.subr.mxu0 0.0
        %2567 = vmatpush1.msra.mxu0 0.0
        %2568 = vmatprep.subr.mxu0 0.0
        %2569 = vmatpush1.msra.mxu0 0.0
        %2570 = vmatprep.subr.mxu0 0.0
        %2571 = vmatpush1.msra.mxu0 0.0
        %2572 = vmatprep.subr.mxu0 0.0
        %2573 = vmatpush1.msra.mxu0 0.0
        %2574 = vmatprep.subr.mxu0 0.0
        %2575 = vmatpush1.msra.mxu0 0.0
        %2576 = vmatprep.subr.mxu0 0.0
        %2577 = vmatpush1.msra.mxu0 0.0
        %2578 = vmatprep.subr.mxu0 0.0
        %2579 = vmatpush1.msra.mxu0 0.0
        %2580 = vmatprep.subr.mxu0 0.0
        %2581 = vmatpush1.msra.mxu0 0.0
        %2582 = vmatprep.subr.mxu0 0.0
        %2583 = vmatpush1.msra.mxu0 0.0
        %2584 = vmatprep.subr.mxu0 0.0
        %2585 = vmatpush1.msra.mxu0 0.0
        %2586 = vmatprep.subr.mxu0 0.0
        %2587 = vmatpush1.msra.mxu0 0.0
        %2588 = vmatprep.subr.mxu0 0.0
        %2589 = vmatpush1.msra.mxu0 0.0
        %2590 = vmatprep.subr.mxu0 0.0
        %2591 = vmatpush1.msra.mxu0 0.0
        %2592 = vmatprep.subr.mxu0 0.0
        %2593 = vmatpush1.msra.mxu0 0.0
        %2594 = vmatprep.mubr.f32.mxu0 0.0
        %2595 = vmatmul.mubr.f32.gmra.mrb[0].mxu0 %v2528
        %v2596 = vpop.f32.mrb[0].mxu0
        %v2597 = vadd.f32 0.0, %v2596
        %v2598 = vpop.f32.mrb[0].mxu0
        %2599 = vdwg.mxu0
        %v2600 = vadd.f32 %v2355, %v2597
        %2601 = vrot.lane.b32.xlu0 %v1872, 80
        %v2602 = vpop.permute.xlu0 %2601
        %2603 = vrot.lane.b32.xlu0 %v1872, 16
        %v2604 = vpop.permute.xlu0 %2603
        %v2605 = vsel %vm525, %v2602, 0
        %v2607 = vsel %vm525, %v2604, 0
        %2609 = vmatprep.subr.mxu0 0.0
        %2610 = vmatpush1.xpose.msra.mxu0 %v2607
        %2611 = vmatprep.subr.mxu0 0.0
        %2612 = vmatpush1.xpose.msra.mxu0 0.0
        %2613 = vmatprep.subr.mxu0 0.0
        %2614 = vmatpush1.xpose.msra.mxu0 0.0
        %2615 = vmatprep.subr.mxu0 0.0
        %2616 = vmatpush1.xpose.msra.mxu0 0.0
        %2617 = vmatprep.subr.mxu0 0.0
        %2618 = vmatpush1.xpose.msra.mxu0 0.0
        %2619 = vmatprep.subr.mxu0 0.0
        %2620 = vmatpush1.xpose.msra.mxu0 0.0
        %2621 = vmatprep.subr.mxu0 0.0
        %2622 = vmatpush1.xpose.msra.mxu0 0.0
        %2623 = vmatprep.subr.mxu0 0.0
        %2624 = vmatpush1.xpose.msra.mxu0 0.0
        %2625 = vmatprep.subr.mxu0 0.0
        %2626 = vmatpush1.xpose.msra.mxu0 0.0
        %2627 = vmatprep.subr.mxu0 0.0
        %2628 = vmatpush1.xpose.msra.mxu0 0.0
        %2629 = vmatprep.subr.mxu0 0.0
        %2630 = vmatpush1.xpose.msra.mxu0 0.0
        %2631 = vmatprep.subr.mxu0 0.0
        %2632 = vmatpush1.xpose.msra.mxu0 0.0
        %2633 = vmatprep.subr.mxu0 0.0
        %2634 = vmatpush1.xpose.msra.mxu0 0.0
        %2635 = vmatprep.subr.mxu0 0.0
        %2636 = vmatpush1.xpose.msra.mxu0 0.0
        %2637 = vmatprep.subr.mxu0 0.0
        %2638 = vmatpush1.xpose.msra.mxu0 0.0
        %2639 = vmatprep.subr.mxu0 0.0
        %2640 = vmatpush1.xpose.msra.mxu0 0.0
        %2641 = vmatprep.subr.mxu0 0.0
        %2642 = vmatpush1.xpose.msra.mxu0 0.0
        %2643 = vmatprep.subr.mxu0 0.0
        %2644 = vmatpush1.xpose.msra.mxu0 0.0
        %2645 = vmatprep.subr.mxu0 0.0
        %2646 = vmatpush1.xpose.msra.mxu0 0.0
        %2647 = vmatprep.subr.mxu0 0.0
        %2648 = vmatpush1.xpose.msra.mxu0 0.0
        %2649 = vmatprep.subr.mxu0 0.0
        %2650 = vmatpush1.xpose.msra.mxu0 0.0
        %2651 = vmatprep.subr.mxu0 0.0
        %2652 = vmatpush1.xpose.msra.mxu0 0.0
        %2653 = vmatprep.subr.mxu0 0.0
        %2654 = vmatpush1.xpose.msra.mxu0 0.0
        %2655 = vmatprep.subr.mxu0 0.0
        %2656 = vmatpush1.xpose.msra.mxu0 0.0
        %2657 = vmatprep.subr.mxu0 0.0
        %2658 = vmatpush1.xpose.msra.mxu0 0.0
        %2659 = vmatprep.subr.mxu0 0.0
        %2660 = vmatpush1.xpose.msra.mxu0 0.0
        %2661 = vmatprep.subr.mxu0 0.0
        %2662 = vmatpush1.xpose.msra.mxu0 0.0
        %2663 = vmatprep.subr.mxu0 0.0
        %2664 = vmatpush1.xpose.msra.mxu0 0.0
        %2665 = vmatprep.subr.mxu0 0.0
        %2666 = vmatpush1.xpose.msra.mxu0 0.0
        %2667 = vmatprep.subr.mxu0 0.0
        %2668 = vmatpush1.xpose.msra.mxu0 0.0
        %2669 = vmatprep.subr.mxu0 0.0
        %2670 = vmatpush1.xpose.msra.mxu0 0.0
        %2671 = vmatprep.subr.mxu0 0.0
        %2672 = vmatpush1.xpose.msra.mxu0 0.0
        %2673 = vmatprep.mubr.f32.mxu0 0.0
        %2674 = vmatmul.mubr.f32.gmra.mrb[0].mxu0 %v2605
        %v2675 = vpop.f32.mrb[0].mxu0
        %v2676 = vadd.f32 0.0, %v2675
        %v2677 = vpop.f32.mrb[0].mxu0
        %2678 = vdwg.mxu0
        %v2679 = vmul.f32 %v2676, 0.25
        %v2680 = vsel %vm393, %v2679, -1e+30
        %v2681 = vsel %vm602, %v2680, -inf
        %2682 = vmax.xlane.f32.xlu0 %v2681
        %v2683 = vpop.xlane.xlu0 %2682
        %v2684 = vsub.f32 %v2680, %v2683
        %v2685 = vmul.f32 %v2684, 1.442695
        %v2686 = vpow.pop %v2685
        %v2687 = vsel %vm602, %v2686, 0.0
        %2688 = vadd.xlane.f32.xlu0 %v2687
        %v2689 = vpop.xlane.xlu0 %2688
        %v2690 = vrcp.pop %v2689
        %v2691 = vmul.f32 %v2686, %v2690
        %2692 = vrot.lane.b32.xlu0 %v1874, 80
        %v2693 = vpop.permute.xlu0 %2692
        %v2696 = vsel %vm602, %v2691, 0
        %2698 = vmatprep.subr.mxu0 0.0
        %2699 = vmatpush1.msra.mxu0 %v2693
        %2700 = vmatprep.subr.mxu0 0.0
        %2701 = vmatpush1.msra.mxu0 0.0
        %2702 = vmatprep.subr.mxu0 0.0
        %2703 = vmatpush1.msra.mxu0 0.0
        %2704 = vmatprep.subr.mxu0 0.0
        %2705 = vmatpush1.msra.mxu0 0.0
        %2706 = vmatprep.subr.mxu0 0.0
        %2707 = vmatpush1.msra.mxu0 0.0
        %2708 = vmatprep.subr.mxu0 0.0
        %2709 = vmatpush1.msra.mxu0 0.0
        %2710 = vmatprep.subr.mxu0 0.0
        %2711 = vmatpush1.msra.mxu0 0.0
        %2712 = vmatprep.subr.mxu0 0.0
        %2713 = vmatpush1.msra.mxu0 0.0
        %2714 = vmatprep.subr.mxu0 0.0
        %2715 = vmatpush1.msra.mxu0 0.0
        %2716 = vmatprep.subr.mxu0 0.0
        %2717 = vmatpush1.msra.mxu0 0.0
        %2718 = vmatprep.subr.mxu0 0.0
        %2719 = vmatpush1.msra.mxu0 0.0
        %2720 = vmatprep.subr.mxu0 0.0
        %2721 = vmatpush1.msra.mxu0 0.0
        %2722 = vmatprep.subr.mxu0 0.0
        %2723 = vmatpush1.msra.mxu0 0.0
        %2724 = vmatprep.subr.mxu0 0.0
        %2725 = vmatpush1.msra.mxu0 0.0
        %2726 = vmatprep.subr.mxu0 0.0
        %2727 = vmatpush1.msra.mxu0 0.0
        %2728 = vmatprep.subr.mxu0 0.0
        %2729 = vmatpush1.msra.mxu0 0.0
        %2730 = vmatprep.subr.mxu0 0.0
        %2731 = vmatpush1.msra.mxu0 0.0
        %2732 = vmatprep.subr.mxu0 0.0
        %2733 = vmatpush1.msra.mxu0 0.0
        %2734 = vmatprep.subr.mxu0 0.0
        %2735 = vmatpush1.msra.mxu0 0.0
        %2736 = vmatprep.subr.mxu0 0.0
        %2737 = vmatpush1.msra.mxu0 0.0
        %2738 = vmatprep.subr.mxu0 0.0
        %2739 = vmatpush1.msra.mxu0 0.0
        %2740 = vmatprep.subr.mxu0 0.0
        %2741 = vmatpush1.msra.mxu0 0.0
        %2742 = vmatprep.subr.mxu0 0.0
        %2743 = vmatpush1.msra.mxu0 0.0
        %2744 = vmatprep.subr.mxu0 0.0
        %2745 = vmatpush1.msra.mxu0 0.0
        %2746 = vmatprep.subr.mxu0 0.0
        %2747 = vmatpush1.msra.mxu0 0.0
        %2748 = vmatprep.subr.mxu0 0.0
        %2749 = vmatpush1.msra.mxu0 0.0
        %2750 = vmatprep.subr.mxu0 0.0
        %2751 = vmatpush1.msra.mxu0 0.0
        %2752 = vmatprep.subr.mxu0 0.0
        %2753 = vmatpush1.msra.mxu0 0.0
        %2754 = vmatprep.subr.mxu0 0.0
        %2755 = vmatpush1.msra.mxu0 0.0
        %2756 = vmatprep.subr.mxu0 0.0
        %2757 = vmatpush1.msra.mxu0 0.0
        %2758 = vmatprep.subr.mxu0 0.0
        %2759 = vmatpush1.msra.mxu0 0.0
        %2760 = vmatprep.subr.mxu0 0.0
        %2761 = vmatpush1.msra.mxu0 0.0
        %2762 = vmatprep.mubr.f32.mxu0 0.0
        %2763 = vmatmul.mubr.f32.gmra.mrb[0].mxu0 %v2696
        %v2764 = vpop.f32.mrb[0].mxu0
        %v2765 = vadd.f32 0.0, %v2764
        %v2766 = vpop.f32.mrb[0].mxu0
        %2767 = vdwg.mxu0
        %v2768 = vld [vmem:[%s2039 + $0x30] sm:$0xff]
        %v2769 = vld [vmem:[%s2039 + $0x38] sm:$0xff]
        %v2771 = vsel %vm525, %v2765, 0
        %2773 = vmatprep.subr.mxu0 0.0
        %2774 = vmatpush1.msra.mxu0 %v2768
        %2775 = vmatprep.subr.mxu0 0.0
        %2776 = vmatpush1.msra.mxu0 %v2769
        %2777 = vmatprep.subr.mxu0 0.0
        %2778 = vmatpush1.msra.mxu0 0.0
        %2779 = vmatprep.subr.mxu0 0.0
        %2780 = vmatpush1.msra.mxu0 0.0
        %2781 = vmatprep.subr.mxu0 0.0
        %2782 = vmatpush1.msra.mxu0 0.0
        %2783 = vmatprep.subr.mxu0 0.0
        %2784 = vmatpush1.msra.mxu0 0.0
        %2785 = vmatprep.subr.mxu0 0.0
        %2786 = vmatpush1.msra.mxu0 0.0
        %2787 = vmatprep.subr.mxu0 0.0
        %2788 = vmatpush1.msra.mxu0 0.0
        %2789 = vmatprep.subr.mxu0 0.0
        %2790 = vmatpush1.msra.mxu0 0.0
        %2791 = vmatprep.subr.mxu0 0.0
        %2792 = vmatpush1.msra.mxu0 0.0
        %2793 = vmatprep.subr.mxu0 0.0
        %2794 = vmatpush1.msra.mxu0 0.0
        %2795 = vmatprep.subr.mxu0 0.0
        %2796 = vmatpush1.msra.mxu0 0.0
        %2797 = vmatprep.subr.mxu0 0.0
        %2798 = vmatpush1.msra.mxu0 0.0
        %2799 = vmatprep.subr.mxu0 0.0
        %2800 = vmatpush1.msra.mxu0 0.0
        %2801 = vmatprep.subr.mxu0 0.0
        %2802 = vmatpush1.msra.mxu0 0.0
        %2803 = vmatprep.subr.mxu0 0.0
        %2804 = vmatpush1.msra.mxu0 0.0
        %2805 = vmatprep.subr.mxu0 0.0
        %2806 = vmatpush1.msra.mxu0 0.0
        %2807 = vmatprep.subr.mxu0 0.0
        %2808 = vmatpush1.msra.mxu0 0.0
        %2809 = vmatprep.subr.mxu0 0.0
        %2810 = vmatpush1.msra.mxu0 0.0
        %2811 = vmatprep.subr.mxu0 0.0
        %2812 = vmatpush1.msra.mxu0 0.0
        %2813 = vmatprep.subr.mxu0 0.0
        %2814 = vmatpush1.msra.mxu0 0.0
        %2815 = vmatprep.subr.mxu0 0.0
        %2816 = vmatpush1.msra.mxu0 0.0
        %2817 = vmatprep.subr.mxu0 0.0
        %2818 = vmatpush1.msra.mxu0 0.0
        %2819 = vmatprep.subr.mxu0 0.0
        %2820 = vmatpush1.msra.mxu0 0.0
        %2821 = vmatprep.subr.mxu0 0.0
        %2822 = vmatpush1.msra.mxu0 0.0
        %2823 = vmatprep.subr.mxu0 0.0
        %2824 = vmatpush1.msra.mxu0 0.0
        %2825 = vmatprep.subr.mxu0 0.0
        %2826 = vmatpush1.msra.mxu0 0.0
        %2827 = vmatprep.subr.mxu0 0.0
        %2828 = vmatpush1.msra.mxu0 0.0
        %2829 = vmatprep.subr.mxu0 0.0
        %2830 = vmatpush1.msra.mxu0 0.0
        %2831 = vmatprep.subr.mxu0 0.0
        %2832 = vmatpush1.msra.mxu0 0.0
        %2833 = vmatprep.subr.mxu0 0.0
        %2834 = vmatpush1.msra.mxu0 0.0
        %2835 = vmatprep.subr.mxu0 0.0
        %2836 = vmatpush1.msra.mxu0 0.0
        %2837 = vmatprep.mubr.f32.mxu0 0.0
        %2838 = vmatmul.mubr.f32.gmra.mrb[0].mxu0 %v2771
        %v2839 = vpop.f32.mrb[0].mxu0
        %v2840 = vadd.f32 0.0, %v2839
        %v2841 = vpop.f32.mrb[0].mxu0
        %2842 = vdwg.mxu0
        %v2843 = vadd.f32 %v2600, %v2840
        %v2844 = vlaneseq
        %v2845 = vshrl.u32 %v2844, 7
        %v2846 = vsub.s32 4, %v2845
        %v2847 = vrot.slane %v1748, %v2846
        %v2848 = vadd.f32 %v2843, %v2847
        %v2849 = vadd.f32 %v1746, %v2848
        %v2850 = vsel %vm395, %v2849, 0.0
        %2851 = vadd.xlane.f32.xlu0 %v2850
        %v2852 = vpop.xlane.xlu0 %2851
        %v2853 = vmul.f32 %v2852, %v399
        %v2854 = vsub.f32 %v2849, %v2853
        %v2855 = vmul.f32 %v2854, %v2854
        %v2856 = vsel %vm395, %v2855, 0.0
        %2857 = vadd.xlane.f32.xlu0 %v2856
        %v2858 = vpop.xlane.xlu0 %2857
        %v2859 = vmul.f32 %v2858, %v399
        %v2860 = vadd.f32 %v2859, 1e-05
        %v2861 = vrsqrt.pop %v2860
        %v2862 = vmul.f32 %v2854, %v2861
        %v2863 = vlaneseq
        %v2864 = vshrl.u32 %v2863, 7
        %v2865 = vsub.s32 2, %v2864
        %v2866 = vrot.slane %v1748, %v2865
        %v2867 = vmul.f32 %v2862, %v2866
        %v2868 = vlaneseq
        %v2869 = vshrl.u32 %v2868, 7
        %v2870 = vsub.s32 3, %v2869
        %v2871 = vrot.slane %v1748, %v2870
        %v2872 = vadd.f32 %v2867, %v2871
        %s2873 = scalar_lea.vmem %s8, 128
        %v2874 = vld [vmem:[%s2873] sm:$0xff]
        %v2875 = vld [vmem:[%s2873 + $0x8] sm:$0xff]
        %v2876 = vld [vmem:[%s2873 + $0x10] sm:$0xff]
        %v2877 = vld [vmem:[%s2873 + $0x18] sm:$0xff]
        %v2878 = vld [vmem:[%s2873 + $0x20] sm:$0xff]
        %v2879 = vld [vmem:[%s2873 + $0x28] sm:$0xff]
        %v2880 = vld [vmem:[%s2873 + $0x30] sm:$0xff]
        %v2881 = vld [vmem:[%s2873 + $0x38] sm:$0xff]
        %v2882 = vld [vmem:[%s2873 + $0x40] sm:$0xff]
        %v2883 = vld [vmem:[%s2873 + $0x48] sm:$0xff]
        %v2884 = vld [vmem:[%s2873 + $0x50] sm:$0xff]
        %v2885 = vld [vmem:[%s2873 + $0x58] sm:$0xff]
        %v2886 = vld [vmem:[%s2873 + $0x60] sm:$0xff]
        %v2887 = vld [vmem:[%s2873 + $0x68] sm:$0xff]
        %v2888 = vld [vmem:[%s2873 + $0x70] sm:$0xff]
        %v2889 = vld [vmem:[%s2873 + $0x78] sm:$0xff]
        %s2890 = scalar_lea.vmem %s9, 2
        %v2891 = vld [vmem:[%s2890] sm:$0x3]
        %v2893 = vlaneseq
        %v2894 = vshrl.u32 %v2893, 7
        %v2895 = vsub.s32 0, %v2894
        %v2896 = vrot.slane %v2891, %v2895
        %v2897 = vlaneseq
        %v2898 = vshrl.u32 %v2897, 7
        %v2899 = vsub.s32 1, %v2898
        %v2900 = vrot.slane %v2891, %v2899
        %v2904 = vsel %vm395, %v2872, 0
        %2906 = vmatprep.subr.mxu0 %v2875
        %2907 = vmatpush1.msra.mxu0 %v2874
        %2908 = vmatprep.subr.mxu0 %v2877
        %2909 = vmatpush1.msra.mxu0 %v2876
        %2910 = vmatprep.subr.mxu0 %v2879
        %2911 = vmatpush1.msra.mxu0 %v2878
        %2912 = vmatprep.subr.mxu0 %v2881
        %2913 = vmatpush1.msra.mxu0 %v2880
        %2914 = vmatprep.subr.mxu0 %v2883
        %2915 = vmatpush1.msra.mxu0 %v2882
        %2916 = vmatprep.subr.mxu0 %v2885
        %2917 = vmatpush1.msra.mxu0 %v2884
        %2918 = vmatprep.subr.mxu0 %v2887
        %2919 = vmatpush1.msra.mxu0 %v2886
        %2920 = vmatprep.subr.mxu0 %v2889
        %2921 = vmatpush1.msra.mxu0 %v2888
        %2922 = vmatprep.subr.mxu0 0.0
        %2923 = vmatpush1.msra.mxu0 0.0
        %2924 = vmatprep.subr.mxu0 0.0
        %2925 = vmatpush1.msra.mxu0 0.0
        %2926 = vmatprep.subr.mxu0 0.0
        %2927 = vmatpush1.msra.mxu0 0.0
        %2928 = vmatprep.subr.mxu0 0.0
        %2929 = vmatpush1.msra.mxu0 0.0
        %2930 = vmatprep.subr.mxu0 0.0
        %2931 = vmatpush1.msra.mxu0 0.0
        %2932 = vmatprep.subr.mxu0 0.0
        %2933 = vmatpush1.msra.mxu0 0.0
        %2934 = vmatprep.subr.mxu0 0.0
        %2935 = vmatpush1.msra.mxu0 0.0
        %2936 = vmatprep.subr.mxu0 0.0
        %2937 = vmatpush1.msra.mxu0 0.0
        %2938 = vmatprep.subr.mxu0 0.0
        %2939 = vmatpush1.msra.mxu0 0.0
        %2940 = vmatprep.subr.mxu0 0.0
        %2941 = vmatpush1.msra.mxu0 0.0
        %2942 = vmatprep.subr.mxu0 0.0
        %2943 = vmatpush1.msra.mxu0 0.0
        %2944 = vmatprep.subr.mxu0 0.0
        %2945 = vmatpush1.msra.mxu0 0.0
        %2946 = vmatprep.subr.mxu0 0.0
        %2947 = vmatpush1.msra.mxu0 0.0
        %2948 = vmatprep.subr.mxu0 0.0
        %2949 = vmatpush1.msra.mxu0 0.0
        %2950 = vmatprep.subr.mxu0 0.0
        %2951 = vmatpush1.msra.mxu0 0.0
        %2952 = vmatprep.subr.mxu0 0.0
        %2953 = vmatpush1.msra.mxu0 0.0
        %2954 = vmatprep.subr.mxu0 0.0
        %2955 = vmatpush1.msra.mxu0 0.0
        %2956 = vmatprep.subr.mxu0 0.0
        %2957 = vmatpush1.msra.mxu0 0.0
        %2958 = vmatprep.subr.mxu0 0.0
        %2959 = vmatpush1.msra.mxu0 0.0
        %2960 = vmatprep.subr.mxu0 0.0
        %2961 = vmatpush1.msra.mxu0 0.0
        %2962 = vmatprep.subr.mxu0 0.0
        %2963 = vmatpush1.msra.mxu0 0.0
        %2964 = vmatprep.subr.mxu0 0.0
        %2965 = vmatpush1.msra.mxu0 0.0
        %2966 = vmatprep.subr.mxu0 0.0
        %2967 = vmatpush1.msra.mxu0 0.0
        %2968 = vmatprep.subr.mxu0 0.0
        %2969 = vmatpush1.msra.mxu0 0.0
        %2970 = vmatprep.mubr.f32.mxu0 0.0
        %2971 = vmatmul.mubr.f32.gmra.mrb[0].mxu0 %v2904
        %v2972 = vpop.f32.mrb[0].mxu0
        %v2973 = vadd.f32 %v2896, %v2972
        %v2974 = vpop.f32.mrb[0].mxu0
        %v2975 = vadd.f32 %v2900, %v2974
        %2976 = vdwg.mxu0
        %v2977 = vmul.f32 %v2973, 0.5
        %v2978 = vmul.f32 %v2975, 0.5
        %v2979 = vmul.f32 %v2973, %v2973
        %v2980 = vmul.f32 %v2975, %v2975
        %v2981 = vmul.f32 %v2979, %v2973
        %v2982 = vmul.f32 %v2980, %v2975
        %v2983 = vmul.f32 %v2981, 0.044715
        %v2984 = vmul.f32 %v2982, 0.044715
        %v2985 = vadd.f32 %v2973, %v2983
        %v2986 = vadd.f32 %v2975, %v2984
        %v2987 = vmul.f32 %v2985, 0.7978846
        %v2988 = vmul.f32 %v2986, 0.7978846
        %v2989 = vtanh.pop %v2987
        %v2990 = vtanh.pop %v2988
        %v2991 = vadd.f32 %v2989, 1.0
        %v2992 = vadd.f32 %v2990, 1.0
        %v2993 = vmul.f32 %v2977, %v2991
        %v2994 = vmul.f32 %v2978, %v2992
        %s2995 = scalar_lea.vmem %s10, 256
        %v2996 = vld [vmem:[%s2995] sm:$0xff]
        %v2997 = vld [vmem:[%s2995 + $0x8] sm:$0xff]
        %v2998 = vld [vmem:[%s2995 + $0x10] sm:$0xff]
        %v2999 = vld [vmem:[%s2995 + $0x18] sm:$0xff]
        %v3000 = vld [vmem:[%s2995 + $0x20] sm:$0xff]
        %v3001 = vld [vmem:[%s2995 + $0x28] sm:$0xff]
        %v3002 = vld [vmem:[%s2995 + $0x30] sm:$0xff]
        %v3003 = vld [vmem:[%s2995 + $0x38] sm:$0xff]
        %v3004 = vld [vmem:[%s2995 + $0x40] sm:$0xff]
        %v3005 = vld [vmem:[%s2995 + $0x48] sm:$0xff]
        %v3006 = vld [vmem:[%s2995 + $0x50] sm:$0xff]
        %v3007 = vld [vmem:[%s2995 + $0x58] sm:$0xff]
        %v3008 = vld [vmem:[%s2995 + $0x60] sm:$0xff]
        %v3009 = vld [vmem:[%s2995 + $0x68] sm:$0xff]
        %v3010 = vld [vmem:[%s2995 + $0x70] sm:$0xff]
        %v3011 = vld [vmem:[%s2995 + $0x78] sm:$0xff]
        %v3012 = vld [vmem:[%s2995 + $0x80] sm:$0xff]
        %v3013 = vld [vmem:[%s2995 + $0x88] sm:$0xff]
        %v3014 = vld [vmem:[%s2995 + $0x90] sm:$0xff]
        %v3015 = vld [vmem:[%s2995 + $0x98] sm:$0xff]
        %v3016 = vld [vmem:[%s2995 + $0xa0] sm:$0xff]
        %v3017 = vld [vmem:[%s2995 + $0xa8] sm:$0xff]
        %v3018 = vld [vmem:[%s2995 + $0xb0] sm:$0xff]
        %v3019 = vld [vmem:[%s2995 + $0xb8] sm:$0xff]
        %v3020 = vld [vmem:[%s2995 + $0xc0] sm:$0xff]
        %v3021 = vld [vmem:[%s2995 + $0xc8] sm:$0xff]
        %v3022 = vld [vmem:[%s2995 + $0xd0] sm:$0xff]
        %v3023 = vld [vmem:[%s2995 + $0xd8] sm:$0xff]
        %v3024 = vld [vmem:[%s2995 + $0xe0] sm:$0xff]
        %v3025 = vld [vmem:[%s2995 + $0xe8] sm:$0xff]
        %v3026 = vld [vmem:[%s2995 + $0xf0] sm:$0xff]
        %v3027 = vld [vmem:[%s2995 + $0xf8] sm:$0xff]
        %v3028 = vlaneseq
        %v3029 = vshrl.u32 %v3028, 7
        %v3030 = vsub.s32 5, %v3029
        %v3031 = vrot.slane %v1748, %v3030
        %3032 = vmatprep.subr.mxu0 0.0
        %3033 = vmatpush1.msra.mxu0 %v2996
        %3034 = vmatprep.subr.mxu0 0.0
        %3035 = vmatpush1.msra.mxu0 %v2997
        %3036 = vmatprep.subr.mxu0 0.0
        %3037 = vmatpush1.msra.mxu0 %v2998
        %3038 = vmatprep.subr.mxu0 0.0
        %3039 = vmatpush1.msra.mxu0 %v2999
        %3040 = vmatprep.subr.mxu0 0.0
        %3041 = vmatpush1.msra.mxu0 %v3000
        %3042 = vmatprep.subr.mxu0 0.0
        %3043 = vmatpush1.msra.mxu0 %v3001
        %3044 = vmatprep.subr.mxu0 0.0
        %3045 = vmatpush1.msra.mxu0 %v3002
        %3046 = vmatprep.subr.mxu0 0.0
        %3047 = vmatpush1.msra.mxu0 %v3003
        %3048 = vmatprep.subr.mxu0 0.0
        %3049 = vmatpush1.msra.mxu0 %v3004
        %3050 = vmatprep.subr.mxu0 0.0
        %3051 = vmatpush1.msra.mxu0 %v3005
        %3052 = vmatprep.subr.mxu0 0.0
        %3053 = vmatpush1.msra.mxu0 %v3006
        %3054 = vmatprep.subr.mxu0 0.0
        %3055 = vmatpush1.msra.mxu0 %v3007
        %3056 = vmatprep.subr.mxu0 0.0
        %3057 = vmatpush1.msra.mxu0 %v3008
        %3058 = vmatprep.subr.mxu0 0.0
        %3059 = vmatpush1.msra.mxu0 %v3009
        %3060 = vmatprep.subr.mxu0 0.0
        %3061 = vmatpush1.msra.mxu0 %v3010
        %3062 = vmatprep.subr.mxu0 0.0
        %3063 = vmatpush1.msra.mxu0 %v3011
        %3064 = vmatprep.subr.mxu0 0.0
        %3065 = vmatpush1.msra.mxu0 %v3012
        %3066 = vmatprep.subr.mxu0 0.0
        %3067 = vmatpush1.msra.mxu0 %v3013
        %3068 = vmatprep.subr.mxu0 0.0
        %3069 = vmatpush1.msra.mxu0 %v3014
        %3070 = vmatprep.subr.mxu0 0.0
        %3071 = vmatpush1.msra.mxu0 %v3015
        %3072 = vmatprep.subr.mxu0 0.0
        %3073 = vmatpush1.msra.mxu0 %v3016
        %3074 = vmatprep.subr.mxu0 0.0
        %3075 = vmatpush1.msra.mxu0 %v3017
        %3076 = vmatprep.subr.mxu0 0.0
        %3077 = vmatpush1.msra.mxu0 %v3018
        %3078 = vmatprep.subr.mxu0 0.0
        %3079 = vmatpush1.msra.mxu0 %v3019
        %3080 = vmatprep.subr.mxu0 0.0
        %3081 = vmatpush1.msra.mxu0 %v3020
        %3082 = vmatprep.subr.mxu0 0.0
        %3083 = vmatpush1.msra.mxu0 %v3021
        %3084 = vmatprep.subr.mxu0 0.0
        %3085 = vmatpush1.msra.mxu0 %v3022
        %3086 = vmatprep.subr.mxu0 0.0
        %3087 = vmatpush1.msra.mxu0 %v3023
        %3088 = vmatprep.subr.mxu0 0.0
        %3089 = vmatpush1.msra.mxu0 %v3024
        %3090 = vmatprep.subr.mxu0 0.0
        %3091 = vmatpush1.msra.mxu0 %v3025
        %3092 = vmatprep.subr.mxu0 0.0
        %3093 = vmatpush1.msra.mxu0 %v3026
        %3094 = vmatprep.subr.mxu0 0.0
        %3095 = vmatpush1.msra.mxu0 %v3027
        %3096 = vmatprep.mubr.f32.mxu0 %v2994
        %3097 = vmatmul.mubr.f32.gmra.mrb[0].mxu0 %v2993
        %v3098 = vpop.f32.mrb[0].mxu0
        %v3099 = vadd.f32 %v3031, %v3098
        %v3100 = vpop.f32.mrb[0].mxu0
        %3101 = vdwg.mxu0
        %v3102 = vadd.f32 %v2872, %v3099
        %v3103 = vld [vmem:[%s4] sm:$0x3]
        %vm3104 = vcmask 523271
        %v3105 = vsel %vm3104, %v3102, 0.0
        %3106 = vadd.xlane.f32.xlu0 %v3105
        %v3107 = vpop.xlane.xlu0 %3106
        %v3108 = vmul.f32 %v3107, %v399
        %v3109 = vsub.f32 %v3102, %v3108
        %v3110 = vmul.f32 %v3109, %v3109
        %v3111 = vsel %vm3104, %v3110, 0.0
        %3112 = vadd.xlane.f32.xlu0 %v3111
        %v3113 = vpop.xlane.xlu0 %3112
        %v3114 = vmul.f32 %v3113, %v399
        %v3115 = vadd.f32 %v3114, 1e-05
        %v3116 = vrsqrt.pop %v3115
        %v3117 = vmul.f32 %v3109, %v3116
        %v3119 = vrot.slane %v3103, 1
        %v3121 = vmul.f32 %v3117, %v3119
        %v3122 = vrot.slane %v3103, 2
        %v3124 = vadd.f32 %v3121, %v3122
        %v3125 = vld [vmem:[%s1] sm:$0xff]
        %v3126 = vld [vmem:[%s1 + $0x8] sm:$0xff]
        %v3127 = vld [vmem:[%s1 + $0x10] sm:$0xff]
        %v3128 = vld [vmem:[%s1 + $0x18] sm:$0xff]
        %v3129 = vld [vmem:[%s1 + $0x20] sm:$0xff]
        %v3130 = vld [vmem:[%s1 + $0x28] sm:$0xff]
        %v3131 = vld [vmem:[%s1 + $0x30] sm:$0xff]
        %v3132 = vld [vmem:[%s1 + $0x38] sm:$0xff]
        %v3133 = vld [vmem:[%s1 + $0x40] sm:$0xff]
        %v3134 = vld [vmem:[%s1 + $0x48] sm:$0xff]
        %v3135 = vld [vmem:[%s1 + $0x50] sm:$0xff]
        %v3136 = vld [vmem:[%s1 + $0x58] sm:$0xff]
        %v3137 = vld [vmem:[%s1 + $0x60] sm:$0xff]
        %v3138 = vld [vmem:[%s1 + $0x68] sm:$0xff]
        %v3139 = vld [vmem:[%s1 + $0x70] sm:$0xff]
        %v3140 = vld [vmem:[%s1 + $0x78] sm:$0xff]
        %v3141 = vld [vmem:[%s1 + $0x80] sm:$0xff]
        %v3142 = vld [vmem:[%s1 + $0x88] sm:$0xff]
        %v3143 = vld [vmem:[%s1 + $0x90] sm:$0xff]
        %v3144 = vld [vmem:[%s1 + $0x98] sm:$0xff]
        %v3145 = vld [vmem:[%s1 + $0xa0] sm:$0xff]
        %v3146 = vld [vmem:[%s1 + $0xa8] sm:$0xff]
        %v3147 = vld [vmem:[%s1 + $0xb0] sm:$0xff]
        %v3148 = vld [vmem:[%s1 + $0xb8] sm:$0xff]
        %v3149 = vld [vmem:[%s1 + $0xc0] sm:$0xff]
        %v3150 = vld [vmem:[%s1 + $0xc8] sm:$0xff]
        %v3151 = vld [vmem:[%s1 + $0xd0] sm:$0xff]
        %v3152 = vld [vmem:[%s1 + $0xd8] sm:$0xff]
        %v3153 = vld [vmem:[%s1 + $0xe0] sm:$0xff]
        %v3154 = vld [vmem:[%s1 + $0xe8] sm:$0xff]
        %v3155 = vld [vmem:[%s1 + $0xf0] sm:$0xff]
        %v3156 = vld [vmem:[%s1 + $0xf8] sm:$0xff]
        %v3157 = vld [vmem:[%s1 + $0x100] sm:$0xff]
        %v3158 = vld [vmem:[%s1 + $0x108] sm:$0xff]
        %v3159 = vld [vmem:[%s1 + $0x110] sm:$0xff]
        %v3160 = vld [vmem:[%s1 + $0x118] sm:$0xff]
        %v3161 = vld [vmem:[%s1 + $0x120] sm:$0xff]
        %v3162 = vld [vmem:[%s1 + $0x128] sm:$0xff]
        %v3163 = vld [vmem:[%s1 + $0x130] sm:$0xff]
        %v3164 = vld [vmem:[%s1 + $0x138] sm:$0xff]
        %v3165 = vld [vmem:[%s1 + $0x140] sm:$0xff]
        %v3166 = vld [vmem:[%s1 + $0x148] sm:$0xff]
        %v3167 = vld [vmem:[%s1 + $0x150] sm:$0xff]
        %v3168 = vld [vmem:[%s1 + $0x158] sm:$0xff]
        %v3169 = vld [vmem:[%s1 + $0x160] sm:$0xff]
        %v3170 = vld [vmem:[%s1 + $0x168] sm:$0xff]
        %v3171 = vld [vmem:[%s1 + $0x170] sm:$0xff]
        %v3172 = vld [vmem:[%s1 + $0x178] sm:$0xff]
        %v3173 = vld [vmem:[%s1 + $0x180] sm:$0xff]
        %v3174 = vld [vmem:[%s1 + $0x188] sm:$0xff]
        %v3175 = vld [vmem:[%s1 + $0x190] sm:$0xff]
        %v3176 = vld [vmem:[%s1 + $0x198] sm:$0xff]
        %v3177 = vld [vmem:[%s1 + $0x1a0] sm:$0xff]
        %v3178 = vld [vmem:[%s1 + $0x1a8] sm:$0xff]
        %v3179 = vld [vmem:[%s1 + $0x1b0] sm:$0xff]
        %v3180 = vld [vmem:[%s1 + $0x1b8] sm:$0xff]
        %v3181 = vld [vmem:[%s1 + $0x1c0] sm:$0xff]
        %v3182 = vld [vmem:[%s1 + $0x1c8] sm:$0xff]
        %v3183 = vld [vmem:[%s1 + $0x1d0] sm:$0xff]
        %v3184 = vld [vmem:[%s1 + $0x1d8] sm:$0xff]
        %v3185 = vld [vmem:[%s1 + $0x1e0] sm:$0xff]
        %v3186 = vld [vmem:[%s1 + $0x1e8] sm:$0xff]
        %v3187 = vld [vmem:[%s1 + $0x1f0] sm:$0xff]
        %v3188 = vld [vmem:[%s1 + $0x1f8] sm:$0xff]
        %v3190 = vrot.slane %v3124, 7
        %v3191 = vsel %vm395, %v3190, 0
        %v3194 = vsel %vm395, %v3125, 0
        %v3197 = vsel %vm395, %v3126, 0
        %v3200 = vsel %vm395, %v3127, 0
        %v3203 = vsel %vm395, %v3128, 0
        %v3206 = vsel %vm395, %v3129, 0
        %v3209 = vsel %vm395, %v3130, 0
        %v3212 = vsel %vm395, %v3131, 0
        %v3215 = vsel %vm395, %v3132, 0
        %v3218 = vsel %vm395, %v3133, 0
        %v3221 = vsel %vm395, %v3134, 0
        %v3224 = vsel %vm395, %v3135, 0
        %v3227 = vsel %vm395, %v3136, 0
        %v3230 = vsel %vm395, %v3137, 0
        %v3233 = vsel %vm395, %v3138, 0
        %v3236 = vsel %vm395, %v3139, 0
        %v3239 = vsel %vm395, %v3140, 0
        %v3242 = vsel %vm395, %v3141, 0
        %v3245 = vsel %vm395, %v3142, 0
        %v3248 = vsel %vm395, %v3143, 0
        %v3251 = vsel %vm395, %v3144, 0
        %v3254 = vsel %vm395, %v3145, 0
        %v3257 = vsel %vm395, %v3146, 0
        %v3260 = vsel %vm395, %v3147, 0
        %v3263 = vsel %vm395, %v3148, 0
        %v3266 = vsel %vm395, %v3149, 0
        %v3269 = vsel %vm395, %v3150, 0
        %v3272 = vsel %vm395, %v3151, 0
        %v3275 = vsel %vm395, %v3152, 0
        %v3278 = vsel %vm395, %v3153, 0
        %v3281 = vsel %vm395, %v3154, 0
        %v3284 = vsel %vm395, %v3155, 0
        %v3287 = vsel %vm395, %v3156, 0
        %v3290 = vsel %vm395, %v3157, 0
        %v3293 = vsel %vm395, %v3158, 0
        %v3296 = vsel %vm395, %v3159, 0
        %v3299 = vsel %vm395, %v3160, 0
        %v3302 = vsel %vm395, %v3161, 0
        %v3305 = vsel %vm395, %v3162, 0
        %v3308 = vsel %vm395, %v3163, 0
        %v3311 = vsel %vm395, %v3164, 0
        %v3314 = vsel %vm395, %v3165, 0
        %v3317 = vsel %vm395, %v3166, 0
        %v3320 = vsel %vm395, %v3167, 0
        %v3323 = vsel %vm395, %v3168, 0
        %v3326 = vsel %vm395, %v3169, 0
        %v3329 = vsel %vm395, %v3170, 0
        %v3332 = vsel %vm395, %v3171, 0
        %v3335 = vsel %vm395, %v3172, 0
        %v3338 = vsel %vm395, %v3173, 0
        %v3341 = vsel %vm395, %v3174, 0
        %v3344 = vsel %vm395, %v3175, 0
        %v3347 = vsel %vm395, %v3176, 0
        %v3350 = vsel %vm395, %v3177, 0
        %v3353 = vsel %vm395, %v3178, 0
        %v3356 = vsel %vm395, %v3179, 0
        %v3359 = vsel %vm395, %v3180, 0
        %v3362 = vsel %vm395, %v3181, 0
        %v3365 = vsel %vm395, %v3182, 0
        %v3368 = vsel %vm395, %v3183, 0
        %v3371 = vsel %vm395, %v3184, 0
        %v3374 = vsel %vm395, %v3185, 0
        %v3377 = vsel %vm395, %v3186, 0
        %v3380 = vsel %vm395, %v3187, 0
        %v3383 = vsel %vm395, %v3188, 0
        %3385 = vmatprep.subr.mxu0 0.0
        %3386 = vmatpush1.xpose.msra.mxu0 %v3194
        %3387 = vmatprep.subr.mxu0 0.0
        %3388 = vmatpush1.xpose.msra.mxu0 %v3197
        %3389 = vmatprep.subr.mxu0 0.0
        %3390 = vmatpush1.xpose.msra.mxu0 %v3200
        %3391 = vmatprep.subr.mxu0 0.0
        %3392 = vmatpush1.xpose.msra.mxu0 %v3203
        %3393 = vmatprep.subr.mxu0 0.0
        %3394 = vmatpush1.xpose.msra.mxu0 %v3206
        %3395 = vmatprep.subr.mxu0 0.0
        %3396 = vmatpush1.xpose.msra.mxu0 %v3209
        %3397 = vmatprep.subr.mxu0 0.0
        %3398 = vmatpush1.xpose.msra.mxu0 %v3212
        %3399 = vmatprep.subr.mxu0 0.0
        %3400 = vmatpush1.xpose.msra.mxu0 %v3215
        %3401 = vmatprep.subr.mxu0 0.0
        %3402 = vmatpush1.xpose.msra.mxu0 %v3218
        %3403 = vmatprep.subr.mxu0 0.0
        %3404 = vmatpush1.xpose.msra.mxu0 %v3221
        %3405 = vmatprep.subr.mxu0 0.0
        %3406 = vmatpush1.xpose.msra.mxu0 %v3224
        %3407 = vmatprep.subr.mxu0 0.0
        %3408 = vmatpush1.xpose.msra.mxu0 %v3227
        %3409 = vmatprep.subr.mxu0 0.0
        %3410 = vmatpush1.xpose.msra.mxu0 %v3230
        %3411 = vmatprep.subr.mxu0 0.0
        %3412 = vmatpush1.xpose.msra.mxu0 %v3233
        %3413 = vmatprep.subr.mxu0 0.0
        %3414 = vmatpush1.xpose.msra.mxu0 %v3236
        %3415 = vmatprep.subr.mxu0 0.0
        %3416 = vmatpush1.xpose.msra.mxu0 %v3239
        %3417 = vmatprep.subr.mxu0 0.0
        %3418 = vmatpush1.xpose.msra.mxu0 %v3242
        %3419 = vmatprep.subr.mxu0 0.0
        %3420 = vmatpush1.xpose.msra.mxu0 %v3245
        %3421 = vmatprep.subr.mxu0 0.0
        %3422 = vmatpush1.xpose.msra.mxu0 %v3248
        %3423 = vmatprep.subr.mxu0 0.0
        %3424 = vmatpush1.xpose.msra.mxu0 %v3251
        %3425 = vmatprep.subr.mxu0 0.0
        %3426 = vmatpush1.xpose.msra.mxu0 %v3254
        %3427 = vmatprep.subr.mxu0 0.0
        %3428 = vmatpush1.xpose.msra.mxu0 %v3257
        %3429 = vmatprep.subr.mxu0 0.0
        %3430 = vmatpush1.xpose.msra.mxu0 %v3260
        %3431 = vmatprep.subr.mxu0 0.0
        %3432 = vmatpush1.xpose.msra.mxu0 %v3263
        %3433 = vmatprep.subr.mxu0 0.0
        %3434 = vmatpush1.xpose.msra.mxu0 %v3266
        %3435 = vmatprep.subr.mxu0 0.0
        %3436 = vmatpush1.xpose.msra.mxu0 %v3269
        %3437 = vmatprep.subr.mxu0 0.0
        %3438 = vmatpush1.xpose.msra.mxu0 %v3272
        %3439 = vmatprep.subr.mxu0 0.0
        %3440 = vmatpush1.xpose.msra.mxu0 %v3275
        %3441 = vmatprep.subr.mxu0 0.0
        %3442 = vmatpush1.xpose.msra.mxu0 %v3278
        %3443 = vmatprep.subr.mxu0 0.0
        %3444 = vmatpush1.xpose.msra.mxu0 %v3281
        %3445 = vmatprep.subr.mxu0 0.0
        %3446 = vmatpush1.xpose.msra.mxu0 %v3284
        %3447 = vmatprep.subr.mxu0 0.0
        %3448 = vmatpush1.xpose.msra.mxu0 %v3287
        %3449 = vmatprep.mubr.f32.mxu0 0.0
        %3450 = vmatmul.mubr.f32.gmra.mrb[0].mxu0 %v3191
        %v3451 = vpop.f32.mrb[0].mxu0
        %v3452 = vadd.f32 0.0, %v3451
        %v3453 = vpop.f32.mrb[0].mxu0
        %v3454 = vadd.f32 0.0, %v3453
        %3455 = vdwg.mxu0
        %3456 = vmatprep.subr.mxu0 0.0
        %3457 = vmatpush1.xpose.msra.mxu0 %v3290
        %3458 = vmatprep.subr.mxu0 0.0
        %3459 = vmatpush1.xpose.msra.mxu0 %v3293
        %3460 = vmatprep.subr.mxu0 0.0
        %3461 = vmatpush1.xpose.msra.mxu0 %v3296
        %3462 = vmatprep.subr.mxu0 0.0
        %3463 = vmatpush1.xpose.msra.mxu0 %v3299
        %3464 = vmatprep.subr.mxu0 0.0
        %3465 = vmatpush1.xpose.msra.mxu0 %v3302
        %3466 = vmatprep.subr.mxu0 0.0
        %3467 = vmatpush1.xpose.msra.mxu0 %v3305
        %3468 = vmatprep.subr.mxu0 0.0
        %3469 = vmatpush1.xpose.msra.mxu0 %v3308
        %3470 = vmatprep.subr.mxu0 0.0
        %3471 = vmatpush1.xpose.msra.mxu0 %v3311
        %3472 = vmatprep.subr.mxu0 0.0
        %3473 = vmatpush1.xpose.msra.mxu0 %v3314
        %3474 = vmatprep.subr.mxu0 0.0
        %3475 = vmatpush1.xpose.msra.mxu0 %v3317
        %3476 = vmatprep.subr.mxu0 0.0
        %3477 = vmatpush1.xpose.msra.mxu0 %v3320
        %3478 = vmatprep.subr.mxu0 0.0
        %3479 = vmatpush1.xpose.msra.mxu0 %v3323
        %3480 = vmatprep.subr.mxu0 0.0
        %3481 = vmatpush1.xpose.msra.mxu0 %v3326
        %3482 = vmatprep.subr.mxu0 0.0
        %3483 = vmatpush1.xpose.msra.mxu0 %v3329
        %3484 = vmatprep.subr.mxu0 0.0
        %3485 = vmatpush1.xpose.msra.mxu0 %v3332
        %3486 = vmatprep.subr.mxu0 0.0
        %3487 = vmatpush1.xpose.msra.mxu0 %v3335
        %3488 = vmatprep.subr.mxu0 0.0
        %3489 = vmatpush1.xpose.msra.mxu0 %v3338
        %3490 = vmatprep.subr.mxu0 0.0
        %3491 = vmatpush1.xpose.msra.mxu0 %v3341
        %3492 = vmatprep.subr.mxu0 0.0
        %3493 = vmatpush1.xpose.msra.mxu0 %v3344
        %3494 = vmatprep.subr.mxu0 0.0
        %3495 = vmatpush1.xpose.msra.mxu0 %v3347
        %3496 = vmatprep.subr.mxu0 0.0
        %3497 = vmatpush1.xpose.msra.mxu0 %v3350
        %3498 = vmatprep.subr.mxu0 0.0
        %3499 = vmatpush1.xpose.msra.mxu0 %v3353
        %3500 = vmatprep.subr.mxu0 0.0
        %3501 = vmatpush1.xpose.msra.mxu0 %v3356
        %3502 = vmatprep.subr.mxu0 0.0
        %3503 = vmatpush1.xpose.msra.mxu0 %v3359
        %3504 = vmatprep.subr.mxu0 0.0
        %3505 = vmatpush1.xpose.msra.mxu0 %v3362
        %3506 = vmatprep.subr.mxu0 0.0
        %3507 = vmatpush1.xpose.msra.mxu0 %v3365
        %3508 = vmatprep.subr.mxu0 0.0
        %3509 = vmatpush1.xpose.msra.mxu0 %v3368
        %3510 = vmatprep.subr.mxu0 0.0
        %3511 = vmatpush1.xpose.msra.mxu0 %v3371
        %3512 = vmatprep.subr.mxu0 0.0
        %3513 = vmatpush1.xpose.msra.mxu0 %v3374
        %3514 = vmatprep.subr.mxu0 0.0
        %3515 = vmatpush1.xpose.msra.mxu0 %v3377
        %3516 = vmatprep.subr.mxu0 0.0
        %3517 = vmatpush1.xpose.msra.mxu0 %v3380
        %3518 = vmatprep.subr.mxu0 0.0
        %3519 = vmatpush1.xpose.msra.mxu0 %v3383
        %3520 = vmatprep.mubr.f32.mxu0 0.0
        %3521 = vmatmul.mubr.f32.gmra.mrb[0].mxu0 %v3191
        %v3522 = vpop.f32.mrb[0].mxu0
        %v3523 = vadd.f32 0.0, %v3522
        %v3524 = vpop.f32.mrb[0].mxu0
        %v3525 = vadd.f32 0.0, %v3524
        %3526 = vdwg.mxu0
        %v3531 = vcombine.low %v3452, %v3454
        %v3532 = vcombine.low %v3523, %v3525
        %v3534 = vunpack.c.l.s4 1966171168
        %v3535 = vunpack.c.0.s8 %v3534
        %v3536 = vlaneseq
        %v3537 = vshrl.u32 %v3536, 7
        %v3538 = vsub.s32 %v3535, %v3537
        %v3539 = vrot.slane %v3531, %v3538
        %v3541 = vunpack.c.l.s4 1966171168
        %v3542 = vunpack.c.0.s8 %v3541
        %v3543 = vlaneseq
        %v3544 = vshrl.u32 %v3543, 7
        %v3545 = vsub.s32 %v3542, %v3544
        %v3546 = vrot.slane %v3532, %v3545
        %v3547 = vcombine.low %v3539, %v3546
        %v3549 = vunpack.c.l.s4 1966171168
        %v3550 = vunpack.c.0.s8 %v3549
        %v3551 = vlaneseq
        %v3552 = vshrl.u32 %v3551, 7
        %v3553 = vsub.s32 %v3550, %v3552
        %v3554 = vrot.slane %v3547, %v3553
        %v3556 = vlaneseq
        %vm3557 = vcmp.ge.s32.totalorder %v3556, 0
        %vm3558 = vcmp.lt.s32.totalorder %v3556, 512
        %vm3559 = vmand %vm3557, %vm3558
        %3560 = vst.msk [vmem:[%s344] sm:$0xf] %vm3559, %v3554
        %s3561 = sand.u32 %s249, 1
        %s3562 = scalar_lea.sflag [#allocation6], %s3561
        %s3563 = sand.u32 %s249, 1
        %s3564 = smul.addr %s3563, 4
        %s3565 = scalar_lea.vmem [#allocation5], %s3564
        // Predicated region
        $region61: #{gpt_forward.1} parent=59 // pred_check
          %p3566 = pneg %p259
        $region62: #{gpt_forward.1} parent=59 // pred_check_branch
          %3568 = sbr.rel (%p3566) target = $region64
        $region63: #{gpt_forward.1} parent=59 // pred_region
          %s3570 = ssub.s32 64, 64
          %3571 = vsyncadd %s3562, %s3570
          %s3572 = smul.addr %s31, 4
          %s3573 = smul.addr %s3572, 16
          %s3574 = scalar_lea.hbm %s11, %s3573
          %s3576 = sshll.u32 %s3565, 4
          %s3577 = int_to_ptr.vmem [resolvable:$true] %s3576
          %3579 = dma.vmem_to_hbm [thread:$0]  %s3577, 64, %s3574, %s3562
        $region64: #{gpt_forward.1} parent=59 // pred_fallthru
          _
      $region60: #{gpt_forward.1} parent=5 // pred_fallthru
        _
      %p3580 = scmp.le.s32.totalorder 2, %s26
      // Predicated region
      $region65: #{gpt_forward.1} parent=5 // pred_check
        %p3581 = pneg %p3580
      $region66: #{gpt_forward.1} parent=5 // pred_check_branch
        %3583 = sbr.rel (%p3581) target = $region68
      $region67: #{gpt_forward.1} parent=5 // pred_region
        %s3584 = ssub.s32 %s26, 2
        // Predicated region
        $region69: #{gpt_forward.1} parent=67 // pred_check
          %p3585 = pneg %p265
        $region70: #{gpt_forward.1} parent=67 // pred_check_branch
          %3587 = sbr.rel (%p3585) target = $region72
        $region71: #{gpt_forward.1} parent=67 // pred_region
          %s3588 = sand.u32 %s250, 1
          %s3589 = scalar_lea.sflag [#allocation6], %s3588
          %s3590 = sand.u32 %s250, 1
          %s3591 = smul.addr %s3590, 4
          %s3592 = scalar_lea.vmem [#allocation5], %s3591
          %3593 = dma.done %s3589, 64
        $region72: #{gpt_forward.1} parent=67 // pred_fallthru
          _
      $region68: #{gpt_forward.1} parent=5 // pred_fallthru
        _
    $region6: #{gpt_forward.1} parent=1 // loop_footer
      %s30 = sadd.s32 1, %s26
    $region7: #{gpt_forward.1} parent=1 // loop_footer_branch
      %25 = sbr.rel target = $region3
    $region8: #{gpt_forward.1} parent=1 // loop_exit
      _
    %3594 = vsyncpa [#allocation6], 1
    %s3595 = scalar_lea.sflag [#allocation6], 1
    %3596 = vsyncpa %s3595, 1

</llo_original>
